<compile_context>
chip_gen: v7x
topology: tpu7x:2x2x1
jax: 0.10.0
libtpu: 0.0.40
codegen_flags: <defaults>
</compile_context>

<pallas_src>
import functools

import jax
import jax.numpy as jnp
from jax import lax
from jax.experimental import pallas as pl
from jax.experimental.pallas import tpu as pltpu


# ---------------------------------------------------------------------------
# Fused Down kernel: maxpool2x2 -> conv3x3+BN+ReLU -> conv3x3+BN+ReLU
# ---------------------------------------------------------------------------

def _down_kernel(x_ref, w1_ref, s1_ref, t1_ref, w2_ref, s2_ref, t2_ref,
                 o_ref,
                 pad1_ref, patch1_ref, pad2_ref, patch2_ref,
                 *, Nb, Ho, Wo, Cin, Cout):
    # x_ref:     (Nb, Ho, 2, Wo, 2*Cin) f32, x5[n,i,a,j,b*Cin+c] == x[n,2i+a,2j+b,c]
    # w1_ref:    (9*Cin, Cout) bf16,  w2_ref: (9*Cout, Cout) bf16
    # s*/t*:     (1, Cout) f32 (conv bias + eval-mode BN fused)
    # o_ref:     (Nb*Ho*Wo, Cout) f32
    # pad*_ref:  bf16 zero-halo scratches; patch*_ref: bf16 im2col scratches.
    M = Nb * Ho * Wo
    offsets = [(dy, dx) for dy in range(3) for dx in range(3)]

    # ---- zero only the 1-pixel halo ring (interior fully overwritten) ------
    top1 = jnp.zeros((Nb, 1, Wo + 2, Cin), dtype=pad1_ref.dtype)
    side1 = jnp.zeros((Nb, Ho + 2, 1, Cin), dtype=pad1_ref.dtype)
    pad1_ref[:, 0:1, :, :] = top1
    pad1_ref[:, Ho + 1:Ho + 2, :, :] = top1
    pad1_ref[:, :, 0:1, :] = side1
    pad1_ref[:, :, Wo + 1:Wo + 2, :] = side1

    top2 = jnp.zeros((Nb, 1, Wo + 2, Cout), dtype=pad2_ref.dtype)
    side2 = jnp.zeros((Nb, Ho + 2, 1, Cout), dtype=pad2_ref.dtype)
    pad2_ref[:, 0:1, :, :] = top2
    pad2_ref[:, Ho + 1:Ho + 2, :, :] = top2
    pad2_ref[:, :, 0:1, :] = side2
    pad2_ref[:, :, Wo + 1:Wo + 2, :] = side2

    # ---- 2x2 max-pool, entirely in VMEM (no HBM transpose) -----------------
    x = x_ref[...]                                       # (Nb, Ho, 2, Wo, 2*Cin)
    rmax = jnp.maximum(x[:, :, 0], x[:, :, 1])           # max over pool rows
    pooled = jnp.maximum(rmax[..., :Cin], rmax[..., Cin:])   # (Nb, Ho, Wo, Cin)
    pad1_ref[:, 1:Ho + 1, 1:Wo + 1, :] = pooled.astype(pad1_ref.dtype)

    # ---- conv1 (3x3, pad=1): im2col built by slice-stores, one MXU matmul --
    for k, (dy, dx) in enumerate(offsets):
        win = pad1_ref[:, dy:dy + Ho, dx:dx + Wo, :]      # (Nb, Ho, Wo, Cin) bf16
        patch1_ref[:, k * Cin:(k + 1) * Cin] = win.reshape(M, Cin)
    h = jnp.dot(patch1_ref[...], w1_ref[...], preferred_element_type=jnp.float32)
    h = jnp.maximum(h * s1_ref[...] + t1_ref[...], 0.0)   # fused BN + ReLU (f32)

    # ---- conv2 (3x3, pad=1): intermediate never leaves VMEM ----------------
    pad2_ref[:, 1:Ho + 1, 1:Wo + 1, :] = h.reshape(Nb, Ho, Wo, Cout).astype(pad2_ref.dtype)
    for k, (dy, dx) in enumerate(offsets):
        win = pad2_ref[:, dy:dy + Ho, dx:dx + Wo, :]      # (Nb, Ho, Wo, Cout) bf16
        patch2_ref[:, k * Cout:(k + 1) * Cout] = win.reshape(M, Cout)
    y = jnp.dot(patch2_ref[...], w2_ref[...], preferred_element_type=jnp.float32)
    y = jnp.maximum(y * s2_ref[...] + t2_ref[...], 0.0)
    o_ref[...] = y.astype(o_ref.dtype)


def down_pallas(x, params, *, batch_block=None):
    """Down = MaxPool2d(2,2) -> DoubleConv, fused in one Pallas kernel.

    x: NHWC float32. params: {"c1": (w, scale, shift), "c2": (w, scale, shift)}
    with w in HWIO (3,3,Cin,Cout) and eval-mode BatchNorm fused into scale/shift.
    """
    w1, s1, t1 = params["c1"]
    w2, s2, t2 = params["c2"]
    N, H, W, Cin = x.shape
    Cout = w1.shape[-1]
    assert H % 2 == 0 and W % 2 == 0
    Ho, Wo = H // 2, W // 2
    HW = Ho * Wo

    # Block enough batch images per grid step that each MXU matmul has >=~256
    # rows (or all of N).  For the test case: Nb=2 -> M=128.
    if batch_block is None:
        batch_block = min(N, max(1, pl.cdiv(256, HW)))
        while N % batch_block:
            batch_block -= 1
    Nb = batch_block
    M = Nb * HW

    # Free (contiguous) reshape: x5[n,i,a,j,b*Cin+c] == x[n,2i+a,2j+b,c].
    x5 = x.reshape(N, Ho, 2, Wo, 2 * Cin)
    w1f = w1.reshape(9 * Cin, Cout).astype(jnp.bfloat16)
    w2f = w2.reshape(9 * Cout, Cout).astype(jnp.bfloat16)
    s1r, t1r = s1.reshape(1, Cout), t1.reshape(1, Cout)
    s2r, t2r = s2.reshape(1, Cout), t2.reshape(1, Cout)

    flops = 2 * N * HW * (9 * Cin + 9 * Cout) * Cout
    bytes_accessed = (x5.size * 4 + w1f.size * 2 + w2f.size * 2
                      + 4 * Cout * 4 + N * HW * Cout * 4)

    out = pl.pallas_call(
        functools.partial(_down_kernel, Nb=Nb, Ho=Ho, Wo=Wo, Cin=Cin, Cout=Cout),
        out_shape=jax.ShapeDtypeStruct((N * HW, Cout), x.dtype),
        grid=(N // Nb,),
        in_specs=[
            pl.BlockSpec((Nb, Ho, 2, Wo, 2 * Cin), lambda g: (g, 0, 0, 0, 0)),
            pl.BlockSpec((9 * Cin, Cout), lambda g: (0, 0)),
            pl.BlockSpec((1, Cout), lambda g: (0, 0)),
            pl.BlockSpec((1, Cout), lambda g: (0, 0)),
            pl.BlockSpec((9 * Cout, Cout), lambda g: (0, 0)),
            pl.BlockSpec((1, Cout), lambda g: (0, 0)),
            pl.BlockSpec((1, Cout), lambda g: (0, 0)),
        ],
        out_specs=pl.BlockSpec((M, Cout), lambda g: (g, 0)),
        scratch_shapes=[
            pltpu.VMEM((Nb, Ho + 2, Wo + 2, Cin), jnp.bfloat16),   # padded pooled
            pltpu.VMEM((M, 9 * Cin), jnp.bfloat16),                # im2col patch 1
            pltpu.VMEM((Nb, Ho + 2, Wo + 2, Cout), jnp.bfloat16),  # padded conv1 act
            pltpu.VMEM((M, 9 * Cout), jnp.bfloat16),               # im2col patch 2
        ],
        compiler_params=pltpu.CompilerParams(
            dimension_semantics=("parallel",),
            vmem_limit_bytes=48 * 1024 * 1024),
        cost_estimate=pl.CostEstimate(flops=flops, transcendentals=0,
                                      bytes_accessed=bytes_accessed),
    )(x5, w1f, s1r, t1r, w2f, s2r, t2r)
    # TODO(synk): for large H*W add a spatial grid axis with 1-pixel halos
    # (halo-recompute of conv1 rows) so per-step VMEM stays <= ~48 MiB on v7x
    # and both TensorCores stay busy even when N is small.
    return out.reshape(N, Ho, Wo, Cout)


# ---------------------------------------------------------------------------
# Pure-JAX reference with the SAME numerics contract as the kernel
# (bf16 matmul operands, f32 accumulation, f32 BN/ReLU), independent indexing.
# ---------------------------------------------------------------------------

def down_reference(x, params):
    w1, s1, t1 = params["c1"]
    w2, s2, t2 = params["c2"]
    pooled = lax.reduce_window(x, -jnp.inf, lax.max,
                               (1, 2, 2, 1), (1, 2, 2, 1), "VALID")

    def conv3x3(h, w):
        n, hh, ww, c = h.shape
        cout = w.shape[-1]
        hp = jnp.pad(h.astype(jnp.bfloat16), ((0, 0), (1, 1), (1, 1), (0, 0)))
        cols = [hp[:, dy:dy + hh, dx:dx + ww, :]
                for dy in range(3) for dx in range(3)]
        patch = jnp.concatenate(cols, axis=-1).reshape(n * hh * ww, 9 * c)
        out = jnp.dot(patch, w.reshape(9 * c, cout).astype(jnp.bfloat16),
                      preferred_element_type=jnp.float32)
        return out.reshape(n, hh, ww, cout)

    h = jnp.maximum(conv3x3(pooled, w1) * s1 + t1, 0.0)
    return jnp.maximum(conv3x3(h, w2) * s2 + t2, 0.0)


# ---------------------------------------------------------------------------
# Deterministic parameter construction (eval-mode BN fused into scale/shift)
# ---------------------------------------------------------------------------

def _init_conv(key, kh, kw, cin, cout):
    k1, k2 = jax.random.split(key)
    w = 0.1 * jax.random.normal(k1, (kh, kw, cin, cout), jnp.float32)
    b = 0.1 * jax.random.normal(k2, (cout,), jnp.float32)
    return w, b


def _init_bn(key, c):
    k1, k2, k3, k4 = jax.random.split(key, 4)
    gamma = 1.0 + 0.1 * jax.random.normal(k1, (c,), jnp.float32)
    beta = 0.1 * jax.random.normal(k2, (c,), jnp.float32)
    mean = 0.1 * jax.random.normal(k3, (c,), jnp.float32)
    var = 1.0 + 0.1 * jnp.abs(jax.random.normal(k4, (c,), jnp.float32))
    return gamma, beta, mean, var


def _fuse(w, b, gamma, beta, mean, var, eps=1e-5):
    scale = gamma / jnp.sqrt(var + eps)
    shift = beta + scale * (b - mean)
    return w, scale, shift


def init_down_params(key, in_ch, out_ch):
    # TODO(synk): training-mode BatchNorm (batch statistics + running-stat
    # updates) not implemented; eval-mode stats are fused into scale/shift.
    k = jax.random.split(key, 4)
    w1, b1 = _init_conv(k[0], 3, 3, in_ch, out_ch)
    w2, b2 = _init_conv(k[2], 3, 3, out_ch, out_ch)
    return {"c1": _fuse(w1, b1, *_init_bn(k[1], out_ch)),
            "c2": _fuse(w2, b2, *_init_bn(k[3], out_ch))}


# ---------------------------------------------------------------------------

if __name__ == "__main__":
    key = jax.random.PRNGKey(0)
    kx, kp = jax.random.split(key)

    # Down(in_ch=64, out_ch=128) on an NHWC (2, 16, 16, 64) input
    # (PyTorch-equivalent NCHW input: (2, 64, 16, 16)); Cout=128 keeps the
    # output stores lane-dense and the fused matmuls get M = 128 rows.
    N, H, W, in_ch, out_ch = 2, 16, 16, 64, 128
    x = jax.random.normal(kx, (N, H, W, in_ch), jnp.float32)
    params = init_down_params(kp, in_ch, out_ch)

    out = jax.jit(down_pallas)(x, params)
    jax.block_until_ready(out)
    assert out.shape == (N, H // 2, W // 2, out_ch)

    ref = jax.jit(down_reference)(x, params)
    err = float(jnp.max(jnp.abs(out - ref)))
    # Both sides use bf16 matmul operands with f32 accumulation; the tolerance
    # covers accumulation-order and bf16 rounding-path differences only.
    assert err < 2e-2, err

    print("KERNEL_OK")
</pallas_src>

<mosaic_0001>
module attributes {stable_mosaic.version = 11 : i64} {
  func.func @_down_kernel(%arg0: i32, %arg1: memref<2x8x2x8x128xf32, #tpu.memory_space<vmem>>, %arg2: memref<576x128xbf16, #tpu.memory_space<vmem>>, %arg3: memref<1x128xf32, #tpu.memory_space<vmem>>, %arg4: memref<1x128xf32, #tpu.memory_space<vmem>>, %arg5: memref<1152x128xbf16, #tpu.memory_space<vmem>>, %arg6: memref<1x128xf32, #tpu.memory_space<vmem>>, %arg7: memref<1x128xf32, #tpu.memory_space<vmem>>, %arg8: memref<128x128xf32, #tpu.memory_space<vmem>>, %arg9: memref<2x10x10x64xbf16, #tpu.memory_space<vmem>>, %arg10: memref<128x576xbf16, #tpu.memory_space<vmem>>, %arg11: memref<2x10x10x128xbf16, #tpu.memory_space<vmem>>, %arg12: memref<128x1152xbf16, #tpu.memory_space<vmem>>) attributes {dimension_semantics = [#tpu.dimension_semantics<parallel>], iteration_bounds = array<i64: 1>, scalar_prefetch = 0 : i64, scratch_operands = 4 : i64, tpu.core_type = #tpu.core_type<tc>, window_params = [{transform_indices = @transform_0, window_bounds = array<i64: 2, 8, 2, 8, 128>}, {pipeline_mode = #tpu.pipeline_mode<synchronous>, transform_indices = @transform_1, window_bounds = array<i64: 576, 128>}, {pipeline_mode = #tpu.pipeline_mode<synchronous>, transform_indices = @transform_2, window_bounds = array<i64: 1, 128>}, {pipeline_mode = #tpu.pipeline_mode<synchronous>, transform_indices = @transform_3, window_bounds = array<i64: 1, 128>}, {pipeline_mode = #tpu.pipeline_mode<synchronous>, transform_indices = @transform_4, window_bounds = array<i64: 1152, 128>}, {pipeline_mode = #tpu.pipeline_mode<synchronous>, transform_indices = @transform_5, window_bounds = array<i64: 1, 128>}, {pipeline_mode = #tpu.pipeline_mode<synchronous>, transform_indices = @transform_6, window_bounds = array<i64: 1, 128>}, {transform_indices = @transform_7, window_bounds = array<i64: 128, 128>}]} {
    %cst = arith.constant 0.000000e+00 : bf16
    %0 = vector.broadcast %cst : bf16 to vector<2x1x10x64xbf16>
    %cst_0 = arith.constant 0.000000e+00 : bf16
    %1 = vector.broadcast %cst_0 : bf16 to vector<2x10x1x64xbf16>
    %c0 = arith.constant 0 : index
    %c0_1 = arith.constant 0 : index
    %c0_2 = arith.constant 0 : index
    %c0_3 = arith.constant 0 : index
    %2 = vector.load %arg9[%c0, %c0_1, %c0_2, %c0_3] : memref<2x10x10x64xbf16, #tpu.memory_space<vmem>>, vector<2x1x10x64xbf16>
    tpu.vector_store %arg9[%c0, %c0_1, %c0_2, %c0_3], %0 {strides = array<i32>} : memref<2x10x10x64xbf16, #tpu.memory_space<vmem>>, vector<2x1x10x64xbf16>,
    %c0_4 = arith.constant 0 : index
    %c9 = arith.constant 9 : index
    %c0_5 = arith.constant 0 : index
    %c0_6 = arith.constant 0 : index
    %3 = vector.load %arg9[%c0_4, %c9, %c0_5, %c0_6] : memref<2x10x10x64xbf16, #tpu.memory_space<vmem>>, vector<2x1x10x64xbf16>
    tpu.vector_store %arg9[%c0_4, %c9, %c0_5, %c0_6], %0 {strides = array<i32>} : memref<2x10x10x64xbf16, #tpu.memory_space<vmem>>, vector<2x1x10x64xbf16>,
    %c0_7 = arith.constant 0 : index
    %c0_8 = arith.constant 0 : index
    %c0_9 = arith.constant 0 : index
    %c0_10 = arith.constant 0 : index
    %4 = vector.load %arg9[%c0_7, %c0_8, %c0_9, %c0_10] : memref<2x10x10x64xbf16, #tpu.memory_space<vmem>>, vector<2x10x1x64xbf16>
    tpu.vector_store %arg9[%c0_7, %c0_8, %c0_9, %c0_10], %1 {strides = array<i32>} : memref<2x10x10x64xbf16, #tpu.memory_space<vmem>>, vector<2x10x1x64xbf16>,
    %c0_11 = arith.constant 0 : index
    %c0_12 = arith.constant 0 : index
    %c9_13 = arith.constant 9 : index
    %c0_14 = arith.constant 0 : index
    %5 = vector.load %arg9[%c0_11, %c0_12, %c9_13, %c0_14] : memref<2x10x10x64xbf16, #tpu.memory_space<vmem>>, vector<2x10x1x64xbf16>
    tpu.vector_store %arg9[%c0_11, %c0_12, %c9_13, %c0_14], %1 {strides = array<i32>} : memref<2x10x10x64xbf16, #tpu.memory_space<vmem>>, vector<2x10x1x64xbf16>,
    %cst_15 = arith.constant 0.000000e+00 : bf16
    %6 = vector.broadcast %cst_15 : bf16 to vector<2x1x10x128xbf16>
    %cst_16 = arith.constant 0.000000e+00 : bf16
    %7 = vector.broadcast %cst_16 : bf16 to vector<2x10x1x128xbf16>
    %c0_17 = arith.constant 0 : index
    %c0_18 = arith.constant 0 : index
    %c0_19 = arith.constant 0 : index
    %c0_20 = arith.constant 0 : index
    %8 = vector.load %arg11[%c0_17, %c0_18, %c0_19, %c0_20] : memref<2x10x10x128xbf16, #tpu.memory_space<vmem>>, vector<2x1x10x128xbf16>
    tpu.vector_store %arg11[%c0_17, %c0_18, %c0_19, %c0_20], %6 {strides = array<i32>} : memref<2x10x10x128xbf16, #tpu.memory_space<vmem>>, vector<2x1x10x128xbf16>,
    %c0_21 = arith.constant 0 : index
    %c9_22 = arith.constant 9 : index
    %c0_23 = arith.constant 0 : index
    %c0_24 = arith.constant 0 : index
    %9 = vector.load %arg11[%c0_21, %c9_22, %c0_23, %c0_24] : memref<2x10x10x128xbf16, #tpu.memory_space<vmem>>, vector<2x1x10x128xbf16>
    tpu.vector_store %arg11[%c0_21, %c9_22, %c0_23, %c0_24], %6 {strides = array<i32>} : memref<2x10x10x128xbf16, #tpu.memory_space<vmem>>, vector<2x1x10x128xbf16>,
    %c0_25 = arith.constant 0 : index
    %c0_26 = arith.constant 0 : index
    %c0_27 = arith.constant 0 : index
    %c0_28 = arith.constant 0 : index
    %10 = vector.load %arg11[%c0_25, %c0_26, %c0_27, %c0_28] : memref<2x10x10x128xbf16, #tpu.memory_space<vmem>>, vector<2x10x1x128xbf16>
    tpu.vector_store %arg11[%c0_25, %c0_26, %c0_27, %c0_28], %7 {strides = array<i32>} : memref<2x10x10x128xbf16, #tpu.memory_space<vmem>>, vector<2x10x1x128xbf16>,
    %c0_29 = arith.constant 0 : index
    %c0_30 = arith.constant 0 : index
    %c9_31 = arith.constant 9 : index
    %c0_32 = arith.constant 0 : index
    %11 = vector.load %arg11[%c0_29, %c0_30, %c9_31, %c0_32] : memref<2x10x10x128xbf16, #tpu.memory_space<vmem>>, vector<2x10x1x128xbf16>
    tpu.vector_store %arg11[%c0_29, %c0_30, %c9_31, %c0_32], %7 {strides = array<i32>} : memref<2x10x10x128xbf16, #tpu.memory_space<vmem>>, vector<2x10x1x128xbf16>,
    %c0_33 = arith.constant 0 : index
    %c0_34 = arith.constant 0 : index
    %c0_35 = arith.constant 0 : index
    %c0_36 = arith.constant 0 : index
    %c0_37 = arith.constant 0 : index
    %12 = vector.load %arg1[%c0_33, %c0_34, %c0_35, %c0_36, %c0_37] : memref<2x8x2x8x128xf32, #tpu.memory_space<vmem>>, vector<2x8x2x8x128xf32>
    %13 = vector.extract_strided_slice %12 {offsets = [0, 0, 0, 0, 0], sizes = [2, 8, 1, 8, 128], strides = [1, 1, 1, 1, 1]} : vector<2x8x2x8x128xf32> to vector<2x8x1x8x128xf32>
    %14 = vector.shape_cast %13 : vector<2x8x1x8x128xf32> to vector<2x8x8x128xf32>
    %15 = vector.extract_strided_slice %12 {offsets = [0, 0, 1, 0, 0], sizes = [2, 8, 1, 8, 128], strides = [1, 1, 1, 1, 1]} : vector<2x8x2x8x128xf32> to vector<2x8x1x8x128xf32>
    %16 = vector.shape_cast %15 : vector<2x8x1x8x128xf32> to vector<2x8x8x128xf32>
    %17 = arith.maximumf %14, %16 : vector<2x8x8x128xf32>
    %18 = vector.extract_strided_slice %17 {offsets = [0, 0, 0, 0], sizes = [2, 8, 8, 64], strides = [1, 1, 1, 1]} : vector<2x8x8x128xf32> to vector<2x8x8x64xf32>
    %19 = vector.extract_strided_slice %17 {offsets = [0, 0, 0, 64], sizes = [2, 8, 8, 64], strides = [1, 1, 1, 1]} : vector<2x8x8x128xf32> to vector<2x8x8x64xf32>
    %20 = arith.maximumf %18, %19 : vector<2x8x8x64xf32>
    %21 = arith.truncf %20 : vector<2x8x8x64xf32> to vector<2x8x8x64xbf16>
    %c0_38 = arith.constant 0 : index
    %c1 = arith.constant 1 : index
    %c1_39 = arith.constant 1 : index
    %c0_40 = arith.constant 0 : index
    %22 = vector.load %arg9[%c0_38, %c1, %c1_39, %c0_40] : memref<2x10x10x64xbf16, #tpu.memory_space<vmem>>, vector<2x8x8x64xbf16>
    tpu.vector_store %arg9[%c0_38, %c1, %c1_39, %c0_40], %21 {strides = array<i32>} : memref<2x10x10x64xbf16, #tpu.memory_space<vmem>>, vector<2x8x8x64xbf16>,
    %c0_41 = arith.constant 0 : index
    %c0_42 = arith.constant 0 : index
    %c0_43 = arith.constant 0 : index
    %c0_44 = arith.constant 0 : index
    %23 = vector.load %arg9[%c0_41, %c0_42, %c0_43, %c0_44] : memref<2x10x10x64xbf16, #tpu.memory_space<vmem>>, vector<2x8x8x64xbf16>
    %24 = vector.shape_cast %23 : vector<2x8x8x64xbf16> to vector<128x64xbf16>
    %c0_45 = arith.constant 0 : index
    %c0_46 = arith.constant 0 : index
    %25 = vector.load %arg10[%c0_45, %c0_46] : memref<128x576xbf16, #tpu.memory_space<vmem>>, vector<128x64xbf16>
    tpu.vector_store %arg10[%c0_45, %c0_46], %24 {strides = array<i32>} : memref<128x576xbf16, #tpu.memory_space<vmem>>, vector<128x64xbf16>,
    %c0_47 = arith.constant 0 : index
    %c0_48 = arith.constant 0 : index
    %c1_49 = arith.constant 1 : index
    %c0_50 = arith.constant 0 : index
    %26 = vector.load %arg9[%c0_47, %c0_48, %c1_49, %c0_50] : memref<2x10x10x64xbf16, #tpu.memory_space<vmem>>, vector<2x8x8x64xbf16>
    %27 = vector.shape_cast %26 : vector<2x8x8x64xbf16> to vector<128x64xbf16>
    %c0_51 = arith.constant 0 : index
    %c64 = arith.constant 64 : index
    %28 = vector.load %arg10[%c0_51, %c64] : memref<128x576xbf16, #tpu.memory_space<vmem>>, vector<128x64xbf16>
    tpu.vector_store %arg10[%c0_51, %c64], %27 {strides = array<i32>} : memref<128x576xbf16, #tpu.memory_space<vmem>>, vector<128x64xbf16>,
    %c0_52 = arith.constant 0 : index
    %c0_53 = arith.constant 0 : index
    %c2 = arith.constant 2 : index
    %c0_54 = arith.constant 0 : index
    %29 = vector.load %arg9[%c0_52, %c0_53, %c2, %c0_54] : memref<2x10x10x64xbf16, #tpu.memory_space<vmem>>, vector<2x8x8x64xbf16>
    %30 = vector.shape_cast %29 : vector<2x8x8x64xbf16> to vector<128x64xbf16>
    %c0_55 = arith.constant 0 : index
    %c128 = arith.constant 128 : index
    %31 = vector.load %arg10[%c0_55, %c128] : memref<128x576xbf16, #tpu.memory_space<vmem>>, vector<128x64xbf16>
    tpu.vector_store %arg10[%c0_55, %c128], %30 {strides = array<i32>} : memref<128x576xbf16, #tpu.memory_space<vmem>>, vector<128x64xbf16>,
    %c0_56 = arith.constant 0 : index
    %c1_57 = arith.constant 1 : index
    %c0_58 = arith.constant 0 : index
    %c0_59 = arith.constant 0 : index
    %32 = vector.load %arg9[%c0_56, %c1_57, %c0_58, %c0_59] : memref<2x10x10x64xbf16, #tpu.memory_space<vmem>>, vector<2x8x8x64xbf16>
    %33 = vector.shape_cast %32 : vector<2x8x8x64xbf16> to vector<128x64xbf16>
    %c0_60 = arith.constant 0 : index
    %c192 = arith.constant 192 : index
    %34 = vector.load %arg10[%c0_60, %c192] : memref<128x576xbf16, #tpu.memory_space<vmem>>, vector<128x64xbf16>
    tpu.vector_store %arg10[%c0_60, %c192], %33 {strides = array<i32>} : memref<128x576xbf16, #tpu.memory_space<vmem>>, vector<128x64xbf16>,
    %c0_61 = arith.constant 0 : index
    %c1_62 = arith.constant 1 : index
    %c1_63 = arith.constant 1 : index
    %c0_64 = arith.constant 0 : index
    %35 = vector.load %arg9[%c0_61, %c1_62, %c1_63, %c0_64] : memref<2x10x10x64xbf16, #tpu.memory_space<vmem>>, vector<2x8x8x64xbf16>
    %36 = vector.shape_cast %35 : vector<2x8x8x64xbf16> to vector<128x64xbf16>
    %c0_65 = arith.constant 0 : index
    %c256 = arith.constant 256 : index
    %37 = vector.load %arg10[%c0_65, %c256] : memref<128x576xbf16, #tpu.memory_space<vmem>>, vector<128x64xbf16>
    tpu.vector_store %arg10[%c0_65, %c256], %36 {strides = array<i32>} : memref<128x576xbf16, #tpu.memory_space<vmem>>, vector<128x64xbf16>,
    %c0_66 = arith.constant 0 : index
    %c1_67 = arith.constant 1 : index
    %c2_68 = arith.constant 2 : index
    %c0_69 = arith.constant 0 : index
    %38 = vector.load %arg9[%c0_66, %c1_67, %c2_68, %c0_69] : memref<2x10x10x64xbf16, #tpu.memory_space<vmem>>, vector<2x8x8x64xbf16>
    %39 = vector.shape_cast %38 : vector<2x8x8x64xbf16> to vector<128x64xbf16>
    %c0_70 = arith.constant 0 : index
    %c320 = arith.constant 320 : index
    %40 = vector.load %arg10[%c0_70, %c320] : memref<128x576xbf16, #tpu.memory_space<vmem>>, vector<128x64xbf16>
    tpu.vector_store %arg10[%c0_70, %c320], %39 {strides = array<i32>} : memref<128x576xbf16, #tpu.memory_space<vmem>>, vector<128x64xbf16>,
    %c0_71 = arith.constant 0 : index
    %c2_72 = arith.constant 2 : index
    %c0_73 = arith.constant 0 : index
    %c0_74 = arith.constant 0 : index
    %41 = vector.load %arg9[%c0_71, %c2_72, %c0_73, %c0_74] : memref<2x10x10x64xbf16, #tpu.memory_space<vmem>>, vector<2x8x8x64xbf16>
    %42 = vector.shape_cast %41 : vector<2x8x8x64xbf16> to vector<128x64xbf16>
    %c0_75 = arith.constant 0 : index
    %c384 = arith.constant 384 : index
    %43 = vector.load %arg10[%c0_75, %c384] : memref<128x576xbf16, #tpu.memory_space<vmem>>, vector<128x64xbf16>
    tpu.vector_store %arg10[%c0_75, %c384], %42 {strides = array<i32>} : memref<128x576xbf16, #tpu.memory_space<vmem>>, vector<128x64xbf16>,
    %c0_76 = arith.constant 0 : index
    %c2_77 = arith.constant 2 : index
    %c1_78 = arith.constant 1 : index
    %c0_79 = arith.constant 0 : index
    %44 = vector.load %arg9[%c0_76, %c2_77, %c1_78, %c0_79] : memref<2x10x10x64xbf16, #tpu.memory_space<vmem>>, vector<2x8x8x64xbf16>
    %45 = vector.shape_cast %44 : vector<2x8x8x64xbf16> to vector<128x64xbf16>
    %c0_80 = arith.constant 0 : index
    %c448 = arith.constant 448 : index
    %46 = vector.load %arg10[%c0_80, %c448] : memref<128x576xbf16, #tpu.memory_space<vmem>>, vector<128x64xbf16>
    tpu.vector_store %arg10[%c0_80, %c448], %45 {strides = array<i32>} : memref<128x576xbf16, #tpu.memory_space<vmem>>, vector<128x64xbf16>,
    %c0_81 = arith.constant 0 : index
    %c2_82 = arith.constant 2 : index
    %c2_83 = arith.constant 2 : index
    %c0_84 = arith.constant 0 : index
    %47 = vector.load %arg9[%c0_81, %c2_82, %c2_83, %c0_84] : memref<2x10x10x64xbf16, #tpu.memory_space<vmem>>, vector<2x8x8x64xbf16>
    %48 = vector.shape_cast %47 : vector<2x8x8x64xbf16> to vector<128x64xbf16>
    %c0_85 = arith.constant 0 : index
    %c512 = arith.constant 512 : index
    %49 = vector.load %arg10[%c0_85, %c512] : memref<128x576xbf16, #tpu.memory_space<vmem>>, vector<128x64xbf16>
    tpu.vector_store %arg10[%c0_85, %c512], %48 {strides = array<i32>} : memref<128x576xbf16, #tpu.memory_space<vmem>>, vector<128x64xbf16>,
    %c0_86 = arith.constant 0 : index
    %c0_87 = arith.constant 0 : index
    %50 = vector.load %arg10[%c0_86, %c0_87] : memref<128x576xbf16, #tpu.memory_space<vmem>>, vector<128x576xbf16>
    %c0_88 = arith.constant 0 : index
    %c0_89 = arith.constant 0 : index
    %51 = vector.load %arg2[%c0_88, %c0_89] : memref<576x128xbf16, #tpu.memory_space<vmem>>, vector<576x128xbf16>
    %cst_90 = arith.constant dense<0.000000e+00> : vector<128x128xf32>
    %52 = tpu.matmul %50, %51, %cst_90 {dimension_numbers = #tpu.dot_dimension_numbers<[1], [0], [0], [1], [0, 0, 1, 1], [], []>} : vector<128x576xbf16>, vector<576x128xbf16>, vector<128x128xf32> -> vector<128x128xf32>
    %c0_91 = arith.constant 0 : index
    %c0_92 = arith.constant 0 : index
    %53 = vector.load %arg3[%c0_91, %c0_92] : memref<1x128xf32, #tpu.memory_space<vmem>>, vector<1x128xf32>
    %54 = vector.broadcast %53 : vector<1x128xf32> to vector<128x128xf32>
    %55 = arith.mulf %52, %54 : vector<128x128xf32>
    %c0_93 = arith.constant 0 : index
    %c0_94 = arith.constant 0 : index
    %56 = vector.load %arg4[%c0_93, %c0_94] : memref<1x128xf32, #tpu.memory_space<vmem>>, vector<1x128xf32>
    %57 = vector.broadcast %56 : vector<1x128xf32> to vector<128x128xf32>
    %58 = arith.addf %55, %57 : vector<128x128xf32>
    %cst_95 = arith.constant 0.000000e+00 : f32
    %59 = vector.broadcast %cst_95 : f32 to vector<128x128xf32>
    %60 = arith.maximumf %58, %59 : vector<128x128xf32>
    %61 = vector.shape_cast %60 : vector<128x128xf32> to vector<2x8x8x128xf32>
    %62 = arith.truncf %61 : vector<2x8x8x128xf32> to vector<2x8x8x128xbf16>
    %c0_96 = arith.constant 0 : index
    %c1_97 = arith.constant 1 : index
    %c1_98 = arith.constant 1 : index
    %c0_99 = arith.constant 0 : index
    %63 = vector.load %arg11[%c0_96, %c1_97, %c1_98, %c0_99] : memref<2x10x10x128xbf16, #tpu.memory_space<vmem>>, vector<2x8x8x128xbf16>
    tpu.vector_store %arg11[%c0_96, %c1_97, %c1_98, %c0_99], %62 {strides = array<i32>} : memref<2x10x10x128xbf16, #tpu.memory_space<vmem>>, vector<2x8x8x128xbf16>,
    %c0_100 = arith.constant 0 : index
    %c0_101 = arith.constant 0 : index
    %c0_102 = arith.constant 0 : index
    %c0_103 = arith.constant 0 : index
    %64 = vector.load %arg11[%c0_100, %c0_101, %c0_102, %c0_103] : memref<2x10x10x128xbf16, #tpu.memory_space<vmem>>, vector<2x8x8x128xbf16>
    %65 = vector.shape_cast %64 : vector<2x8x8x128xbf16> to vector<128x128xbf16>
    %c0_104 = arith.constant 0 : index
    %c0_105 = arith.constant 0 : index
    %66 = vector.load %arg12[%c0_104, %c0_105] : memref<128x1152xbf16, #tpu.memory_space<vmem>>, vector<128x128xbf16>
    tpu.vector_store %arg12[%c0_104, %c0_105], %65 {strides = array<i32>} : memref<128x1152xbf16, #tpu.memory_space<vmem>>, vector<128x128xbf16>,
    %c0_106 = arith.constant 0 : index
    %c0_107 = arith.constant 0 : index
    %c1_108 = arith.constant 1 : index
    %c0_109 = arith.constant 0 : index
    %67 = vector.load %arg11[%c0_106, %c0_107, %c1_108, %c0_109] : memref<2x10x10x128xbf16, #tpu.memory_space<vmem>>, vector<2x8x8x128xbf16>
    %68 = vector.shape_cast %67 : vector<2x8x8x128xbf16> to vector<128x128xbf16>
    %c0_110 = arith.constant 0 : index
    %c128_111 = arith.constant 128 : index
    %69 = vector.load %arg12[%c0_110, %c128_111] : memref<128x1152xbf16, #tpu.memory_space<vmem>>, vector<128x128xbf16>
    tpu.vector_store %arg12[%c0_110, %c128_111], %68 {strides = array<i32>} : memref<128x1152xbf16, #tpu.memory_space<vmem>>, vector<128x128xbf16>,
    %c0_112 = arith.constant 0 : index
    %c0_113 = arith.constant 0 : index
    %c2_114 = arith.constant 2 : index
    %c0_115 = arith.constant 0 : index
    %70 = vector.load %arg11[%c0_112, %c0_113, %c2_114, %c0_115] : memref<2x10x10x128xbf16, #tpu.memory_space<vmem>>, vector<2x8x8x128xbf16>
    %71 = vector.shape_cast %70 : vector<2x8x8x128xbf16> to vector<128x128xbf16>
    %c0_116 = arith.constant 0 : index
    %c256_117 = arith.constant 256 : index
    %72 = vector.load %arg12[%c0_116, %c256_117] : memref<128x1152xbf16, #tpu.memory_space<vmem>>, vector<128x128xbf16>
    tpu.vector_store %arg12[%c0_116, %c256_117], %71 {strides = array<i32>} : memref<128x1152xbf16, #tpu.memory_space<vmem>>, vector<128x128xbf16>,
    %c0_118 = arith.constant 0 : index
    %c1_119 = arith.constant 1 : index
    %c0_120 = arith.constant 0 : index
    %c0_121 = arith.constant 0 : index
    %73 = vector.load %arg11[%c0_118, %c1_119, %c0_120, %c0_121] : memref<2x10x10x128xbf16, #tpu.memory_space<vmem>>, vector<2x8x8x128xbf16>
    %74 = vector.shape_cast %73 : vector<2x8x8x128xbf16> to vector<128x128xbf16>
    %c0_122 = arith.constant 0 : index
    %c384_123 = arith.constant 384 : index
    %75 = vector.load %arg12[%c0_122, %c384_123] : memref<128x1152xbf16, #tpu.memory_space<vmem>>, vector<128x128xbf16>
    tpu.vector_store %arg12[%c0_122, %c384_123], %74 {strides = array<i32>} : memref<128x1152xbf16, #tpu.memory_space<vmem>>, vector<128x128xbf16>,
    %c0_124 = arith.constant 0 : index
    %c1_125 = arith.constant 1 : index
    %c1_126 = arith.constant 1 : index
    %c0_127 = arith.constant 0 : index
    %76 = vector.load %arg11[%c0_124, %c1_125, %c1_126, %c0_127] : memref<2x10x10x128xbf16, #tpu.memory_space<vmem>>, vector<2x8x8x128xbf16>
    %77 = vector.shape_cast %76 : vector<2x8x8x128xbf16> to vector<128x128xbf16>
    %c0_128 = arith.constant 0 : index
    %c512_129 = arith.constant 512 : index
    %78 = vector.load %arg12[%c0_128, %c512_129] : memref<128x1152xbf16, #tpu.memory_space<vmem>>, vector<128x128xbf16>
    tpu.vector_store %arg12[%c0_128, %c512_129], %77 {strides = array<i32>} : memref<128x1152xbf16, #tpu.memory_space<vmem>>, vector<128x128xbf16>,
    %c0_130 = arith.constant 0 : index
    %c1_131 = arith.constant 1 : index
    %c2_132 = arith.constant 2 : index
    %c0_133 = arith.constant 0 : index
    %79 = vector.load %arg11[%c0_130, %c1_131, %c2_132, %c0_133] : memref<2x10x10x128xbf16, #tpu.memory_space<vmem>>, vector<2x8x8x128xbf16>
    %80 = vector.shape_cast %79 : vector<2x8x8x128xbf16> to vector<128x128xbf16>
    %c0_134 = arith.constant 0 : index
    %c640 = arith.constant 640 : index
    %81 = vector.load %arg12[%c0_134, %c640] : memref<128x1152xbf16, #tpu.memory_space<vmem>>, vector<128x128xbf16>
    tpu.vector_store %arg12[%c0_134, %c640], %80 {strides = array<i32>} : memref<128x1152xbf16, #tpu.memory_space<vmem>>, vector<128x128xbf16>,
    %c0_135 = arith.constant 0 : index
    %c2_136 = arith.constant 2 : index
    %c0_137 = arith.constant 0 : index
    %c0_138 = arith.constant 0 : index
    %82 = vector.load %arg11[%c0_135, %c2_136, %c0_137, %c0_138] : memref<2x10x10x128xbf16, #tpu.memory_space<vmem>>, vector<2x8x8x128xbf16>
    %83 = vector.shape_cast %82 : vector<2x8x8x128xbf16> to vector<128x128xbf16>
    %c0_139 = arith.constant 0 : index
    %c768 = arith.constant 768 : index
    %84 = vector.load %arg12[%c0_139, %c768] : memref<128x1152xbf16, #tpu.memory_space<vmem>>, vector<128x128xbf16>
    tpu.vector_store %arg12[%c0_139, %c768], %83 {strides = array<i32>} : memref<128x1152xbf16, #tpu.memory_space<vmem>>, vector<128x128xbf16>,
    %c0_140 = arith.constant 0 : index
    %c2_141 = arith.constant 2 : index
    %c1_142 = arith.constant 1 : index
    %c0_143 = arith.constant 0 : index
    %85 = vector.load %arg11[%c0_140, %c2_141, %c1_142, %c0_143] : memref<2x10x10x128xbf16, #tpu.memory_space<vmem>>, vector<2x8x8x128xbf16>
    %86 = vector.shape_cast %85 : vector<2x8x8x128xbf16> to vector<128x128xbf16>
    %c0_144 = arith.constant 0 : index
    %c896 = arith.constant 896 : index
    %87 = vector.load %arg12[%c0_144, %c896] : memref<128x1152xbf16, #tpu.memory_space<vmem>>, vector<128x128xbf16>
    tpu.vector_store %arg12[%c0_144, %c896], %86 {strides = array<i32>} : memref<128x1152xbf16, #tpu.memory_space<vmem>>, vector<128x128xbf16>,
    %c0_145 = arith.constant 0 : index
    %c2_146 = arith.constant 2 : index
    %c2_147 = arith.constant 2 : index
    %c0_148 = arith.constant 0 : index
    %88 = vector.load %arg11[%c0_145, %c2_146, %c2_147, %c0_148] : memref<2x10x10x128xbf16, #tpu.memory_space<vmem>>, vector<2x8x8x128xbf16>
    %89 = vector.shape_cast %88 : vector<2x8x8x128xbf16> to vector<128x128xbf16>
    %c0_149 = arith.constant 0 : index
    %c1024 = arith.constant 1024 : index
    %90 = vector.load %arg12[%c0_149, %c1024] : memref<128x1152xbf16, #tpu.memory_space<vmem>>, vector<128x128xbf16>
    tpu.vector_store %arg12[%c0_149, %c1024], %89 {strides = array<i32>} : memref<128x1152xbf16, #tpu.memory_space<vmem>>, vector<128x128xbf16>,
    %c0_150 = arith.constant 0 : index
    %c0_151 = arith.constant 0 : index
    %91 = vector.load %arg12[%c0_150, %c0_151] : memref<128x1152xbf16, #tpu.memory_space<vmem>>, vector<128x1152xbf16>
    %c0_152 = arith.constant 0 : index
    %c0_153 = arith.constant 0 : index
    %92 = vector.load %arg5[%c0_152, %c0_153] : memref<1152x128xbf16, #tpu.memory_space<vmem>>, vector<1152x128xbf16>
    %cst_154 = arith.constant dense<0.000000e+00> : vector<128x128xf32>
    %93 = tpu.matmul %91, %92, %cst_154 {dimension_numbers = #tpu.dot_dimension_numbers<[1], [0], [0], [1], [0, 0, 1, 1], [], []>} : vector<128x1152xbf16>, vector<1152x128xbf16>, vector<128x128xf32> -> vector<128x128xf32>
    %c0_155 = arith.constant 0 : index
    %c0_156 = arith.constant 0 : index
    %94 = vector.load %arg6[%c0_155, %c0_156] : memref<1x128xf32, #tpu.memory_space<vmem>>, vector<1x128xf32>
    %95 = vector.broadcast %94 : vector<1x128xf32> to vector<128x128xf32>
    %96 = arith.mulf %93, %95 : vector<128x128xf32>
    %c0_157 = arith.constant 0 : index
    %c0_158 = arith.constant 0 : index
    %97 = vector.load %arg7[%c0_157, %c0_158] : memref<1x128xf32, #tpu.memory_space<vmem>>, vector<1x128xf32>
    %98 = vector.broadcast %97 : vector<1x128xf32> to vector<128x128xf32>
    %99 = arith.addf %96, %98 : vector<128x128xf32>
    %cst_159 = arith.constant 0.000000e+00 : f32
    %100 = vector.broadcast %cst_159 : f32 to vector<128x128xf32>
    %101 = arith.maximumf %99, %100 : vector<128x128xf32>
    %c0_160 = arith.constant 0 : index
    %c0_161 = arith.constant 0 : index
    %102 = vector.load %arg8[%c0_160, %c0_161] : memref<128x128xf32, #tpu.memory_space<vmem>>, vector<128x128xf32>
    tpu.vector_store %arg8[%c0_160, %c0_161], %101 {strides = array<i32>} : memref<128x128xf32, #tpu.memory_space<vmem>>, vector<128x128xf32>,
    return
  }
  func.func @transform_0(%arg0: i32) -> (i32, i32, i32, i32, i32) {
    %c0_i32 = arith.constant 0 : i32
    %c0_i32_0 = arith.constant 0 : i32
    %c0_i32_1 = arith.constant 0 : i32
    %c0_i32_2 = arith.constant 0 : i32
    %c0_i32_3 = arith.constant 0 : i32
    return %arg0, %c0_i32, %c0_i32_0, %c0_i32_1, %c0_i32_2 : i32, i32, i32, i32, i32
  }
  func.func @transform_1(%arg0: i32) -> (i32, i32) {
    %c0_i32 = arith.constant 0 : i32
    %c0_i32_0 = arith.constant 0 : i32
    %c0_i32_1 = arith.constant 0 : i32
    return %c0_i32, %c0_i32_0 : i32, i32
  }
  func.func @transform_2(%arg0: i32) -> (i32, i32) {
    %c0_i32 = arith.constant 0 : i32
    %c0_i32_0 = arith.constant 0 : i32
    %c0_i32_1 = arith.constant 0 : i32
    return %c0_i32, %c0_i32_0 : i32, i32
  }
  func.func @transform_3(%arg0: i32) -> (i32, i32) {
    %c0_i32 = arith.constant 0 : i32
    %c0_i32_0 = arith.constant 0 : i32
    %c0_i32_1 = arith.constant 0 : i32
    return %c0_i32, %c0_i32_0 : i32, i32
  }
  func.func @transform_4(%arg0: i32) -> (i32, i32) {
    %c0_i32 = arith.constant 0 : i32
    %c0_i32_0 = arith.constant 0 : i32
    %c0_i32_1 = arith.constant 0 : i32
    return %c0_i32, %c0_i32_0 : i32, i32
  }
  func.func @transform_5(%arg0: i32) -> (i32, i32) {
    %c0_i32 = arith.constant 0 : i32
    %c0_i32_0 = arith.constant 0 : i32
    %c0_i32_1 = arith.constant 0 : i32
    return %c0_i32, %c0_i32_0 : i32, i32
  }
  func.func @transform_6(%arg0: i32) -> (i32, i32) {
    %c0_i32 = arith.constant 0 : i32
    %c0_i32_0 = arith.constant 0 : i32
    %c0_i32_1 = arith.constant 0 : i32
    return %c0_i32, %c0_i32_0 : i32, i32
  }
  func.func @transform_7(%arg0: i32) -> (i32, i32) {
    %c0_i32 = arith.constant 0 : i32
    %c0_i32_0 = arith.constant 0 : i32
    return %arg0, %c0_i32 : i32, i32
  }
}

</mosaic_0001>

<llo_original>
// kernel: down_pallas.1
$region0: #{down_pallas.1}
  #allocation0 [shape = 'u32[]', space=smem, size = 0x4, offset = 0x4, fixed_abs, tag = 'smem constant byte address 0x4 - core index']
  #allocation1 [shape = 'u32[144,128]{1,0:T(1,128)}', space=vmem, size = 0x12000, scoped, tag = 'internal scratch']
  #allocation2 [shape = 'bf16[2,10,10,64]{3,2,1,0:T(8,128)(2,1)}', space=vmem, size = 0x14000, scoped, tag = 'scratch operand']
  #allocation3 [shape = 'bf16[128,576]{1,0:T(16,128)(2,1)}', space=vmem, size = 0x28000, scoped, tag = 'scratch operand']
  #allocation4 [shape = 'bf16[2,10,10,128]{3,2,1,0:T(8,128)(2,1)}', space=vmem, size = 0x14000, scoped, tag = 'scratch operand']
  #allocation5 [shape = 'bf16[128,1152]{1,0:T(16,128)(2,1)}', space=vmem, size = 0x48000, scoped, tag = 'scratch operand']
  %s0 = inlined_call_operand.vmem [shape: f32[2,8,2,8,128], index: 0, kind: input, shape index: {}]
  %s1 = inlined_call_operand.vmem [shape: bf16[576,128], index: 1, kind: input, shape index: {}]
  %s2 = inlined_call_operand.vmem [shape: f32[1,128], index: 2, kind: input, shape index: {}]
  %s3 = inlined_call_operand.vmem [shape: f32[1,128], index: 3, kind: input, shape index: {}]
  %s4 = inlined_call_operand.vmem [shape: bf16[1152,128], index: 4, kind: input, shape index: {}]
  %s5 = inlined_call_operand.vmem [shape: f32[1,128], index: 5, kind: input, shape index: {}]
  %s6 = inlined_call_operand.vmem [shape: f32[1,128], index: 6, kind: input, shape index: {}]
  %s7 = inlined_call_operand.hbm [shape: f32[128,128], index: 7, kind: output, shape index: {}]
  %s8 = sld [smem:[#allocation0]]
  $region38: #{down_pallas.1} parent=0
    _
  %s10 = ssub.s32 1, %s8
  %s11 = scalar_select 0, %s10, %s8
  $region1: #{down_pallas.1} parent=0
    #allocation6 [shape = 'u8[65536]{0}', space=vmem, size = 0x10000, scoped, tag = 'output window, operand 0, single buffered']
    #allocation7 [shape = 's32[1]{0}', space=sflag, size = 0x4, scoped, tag = 'scoped memory for down_pallas.1']
    %12 = vsyncpa [#allocation7], 0
    // Predicated region
    $region2: #{down_pallas.1} parent=1 // pred_check
      _
    $region3: #{down_pallas.1} parent=1 // pred_check_branch
      %14 = sbr.rel (0) target = $region5
    $region4: #{down_pallas.1} parent=1 // pred_region
      _
    $region5: #{down_pallas.1} parent=1 // pred_fallthru
      _
    // Predicated region
    $region6: #{down_pallas.1} parent=1 // pred_check
      _
    $region7: #{down_pallas.1} parent=1 // pred_check_branch
      %16 = sbr.rel (0) target = $region9
    $region8: #{down_pallas.1} parent=1 // pred_region
      _
    $region9: #{down_pallas.1} parent=1 // pred_fallthru
      _
    // Predicated region
    $region10: #{down_pallas.1} parent=1 // pred_check
      _
    $region11: #{down_pallas.1} parent=1 // pred_check_branch
      %18 = sbr.rel (0) target = $region13
    $region12: #{down_pallas.1} parent=1 // pred_region
      _
    $region13: #{down_pallas.1} parent=1 // pred_fallthru
      _
    // Predicated region
    $region14: #{down_pallas.1} parent=1 // pred_check
      _
    $region15: #{down_pallas.1} parent=1 // pred_check_branch
      %20 = sbr.rel (0) target = $region17
    $region16: #{down_pallas.1} parent=1 // pred_region
      _
    $region17: #{down_pallas.1} parent=1 // pred_fallthru
      _
    // Predicated region
    $region18: #{down_pallas.1} parent=1 // pred_check
      _
    $region19: #{down_pallas.1} parent=1 // pred_check_branch
      %22 = sbr.rel (0) target = $region21
    $region20: #{down_pallas.1} parent=1 // pred_region
      _
    $region21: #{down_pallas.1} parent=1 // pred_fallthru
      _
    // Predicated region
    $region22: #{down_pallas.1} parent=1 // pred_check
      _
    $region23: #{down_pallas.1} parent=1 // pred_check_branch
      %24 = sbr.rel (0) target = $region25
    $region24: #{down_pallas.1} parent=1 // pred_region
      _
    $region25: #{down_pallas.1} parent=1 // pred_fallthru
      _
    // Predicated region
    $region26: #{down_pallas.1} parent=1 // pred_check
      _
    $region27: #{down_pallas.1} parent=1 // pred_check_branch
      %26 = sbr.rel (0) target = $region29
    $region28: #{down_pallas.1} parent=1 // pred_region
      _
    $region29: #{down_pallas.1} parent=1 // pred_fallthru
      _
    %vm28 = vcmask 519168
    %29 = vst.msk [vmem:[#allocation2] sm:$0xf] %vm28, 0
    %vm30 = vcmask 516096
    %31 = vst.msk [vmem:[#allocation2 + $0x4] sm:$0x1] %vm30, 0
    %32 = vst.msk [vmem:[#allocation2 + $0x50] sm:$0xf] %vm28, 0
    %33 = vst.msk [vmem:[#allocation2 + $0x54] sm:$0x1] %vm30, 0
    %s34 = scalar_lea.vmem [#allocation2], 72
    %35 = vst.msk [vmem:[%s34] sm:$0xf] %vm28, 0
    %36 = vst.msk [vmem:[%s34 + $0x4] sm:$0x1] %vm30, 0
    %37 = vst.msk [vmem:[%s34 + $0x50] sm:$0xf] %vm28, 0
    %38 = vst.msk [vmem:[%s34 + $0x54] sm:$0x1] %vm30, 0
    %vm39 = vcmask 516096
    %vm40 = vsmask.f32 256
    %vm41 = vmand %vm39, %vm40
    %v42 = vld [vmem:[#allocation2] sm:$0x1]
    %v43 = vsel %vm41, 0, %v42
    %44 = vst [vmem:[#allocation2] sm:$0x1] %v43
    %v45 = vld [vmem:[#allocation2 + $0x8] sm:$0x1]
    %v46 = vsel %vm41, 0, %v45
    %47 = vst [vmem:[#allocation2 + $0x8] sm:$0x1] %v46
    %v48 = vld [vmem:[#allocation2 + $0x10] sm:$0x1]
    %v49 = vsel %vm41, 0, %v48
    %50 = vst [vmem:[#allocation2 + $0x10] sm:$0x1] %v49
    %v51 = vld [vmem:[#allocation2 + $0x18] sm:$0x1]
    %v52 = vsel %vm41, 0, %v51
    %53 = vst [vmem:[#allocation2 + $0x18] sm:$0x1] %v52
    %v54 = vld [vmem:[#allocation2 + $0x20] sm:$0x1]
    %v55 = vsel %vm41, 0, %v54
    %56 = vst [vmem:[#allocation2 + $0x20] sm:$0x1] %v55
    %v57 = vld [vmem:[#allocation2 + $0x28] sm:$0x1]
    %v58 = vsel %vm41, 0, %v57
    %59 = vst [vmem:[#allocation2 + $0x28] sm:$0x1] %v58
    %v60 = vld [vmem:[#allocation2 + $0x30] sm:$0x1]
    %v61 = vsel %vm41, 0, %v60
    %62 = vst [vmem:[#allocation2 + $0x30] sm:$0x1] %v61
    %v63 = vld [vmem:[#allocation2 + $0x38] sm:$0x1]
    %v64 = vsel %vm41, 0, %v63
    %65 = vst [vmem:[#allocation2 + $0x38] sm:$0x1] %v64
    %v66 = vld [vmem:[#allocation2 + $0x40] sm:$0x1]
    %v67 = vsel %vm41, 0, %v66
    %68 = vst [vmem:[#allocation2 + $0x40] sm:$0x1] %v67
    %v69 = vld [vmem:[#allocation2 + $0x48] sm:$0x1]
    %v70 = vsel %vm41, 0, %v69
    %71 = vst [vmem:[#allocation2 + $0x48] sm:$0x1] %v70
    %v72 = vld [vmem:[#allocation2 + $0x50] sm:$0x1]
    %v73 = vsel %vm41, 0, %v72
    %74 = vst [vmem:[#allocation2 + $0x50] sm:$0x1] %v73
    %v75 = vld [vmem:[#allocation2 + $0x58] sm:$0x1]
    %v76 = vsel %vm41, 0, %v75
    %77 = vst [vmem:[#allocation2 + $0x58] sm:$0x1] %v76
    %v78 = vld [vmem:[#allocation2 + $0x60] sm:$0x1]
    %v79 = vsel %vm41, 0, %v78
    %80 = vst [vmem:[#allocation2 + $0x60] sm:$0x1] %v79
    %v81 = vld [vmem:[#allocation2 + $0x68] sm:$0x1]
    %v82 = vsel %vm41, 0, %v81
    %83 = vst [vmem:[#allocation2 + $0x68] sm:$0x1] %v82
    %v84 = vld [vmem:[#allocation2 + $0x70] sm:$0x1]
    %v85 = vsel %vm41, 0, %v84
    %86 = vst [vmem:[#allocation2 + $0x70] sm:$0x1] %v85
    %v87 = vld [vmem:[#allocation2 + $0x78] sm:$0x1]
    %v88 = vsel %vm41, 0, %v87
    %89 = vst [vmem:[#allocation2 + $0x78] sm:$0x1] %v88
    %v90 = vld [vmem:[#allocation2 + $0x80] sm:$0x1]
    %v91 = vsel %vm41, 0, %v90
    %92 = vst [vmem:[#allocation2 + $0x80] sm:$0x1] %v91
    %v93 = vld [vmem:[#allocation2 + $0x88] sm:$0x1]
    %v94 = vsel %vm41, 0, %v93
    %95 = vst [vmem:[#allocation2 + $0x88] sm:$0x1] %v94
    %v96 = vld [vmem:[#allocation2 + $0x90] sm:$0x1]
    %v97 = vsel %vm41, 0, %v96
    %98 = vst [vmem:[#allocation2 + $0x90] sm:$0x1] %v97
    %v99 = vld [vmem:[#allocation2 + $0x98] sm:$0x1]
    %v100 = vsel %vm41, 0, %v99
    %101 = vst [vmem:[#allocation2 + $0x98] sm:$0x1] %v100
    %vm102 = vsmask.f32 7938
    %vm103 = vmand %vm39, %vm102
    %v104 = vld [vmem:[#allocation2 + $0x4] sm:$0x1]
    %v105 = vsel %vm103, 0, %v104
    %106 = vst [vmem:[#allocation2 + $0x4] sm:$0x1] %v105
    %v107 = vld [vmem:[#allocation2 + $0xc] sm:$0x1]
    %v108 = vsel %vm103, 0, %v107
    %109 = vst [vmem:[#allocation2 + $0xc] sm:$0x1] %v108
    %v110 = vld [vmem:[#allocation2 + $0x14] sm:$0x1]
    %v111 = vsel %vm103, 0, %v110
    %112 = vst [vmem:[#allocation2 + $0x14] sm:$0x1] %v111
    %v113 = vld [vmem:[#allocation2 + $0x1c] sm:$0x1]
    %v114 = vsel %vm103, 0, %v113
    %115 = vst [vmem:[#allocation2 + $0x1c] sm:$0x1] %v114
    %v116 = vld [vmem:[#allocation2 + $0x24] sm:$0x1]
    %v117 = vsel %vm103, 0, %v116
    %118 = vst [vmem:[#allocation2 + $0x24] sm:$0x1] %v117
    %v119 = vld [vmem:[#allocation2 + $0x2c] sm:$0x1]
    %v120 = vsel %vm103, 0, %v119
    %121 = vst [vmem:[#allocation2 + $0x2c] sm:$0x1] %v120
    %v122 = vld [vmem:[#allocation2 + $0x34] sm:$0x1]
    %v123 = vsel %vm103, 0, %v122
    %124 = vst [vmem:[#allocation2 + $0x34] sm:$0x1] %v123
    %v125 = vld [vmem:[#allocation2 + $0x3c] sm:$0x1]
    %v126 = vsel %vm103, 0, %v125
    %127 = vst [vmem:[#allocation2 + $0x3c] sm:$0x1] %v126
    %v128 = vld [vmem:[#allocation2 + $0x44] sm:$0x1]
    %v129 = vsel %vm103, 0, %v128
    %130 = vst [vmem:[#allocation2 + $0x44] sm:$0x1] %v129
    %v131 = vld [vmem:[#allocation2 + $0x4c] sm:$0x1]
    %v132 = vsel %vm103, 0, %v131
    %133 = vst [vmem:[#allocation2 + $0x4c] sm:$0x1] %v132
    %v134 = vld [vmem:[#allocation2 + $0x54] sm:$0x1]
    %v135 = vsel %vm103, 0, %v134
    %136 = vst [vmem:[#allocation2 + $0x54] sm:$0x1] %v135
    %v137 = vld [vmem:[#allocation2 + $0x5c] sm:$0x1]
    %v138 = vsel %vm103, 0, %v137
    %139 = vst [vmem:[#allocation2 + $0x5c] sm:$0x1] %v138
    %v140 = vld [vmem:[#allocation2 + $0x64] sm:$0x1]
    %v141 = vsel %vm103, 0, %v140
    %142 = vst [vmem:[#allocation2 + $0x64] sm:$0x1] %v141
    %v143 = vld [vmem:[#allocation2 + $0x6c] sm:$0x1]
    %v144 = vsel %vm103, 0, %v143
    %145 = vst [vmem:[#allocation2 + $0x6c] sm:$0x1] %v144
    %v146 = vld [vmem:[#allocation2 + $0x74] sm:$0x1]
    %v147 = vsel %vm103, 0, %v146
    %148 = vst [vmem:[#allocation2 + $0x74] sm:$0x1] %v147
    %v149 = vld [vmem:[#allocation2 + $0x7c] sm:$0x1]
    %v150 = vsel %vm103, 0, %v149
    %151 = vst [vmem:[#allocation2 + $0x7c] sm:$0x1] %v150
    %v152 = vld [vmem:[#allocation2 + $0x84] sm:$0x1]
    %v153 = vsel %vm103, 0, %v152
    %154 = vst [vmem:[#allocation2 + $0x84] sm:$0x1] %v153
    %v155 = vld [vmem:[#allocation2 + $0x8c] sm:$0x1]
    %v156 = vsel %vm103, 0, %v155
    %157 = vst [vmem:[#allocation2 + $0x8c] sm:$0x1] %v156
    %v158 = vld [vmem:[#allocation2 + $0x94] sm:$0x1]
    %v159 = vsel %vm103, 0, %v158
    %160 = vst [vmem:[#allocation2 + $0x94] sm:$0x1] %v159
    %v161 = vld [vmem:[#allocation2 + $0x9c] sm:$0x1]
    %v162 = vsel %vm103, 0, %v161
    %163 = vst [vmem:[#allocation2 + $0x9c] sm:$0x1] %v162
    %164 = vst [vmem:[#allocation4] sm:$0xf] 0
    %165 = vst [vmem:[#allocation4 + $0x4] sm:$0x1] 0
    %166 = vst [vmem:[#allocation4 + $0x50] sm:$0xf] 0
    %167 = vst [vmem:[#allocation4 + $0x54] sm:$0x1] 0
    %s168 = scalar_lea.vmem [#allocation4], 72
    %169 = vst [vmem:[%s168] sm:$0xf] 0
    %170 = vst [vmem:[%s168 + $0x4] sm:$0x1] 0
    %171 = vst [vmem:[%s168 + $0x50] sm:$0xf] 0
    %172 = vst [vmem:[%s168 + $0x54] sm:$0x1] 0
    %vm173 = vcmask 1040384
    %vm174 = vmand %vm173, %vm40
    %v175 = vld [vmem:[#allocation4] sm:$0x1]
    %v176 = vsel %vm174, 0, %v175
    %177 = vst [vmem:[#allocation4] sm:$0x1] %v176
    %v178 = vld [vmem:[#allocation4 + $0x8] sm:$0x1]
    %v179 = vsel %vm174, 0, %v178
    %180 = vst [vmem:[#allocation4 + $0x8] sm:$0x1] %v179
    %v181 = vld [vmem:[#allocation4 + $0x10] sm:$0x1]
    %v182 = vsel %vm174, 0, %v181
    %183 = vst [vmem:[#allocation4 + $0x10] sm:$0x1] %v182
    %v184 = vld [vmem:[#allocation4 + $0x18] sm:$0x1]
    %v185 = vsel %vm174, 0, %v184
    %186 = vst [vmem:[#allocation4 + $0x18] sm:$0x1] %v185
    %v187 = vld [vmem:[#allocation4 + $0x20] sm:$0x1]
    %v188 = vsel %vm174, 0, %v187
    %189 = vst [vmem:[#allocation4 + $0x20] sm:$0x1] %v188
    %v190 = vld [vmem:[#allocation4 + $0x28] sm:$0x1]
    %v191 = vsel %vm174, 0, %v190
    %192 = vst [vmem:[#allocation4 + $0x28] sm:$0x1] %v191
    %v193 = vld [vmem:[#allocation4 + $0x30] sm:$0x1]
    %v194 = vsel %vm174, 0, %v193
    %195 = vst [vmem:[#allocation4 + $0x30] sm:$0x1] %v194
    %v196 = vld [vmem:[#allocation4 + $0x38] sm:$0x1]
    %v197 = vsel %vm174, 0, %v196
    %198 = vst [vmem:[#allocation4 + $0x38] sm:$0x1] %v197
    %v199 = vld [vmem:[#allocation4 + $0x40] sm:$0x1]
    %v200 = vsel %vm174, 0, %v199
    %201 = vst [vmem:[#allocation4 + $0x40] sm:$0x1] %v200
    %v202 = vld [vmem:[#allocation4 + $0x48] sm:$0x1]
    %v203 = vsel %vm174, 0, %v202
    %204 = vst [vmem:[#allocation4 + $0x48] sm:$0x1] %v203
    %v205 = vld [vmem:[#allocation4 + $0x50] sm:$0x1]
    %v206 = vsel %vm174, 0, %v205
    %207 = vst [vmem:[#allocation4 + $0x50] sm:$0x1] %v206
    %v208 = vld [vmem:[#allocation4 + $0x58] sm:$0x1]
    %v209 = vsel %vm174, 0, %v208
    %210 = vst [vmem:[#allocation4 + $0x58] sm:$0x1] %v209
    %v211 = vld [vmem:[#allocation4 + $0x60] sm:$0x1]
    %v212 = vsel %vm174, 0, %v211
    %213 = vst [vmem:[#allocation4 + $0x60] sm:$0x1] %v212
    %v214 = vld [vmem:[#allocation4 + $0x68] sm:$0x1]
    %v215 = vsel %vm174, 0, %v214
    %216 = vst [vmem:[#allocation4 + $0x68] sm:$0x1] %v215
    %v217 = vld [vmem:[#allocation4 + $0x70] sm:$0x1]
    %v218 = vsel %vm174, 0, %v217
    %219 = vst [vmem:[#allocation4 + $0x70] sm:$0x1] %v218
    %v220 = vld [vmem:[#allocation4 + $0x78] sm:$0x1]
    %v221 = vsel %vm174, 0, %v220
    %222 = vst [vmem:[#allocation4 + $0x78] sm:$0x1] %v221
    %v223 = vld [vmem:[#allocation4 + $0x80] sm:$0x1]
    %v224 = vsel %vm174, 0, %v223
    %225 = vst [vmem:[#allocation4 + $0x80] sm:$0x1] %v224
    %v226 = vld [vmem:[#allocation4 + $0x88] sm:$0x1]
    %v227 = vsel %vm174, 0, %v226
    %228 = vst [vmem:[#allocation4 + $0x88] sm:$0x1] %v227
    %v229 = vld [vmem:[#allocation4 + $0x90] sm:$0x1]
    %v230 = vsel %vm174, 0, %v229
    %231 = vst [vmem:[#allocation4 + $0x90] sm:$0x1] %v230
    %v232 = vld [vmem:[#allocation4 + $0x98] sm:$0x1]
    %v233 = vsel %vm174, 0, %v232
    %234 = vst [vmem:[#allocation4 + $0x98] sm:$0x1] %v233
    %vm235 = vmand %vm173, %vm102
    %v236 = vld [vmem:[#allocation4 + $0x4] sm:$0x1]
    %v237 = vsel %vm235, 0, %v236
    %238 = vst [vmem:[#allocation4 + $0x4] sm:$0x1] %v237
    %v239 = vld [vmem:[#allocation4 + $0xc] sm:$0x1]
    %v240 = vsel %vm235, 0, %v239
    %241 = vst [vmem:[#allocation4 + $0xc] sm:$0x1] %v240
    %v242 = vld [vmem:[#allocation4 + $0x14] sm:$0x1]
    %v243 = vsel %vm235, 0, %v242
    %244 = vst [vmem:[#allocation4 + $0x14] sm:$0x1] %v243
    %v245 = vld [vmem:[#allocation4 + $0x1c] sm:$0x1]
    %v246 = vsel %vm235, 0, %v245
    %247 = vst [vmem:[#allocation4 + $0x1c] sm:$0x1] %v246
    %v248 = vld [vmem:[#allocation4 + $0x24] sm:$0x1]
    %v249 = vsel %vm235, 0, %v248
    %250 = vst [vmem:[#allocation4 + $0x24] sm:$0x1] %v249
    %v251 = vld [vmem:[#allocation4 + $0x2c] sm:$0x1]
    %v252 = vsel %vm235, 0, %v251
    %253 = vst [vmem:[#allocation4 + $0x2c] sm:$0x1] %v252
    %v254 = vld [vmem:[#allocation4 + $0x34] sm:$0x1]
    %v255 = vsel %vm235, 0, %v254
    %256 = vst [vmem:[#allocation4 + $0x34] sm:$0x1] %v255
    %v257 = vld [vmem:[#allocation4 + $0x3c] sm:$0x1]
    %v258 = vsel %vm235, 0, %v257
    %259 = vst [vmem:[#allocation4 + $0x3c] sm:$0x1] %v258
    %v260 = vld [vmem:[#allocation4 + $0x44] sm:$0x1]
    %v261 = vsel %vm235, 0, %v260
    %262 = vst [vmem:[#allocation4 + $0x44] sm:$0x1] %v261
    %v263 = vld [vmem:[#allocation4 + $0x4c] sm:$0x1]
    %v264 = vsel %vm235, 0, %v263
    %265 = vst [vmem:[#allocation4 + $0x4c] sm:$0x1] %v264
    %v266 = vld [vmem:[#allocation4 + $0x54] sm:$0x1]
    %v267 = vsel %vm235, 0, %v266
    %268 = vst [vmem:[#allocation4 + $0x54] sm:$0x1] %v267
    %v269 = vld [vmem:[#allocation4 + $0x5c] sm:$0x1]
    %v270 = vsel %vm235, 0, %v269
    %271 = vst [vmem:[#allocation4 + $0x5c] sm:$0x1] %v270
    %v272 = vld [vmem:[#allocation4 + $0x64] sm:$0x1]
    %v273 = vsel %vm235, 0, %v272
    %274 = vst [vmem:[#allocation4 + $0x64] sm:$0x1] %v273
    %v275 = vld [vmem:[#allocation4 + $0x6c] sm:$0x1]
    %v276 = vsel %vm235, 0, %v275
    %277 = vst [vmem:[#allocation4 + $0x6c] sm:$0x1] %v276
    %v278 = vld [vmem:[#allocation4 + $0x74] sm:$0x1]
    %v279 = vsel %vm235, 0, %v278
    %280 = vst [vmem:[#allocation4 + $0x74] sm:$0x1] %v279
    %v281 = vld [vmem:[#allocation4 + $0x7c] sm:$0x1]
    %v282 = vsel %vm235, 0, %v281
    %283 = vst [vmem:[#allocation4 + $0x7c] sm:$0x1] %v282
    %v284 = vld [vmem:[#allocation4 + $0x84] sm:$0x1]
    %v285 = vsel %vm235, 0, %v284
    %286 = vst [vmem:[#allocation4 + $0x84] sm:$0x1] %v285
    %v287 = vld [vmem:[#allocation4 + $0x8c] sm:$0x1]
    %v288 = vsel %vm235, 0, %v287
    %289 = vst [vmem:[#allocation4 + $0x8c] sm:$0x1] %v288
    %v290 = vld [vmem:[#allocation4 + $0x94] sm:$0x1]
    %v291 = vsel %vm235, 0, %v290
    %292 = vst [vmem:[#allocation4 + $0x94] sm:$0x1] %v291
    %v293 = vld [vmem:[#allocation4 + $0x9c] sm:$0x1]
    %v294 = vsel %vm235, 0, %v293
    %295 = vst [vmem:[#allocation4 + $0x9c] sm:$0x1] %v294
    %v296 = vld [vmem:[%s0] sm:$0xff]
    %v297 = vld [vmem:[%s0 + $0x8] sm:$0xff]
    %v298 = vld [vmem:[%s0 + $0x10] sm:$0xff]
    %v299 = vld [vmem:[%s0 + $0x18] sm:$0xff]
    %v300 = vld [vmem:[%s0 + $0x20] sm:$0xff]
    %v301 = vld [vmem:[%s0 + $0x28] sm:$0xff]
    %v302 = vld [vmem:[%s0 + $0x30] sm:$0xff]
    %v303 = vld [vmem:[%s0 + $0x38] sm:$0xff]
    %v304 = vld [vmem:[%s0 + $0x40] sm:$0xff]
    %v305 = vld [vmem:[%s0 + $0x48] sm:$0xff]
    %v306 = vld [vmem:[%s0 + $0x50] sm:$0xff]
    %v307 = vld [vmem:[%s0 + $0x58] sm:$0xff]
    %v308 = vld [vmem:[%s0 + $0x60] sm:$0xff]
    %v309 = vld [vmem:[%s0 + $0x68] sm:$0xff]
    %v310 = vld [vmem:[%s0 + $0x70] sm:$0xff]
    %v311 = vld [vmem:[%s0 + $0x78] sm:$0xff]
    %v312 = vld [vmem:[%s0 + $0x80] sm:$0xff]
    %v313 = vld [vmem:[%s0 + $0x88] sm:$0xff]
    %v314 = vld [vmem:[%s0 + $0x90] sm:$0xff]
    %v315 = vld [vmem:[%s0 + $0x98] sm:$0xff]
    %v316 = vld [vmem:[%s0 + $0xa0] sm:$0xff]
    %v317 = vld [vmem:[%s0 + $0xa8] sm:$0xff]
    %v318 = vld [vmem:[%s0 + $0xb0] sm:$0xff]
    %v319 = vld [vmem:[%s0 + $0xb8] sm:$0xff]
    %v320 = vld [vmem:[%s0 + $0xc0] sm:$0xff]
    %v321 = vld [vmem:[%s0 + $0xc8] sm:$0xff]
    %v322 = vld [vmem:[%s0 + $0xd0] sm:$0xff]
    %v323 = vld [vmem:[%s0 + $0xd8] sm:$0xff]
    %v324 = vld [vmem:[%s0 + $0xe0] sm:$0xff]
    %v325 = vld [vmem:[%s0 + $0xe8] sm:$0xff]
    %v326 = vld [vmem:[%s0 + $0xf0] sm:$0xff]
    %v327 = vld [vmem:[%s0 + $0xf8] sm:$0xff]
    %v328 = vmax.f32 %v296, %v297
    %v329 = vmax.f32 %v298, %v299
    %v330 = vmax.f32 %v300, %v301
    %v331 = vmax.f32 %v302, %v303
    %v332 = vmax.f32 %v304, %v305
    %v333 = vmax.f32 %v306, %v307
    %v334 = vmax.f32 %v308, %v309
    %v335 = vmax.f32 %v310, %v311
    %v336 = vmax.f32 %v312, %v313
    %v337 = vmax.f32 %v314, %v315
    %v338 = vmax.f32 %v316, %v317
    %v339 = vmax.f32 %v318, %v319
    %v340 = vmax.f32 %v320, %v321
    %v341 = vmax.f32 %v322, %v323
    %v342 = vmax.f32 %v324, %v325
    %v343 = vmax.f32 %v326, %v327
    %360 = vrot.lane.b32.xlu0 %v328, 64
    %v361 = vpop.permute.xlu0 %360
    %362 = vrot.lane.b32.xlu0 %v329, 64
    %v363 = vpop.permute.xlu0 %362
    %364 = vrot.lane.b32.xlu0 %v330, 64
    %v365 = vpop.permute.xlu0 %364
    %366 = vrot.lane.b32.xlu0 %v331, 64
    %v367 = vpop.permute.xlu0 %366
    %368 = vrot.lane.b32.xlu0 %v332, 64
    %v369 = vpop.permute.xlu0 %368
    %370 = vrot.lane.b32.xlu0 %v333, 64
    %v371 = vpop.permute.xlu0 %370
    %372 = vrot.lane.b32.xlu0 %v334, 64
    %v373 = vpop.permute.xlu0 %372
    %374 = vrot.lane.b32.xlu0 %v335, 64
    %v375 = vpop.permute.xlu0 %374
    %376 = vrot.lane.b32.xlu0 %v336, 64
    %v377 = vpop.permute.xlu0 %376
    %378 = vrot.lane.b32.xlu0 %v337, 64
    %v379 = vpop.permute.xlu0 %378
    %380 = vrot.lane.b32.xlu0 %v338, 64
    %v381 = vpop.permute.xlu0 %380
    %382 = vrot.lane.b32.xlu0 %v339, 64
    %v383 = vpop.permute.xlu0 %382
    %384 = vrot.lane.b32.xlu0 %v340, 64
    %v385 = vpop.permute.xlu0 %384
    %386 = vrot.lane.b32.xlu0 %v341, 64
    %v387 = vpop.permute.xlu0 %386
    %388 = vrot.lane.b32.xlu0 %v342, 64
    %v389 = vpop.permute.xlu0 %388
    %390 = vrot.lane.b32.xlu0 %v343, 64
    %v391 = vpop.permute.xlu0 %390
    %v408 = vmax.f32 %v328, %v361
    %v409 = vmax.f32 %v329, %v363
    %v410 = vmax.f32 %v330, %v365
    %v411 = vmax.f32 %v331, %v367
    %v412 = vmax.f32 %v332, %v369
    %v413 = vmax.f32 %v333, %v371
    %v414 = vmax.f32 %v334, %v373
    %v415 = vmax.f32 %v335, %v375
    %v416 = vmax.f32 %v336, %v377
    %v417 = vmax.f32 %v337, %v379
    %v418 = vmax.f32 %v338, %v381
    %v419 = vmax.f32 %v339, %v383
    %v420 = vmax.f32 %v340, %v385
    %v421 = vmax.f32 %v341, %v387
    %v422 = vmax.f32 %v342, %v389
    %v423 = vmax.f32 %v343, %v391
    %v424 = vpack.c.bf16 %v408, %v408
    %v425 = vpack.c.bf16 %v409, %v409
    %v426 = vpack.c.bf16 %v410, %v410
    %v427 = vpack.c.bf16 %v411, %v411
    %v428 = vpack.c.bf16 %v412, %v412
    %v429 = vpack.c.bf16 %v413, %v413
    %v430 = vpack.c.bf16 %v414, %v414
    %v431 = vpack.c.bf16 %v415, %v415
    %v432 = vpack.c.bf16 %v416, %v416
    %v433 = vpack.c.bf16 %v417, %v417
    %v434 = vpack.c.bf16 %v418, %v418
    %v435 = vpack.c.bf16 %v419, %v419
    %v436 = vpack.c.bf16 %v420, %v420
    %v437 = vpack.c.bf16 %v421, %v421
    %v438 = vpack.c.bf16 %v422, %v422
    %v439 = vpack.c.bf16 %v423, %v423
    %v456 = vunpack.c.l.b16 %v424
    %v457 = vunpack.c.l.b16 %v425
    %v458 = vunpack.c.l.b16 %v426
    %v459 = vunpack.c.l.b16 %v427
    %v460 = vunpack.c.l.b16 %v428
    %v461 = vunpack.c.l.b16 %v429
    %v462 = vunpack.c.l.b16 %v430
    %v463 = vunpack.c.l.b16 %v431
    %v464 = vunpack.c.l.b16 %v432
    %v465 = vunpack.c.l.b16 %v433
    %v466 = vunpack.c.l.b16 %v434
    %v467 = vunpack.c.l.b16 %v435
    %v468 = vunpack.c.l.b16 %v436
    %v469 = vunpack.c.l.b16 %v437
    %v470 = vunpack.c.l.b16 %v438
    %v471 = vunpack.c.l.b16 %v439
    %v472 = vpack.c.b16 %v456, %v456
    %v473 = vpack.c.b16 %v457, %v457
    %v474 = vpack.c.b16 %v458, %v458
    %v475 = vpack.c.b16 %v459, %v459
    %v476 = vpack.c.b16 %v460, %v460
    %v477 = vpack.c.b16 %v461, %v461
    %v478 = vpack.c.b16 %v462, %v462
    %v479 = vpack.c.b16 %v463, %v463
    %v480 = vpack.c.b16 %v464, %v464
    %v481 = vpack.c.b16 %v465, %v465
    %v482 = vpack.c.b16 %v466, %v466
    %v483 = vpack.c.b16 %v467, %v467
    %v484 = vpack.c.b16 %v468, %v468
    %v485 = vpack.c.b16 %v469, %v469
    %v486 = vpack.c.b16 %v470, %v470
    %v487 = vpack.c.b16 %v471, %v471
    %v489 = vshrl.u32 %v472, 16
    %v491 = vrot.slane %v489, 7
    %v492 = vshll.u32 %v472, 16
    %v494 = vor.u32 %v491, %v492
    %v495 = vrot.slane %v491, 4
    %v497 = vshrl.u32 %v473, 16
    %v499 = vrot.slane %v497, 7
    %v500 = vshll.u32 %v473, 16
    %v502 = vor.u32 %v499, %v500
    %v503 = vrot.slane %v499, 4
    %v505 = vshrl.u32 %v474, 16
    %v507 = vrot.slane %v505, 7
    %v508 = vshll.u32 %v474, 16
    %v510 = vor.u32 %v507, %v508
    %v511 = vrot.slane %v507, 4
    %v513 = vshrl.u32 %v475, 16
    %v515 = vrot.slane %v513, 7
    %v516 = vshll.u32 %v475, 16
    %v518 = vor.u32 %v515, %v516
    %v519 = vrot.slane %v515, 4
    %v521 = vshrl.u32 %v476, 16
    %v523 = vrot.slane %v521, 7
    %v524 = vshll.u32 %v476, 16
    %v526 = vor.u32 %v523, %v524
    %v527 = vrot.slane %v523, 4
    %v529 = vshrl.u32 %v477, 16
    %v531 = vrot.slane %v529, 7
    %v532 = vshll.u32 %v477, 16
    %v534 = vor.u32 %v531, %v532
    %v535 = vrot.slane %v531, 4
    %v537 = vshrl.u32 %v478, 16
    %v539 = vrot.slane %v537, 7
    %v540 = vshll.u32 %v478, 16
    %v542 = vor.u32 %v539, %v540
    %v543 = vrot.slane %v539, 4
    %v545 = vshrl.u32 %v479, 16
    %v547 = vrot.slane %v545, 7
    %v548 = vshll.u32 %v479, 16
    %v550 = vor.u32 %v547, %v548
    %v551 = vrot.slane %v547, 4
    %v553 = vshrl.u32 %v480, 16
    %v555 = vrot.slane %v553, 7
    %v556 = vshll.u32 %v480, 16
    %v558 = vor.u32 %v555, %v556
    %v559 = vrot.slane %v555, 4
    %v561 = vshrl.u32 %v481, 16
    %v563 = vrot.slane %v561, 7
    %v564 = vshll.u32 %v481, 16
    %v566 = vor.u32 %v563, %v564
    %v567 = vrot.slane %v563, 4
    %v569 = vshrl.u32 %v482, 16
    %v571 = vrot.slane %v569, 7
    %v572 = vshll.u32 %v482, 16
    %v574 = vor.u32 %v571, %v572
    %v575 = vrot.slane %v571, 4
    %v577 = vshrl.u32 %v483, 16
    %v579 = vrot.slane %v577, 7
    %v580 = vshll.u32 %v483, 16
    %v582 = vor.u32 %v579, %v580
    %v583 = vrot.slane %v579, 4
    %v585 = vshrl.u32 %v484, 16
    %v587 = vrot.slane %v585, 7
    %v588 = vshll.u32 %v484, 16
    %v590 = vor.u32 %v587, %v588
    %v591 = vrot.slane %v587, 4
    %v593 = vshrl.u32 %v485, 16
    %v595 = vrot.slane %v593, 7
    %v596 = vshll.u32 %v485, 16
    %v598 = vor.u32 %v595, %v596
    %v599 = vrot.slane %v595, 4
    %v601 = vshrl.u32 %v486, 16
    %v603 = vrot.slane %v601, 7
    %v604 = vshll.u32 %v486, 16
    %v606 = vor.u32 %v603, %v604
    %v607 = vrot.slane %v603, 4
    %v609 = vshrl.u32 %v487, 16
    %v611 = vrot.slane %v609, 7
    %v612 = vshll.u32 %v487, 16
    %v614 = vor.u32 %v611, %v612
    %v615 = vrot.slane %v611, 4
    %s648 = scalar_lea.vmem [#allocation2], 8
    %vm649 = vcmask 519168
    %vm650 = vmand %vm649, %vm102
    %v651 = vld [vmem:[%s648] sm:$0xf]
    %v652 = vsel %vm650, %v494, %v651
    %653 = vst [vmem:[%s648] sm:$0xf] %v652
    %v654 = vld [vmem:[%s648 + $0x4] sm:$0x1]
    %v655 = vsel %vm41, %v495, %v654
    %656 = vst [vmem:[%s648 + $0x4] sm:$0x1] %v655
    %v657 = vld [vmem:[%s648 + $0x8] sm:$0xf]
    %v658 = vsel %vm650, %v502, %v657
    %659 = vst [vmem:[%s648 + $0x8] sm:$0xf] %v658
    %v660 = vld [vmem:[%s648 + $0xc] sm:$0x1]
    %v661 = vsel %vm41, %v503, %v660
    %662 = vst [vmem:[%s648 + $0xc] sm:$0x1] %v661
    %v663 = vld [vmem:[%s648 + $0x10] sm:$0xf]
    %v664 = vsel %vm650, %v510, %v663
    %665 = vst [vmem:[%s648 + $0x10] sm:$0xf] %v664
    %v666 = vld [vmem:[%s648 + $0x14] sm:$0x1]
    %v667 = vsel %vm41, %v511, %v666
    %668 = vst [vmem:[%s648 + $0x14] sm:$0x1] %v667
    %v669 = vld [vmem:[%s648 + $0x18] sm:$0xf]
    %v670 = vsel %vm650, %v518, %v669
    %671 = vst [vmem:[%s648 + $0x18] sm:$0xf] %v670
    %v672 = vld [vmem:[%s648 + $0x1c] sm:$0x1]
    %v673 = vsel %vm41, %v519, %v672
    %674 = vst [vmem:[%s648 + $0x1c] sm:$0x1] %v673
    %v675 = vld [vmem:[%s648 + $0x20] sm:$0xf]
    %v676 = vsel %vm650, %v526, %v675
    %677 = vst [vmem:[%s648 + $0x20] sm:$0xf] %v676
    %v678 = vld [vmem:[%s648 + $0x24] sm:$0x1]
    %v679 = vsel %vm41, %v527, %v678
    %680 = vst [vmem:[%s648 + $0x24] sm:$0x1] %v679
    %v681 = vld [vmem:[%s648 + $0x28] sm:$0xf]
    %v682 = vsel %vm650, %v534, %v681
    %683 = vst [vmem:[%s648 + $0x28] sm:$0xf] %v682
    %v684 = vld [vmem:[%s648 + $0x2c] sm:$0x1]
    %v685 = vsel %vm41, %v535, %v684
    %686 = vst [vmem:[%s648 + $0x2c] sm:$0x1] %v685
    %v687 = vld [vmem:[%s648 + $0x30] sm:$0xf]
    %v688 = vsel %vm650, %v542, %v687
    %689 = vst [vmem:[%s648 + $0x30] sm:$0xf] %v688
    %v690 = vld [vmem:[%s648 + $0x34] sm:$0x1]
    %v691 = vsel %vm41, %v543, %v690
    %692 = vst [vmem:[%s648 + $0x34] sm:$0x1] %v691
    %v693 = vld [vmem:[%s648 + $0x38] sm:$0xf]
    %v694 = vsel %vm650, %v550, %v693
    %695 = vst [vmem:[%s648 + $0x38] sm:$0xf] %v694
    %v696 = vld [vmem:[%s648 + $0x3c] sm:$0x1]
    %v697 = vsel %vm41, %v551, %v696
    %698 = vst [vmem:[%s648 + $0x3c] sm:$0x1] %v697
    %v699 = vld [vmem:[%s648 + $0x50] sm:$0xf]
    %v700 = vsel %vm650, %v558, %v699
    %701 = vst [vmem:[%s648 + $0x50] sm:$0xf] %v700
    %v702 = vld [vmem:[%s648 + $0x54] sm:$0x1]
    %v703 = vsel %vm41, %v559, %v702
    %704 = vst [vmem:[%s648 + $0x54] sm:$0x1] %v703
    %v705 = vld [vmem:[%s648 + $0x58] sm:$0xf]
    %v706 = vsel %vm650, %v566, %v705
    %707 = vst [vmem:[%s648 + $0x58] sm:$0xf] %v706
    %v708 = vld [vmem:[%s648 + $0x5c] sm:$0x1]
    %v709 = vsel %vm41, %v567, %v708
    %710 = vst [vmem:[%s648 + $0x5c] sm:$0x1] %v709
    %v711 = vld [vmem:[%s648 + $0x60] sm:$0xf]
    %v712 = vsel %vm650, %v574, %v711
    %713 = vst [vmem:[%s648 + $0x60] sm:$0xf] %v712
    %v714 = vld [vmem:[%s648 + $0x64] sm:$0x1]
    %v715 = vsel %vm41, %v575, %v714
    %716 = vst [vmem:[%s648 + $0x64] sm:$0x1] %v715
    %v717 = vld [vmem:[%s648 + $0x68] sm:$0xf]
    %v718 = vsel %vm650, %v582, %v717
    %719 = vst [vmem:[%s648 + $0x68] sm:$0xf] %v718
    %v720 = vld [vmem:[%s648 + $0x6c] sm:$0x1]
    %v721 = vsel %vm41, %v583, %v720
    %722 = vst [vmem:[%s648 + $0x6c] sm:$0x1] %v721
    %v723 = vld [vmem:[%s648 + $0x70] sm:$0xf]
    %v724 = vsel %vm650, %v590, %v723
    %725 = vst [vmem:[%s648 + $0x70] sm:$0xf] %v724
    %v726 = vld [vmem:[%s648 + $0x74] sm:$0x1]
    %v727 = vsel %vm41, %v591, %v726
    %728 = vst [vmem:[%s648 + $0x74] sm:$0x1] %v727
    %v729 = vld [vmem:[%s648 + $0x78] sm:$0xf]
    %v730 = vsel %vm650, %v598, %v729
    %731 = vst [vmem:[%s648 + $0x78] sm:$0xf] %v730
    %v732 = vld [vmem:[%s648 + $0x7c] sm:$0x1]
    %v733 = vsel %vm41, %v599, %v732
    %734 = vst [vmem:[%s648 + $0x7c] sm:$0x1] %v733
    %v735 = vld [vmem:[%s648 + $0x80] sm:$0xf]
    %v736 = vsel %vm650, %v606, %v735
    %737 = vst [vmem:[%s648 + $0x80] sm:$0xf] %v736
    %v738 = vld [vmem:[%s648 + $0x84] sm:$0x1]
    %v739 = vsel %vm41, %v607, %v738
    %740 = vst [vmem:[%s648 + $0x84] sm:$0x1] %v739
    %v741 = vld [vmem:[%s648 + $0x88] sm:$0xf]
    %v742 = vsel %vm650, %v614, %v741
    %743 = vst [vmem:[%s648 + $0x88] sm:$0xf] %v742
    %v744 = vld [vmem:[%s648 + $0x8c] sm:$0x1]
    %v745 = vsel %vm41, %v615, %v744
    %746 = vst [vmem:[%s648 + $0x8c] sm:$0x1] %v745
    %v747 = vld [vmem:[#allocation2] sm:$0xf]
    %v748 = vld [vmem:[#allocation2 + $0x8] sm:$0xf]
    %v749 = vld [vmem:[#allocation2 + $0x10] sm:$0xf]
    %v750 = vld [vmem:[#allocation2 + $0x18] sm:$0xf]
    %v751 = vld [vmem:[#allocation2 + $0x20] sm:$0xf]
    %v752 = vld [vmem:[#allocation2 + $0x28] sm:$0xf]
    %v753 = vld [vmem:[#allocation2 + $0x30] sm:$0xf]
    %v754 = vld [vmem:[#allocation2 + $0x38] sm:$0xf]
    %v755 = vld [vmem:[#allocation2 + $0x50] sm:$0xf]
    %v756 = vld [vmem:[#allocation2 + $0x58] sm:$0xf]
    %v757 = vld [vmem:[#allocation2 + $0x60] sm:$0xf]
    %v758 = vld [vmem:[#allocation2 + $0x68] sm:$0xf]
    %v759 = vld [vmem:[#allocation2 + $0x70] sm:$0xf]
    %v760 = vld [vmem:[#allocation2 + $0x78] sm:$0xf]
    %v761 = vld [vmem:[#allocation2 + $0x80] sm:$0xf]
    %v762 = vld [vmem:[#allocation2 + $0x88] sm:$0xf]
    %v779 = vunpack.c.l.b16 %v747
    %v780 = vunpack.c.l.b16 %v748
    %v781 = vunpack.c.l.b16 %v749
    %v782 = vunpack.c.l.b16 %v750
    %v783 = vunpack.c.l.b16 %v751
    %v784 = vunpack.c.l.b16 %v752
    %v785 = vunpack.c.l.b16 %v753
    %v786 = vunpack.c.l.b16 %v754
    %v787 = vunpack.c.l.b16 %v755
    %v788 = vunpack.c.l.b16 %v756
    %v789 = vunpack.c.l.b16 %v757
    %v790 = vunpack.c.l.b16 %v758
    %v791 = vunpack.c.l.b16 %v759
    %v792 = vunpack.c.l.b16 %v760
    %v793 = vunpack.c.l.b16 %v761
    %v794 = vunpack.c.l.b16 %v762
    %v795 = vpack.c.b16 %v780, %v779
    %v796 = vpack.c.b16 %v782, %v781
    %v797 = vpack.c.b16 %v784, %v783
    %v798 = vpack.c.b16 %v786, %v785
    %v799 = vpack.c.b16 %v788, %v787
    %v800 = vpack.c.b16 %v790, %v789
    %v801 = vpack.c.b16 %v792, %v791
    %v802 = vpack.c.b16 %v794, %v793
    %vm811 = vcmask 523264
    %812 = vst.msk [vmem:[#allocation3] sm:$0xff] %vm811, %v795
    %813 = vst.msk [vmem:[#allocation3 + $0x28] sm:$0xff] %vm811, %v796
    %814 = vst.msk [vmem:[#allocation3 + $0x50] sm:$0xff] %vm811, %v797
    %815 = vst.msk [vmem:[#allocation3 + $0x78] sm:$0xff] %vm811, %v798
    %816 = vst.msk [vmem:[#allocation3 + $0xa0] sm:$0xff] %vm811, %v799
    %817 = vst.msk [vmem:[#allocation3 + $0xc8] sm:$0xff] %vm811, %v800
    %818 = vst.msk [vmem:[#allocation3 + $0xf0] sm:$0xff] %vm811, %v801
    %819 = vst.msk [vmem:[#allocation3 + $0x118] sm:$0xff] %vm811, %v802
    %v820 = vld [vmem:[#allocation2] sm:$0xf]
    %v821 = vld [vmem:[#allocation2 + $0x4] sm:$0x1]
    %v822 = vld [vmem:[#allocation2 + $0x8] sm:$0xf]
    %v823 = vld [vmem:[#allocation2 + $0xc] sm:$0x1]
    %v824 = vld [vmem:[#allocation2 + $0x10] sm:$0xf]
    %v825 = vld [vmem:[#allocation2 + $0x14] sm:$0x1]
    %v826 = vld [vmem:[#allocation2 + $0x18] sm:$0xf]
    %v827 = vld [vmem:[#allocation2 + $0x1c] sm:$0x1]
    %v828 = vld [vmem:[#allocation2 + $0x20] sm:$0xf]
    %v829 = vld [vmem:[#allocation2 + $0x24] sm:$0x1]
    %v830 = vld [vmem:[#allocation2 + $0x28] sm:$0xf]
    %v831 = vld [vmem:[#allocation2 + $0x2c] sm:$0x1]
    %v832 = vld [vmem:[#allocation2 + $0x30] sm:$0xf]
    %v833 = vld [vmem:[#allocation2 + $0x34] sm:$0x1]
    %v834 = vld [vmem:[#allocation2 + $0x38] sm:$0xf]
    %v835 = vld [vmem:[#allocation2 + $0x3c] sm:$0x1]
    %v836 = vld [vmem:[#allocation2 + $0x50] sm:$0xf]
    %v837 = vld [vmem:[#allocation2 + $0x54] sm:$0x1]
    %v838 = vld [vmem:[#allocation2 + $0x58] sm:$0xf]
    %v839 = vld [vmem:[#allocation2 + $0x5c] sm:$0x1]
    %v840 = vld [vmem:[#allocation2 + $0x60] sm:$0xf]
    %v841 = vld [vmem:[#allocation2 + $0x64] sm:$0x1]
    %v842 = vld [vmem:[#allocation2 + $0x68] sm:$0xf]
    %v843 = vld [vmem:[#allocation2 + $0x6c] sm:$0x1]
    %v844 = vld [vmem:[#allocation2 + $0x70] sm:$0xf]
    %v845 = vld [vmem:[#allocation2 + $0x74] sm:$0x1]
    %v846 = vld [vmem:[#allocation2 + $0x78] sm:$0xf]
    %v847 = vld [vmem:[#allocation2 + $0x7c] sm:$0x1]
    %v848 = vld [vmem:[#allocation2 + $0x80] sm:$0xf]
    %v849 = vld [vmem:[#allocation2 + $0x84] sm:$0x1]
    %v850 = vld [vmem:[#allocation2 + $0x88] sm:$0xf]
    %v851 = vld [vmem:[#allocation2 + $0x8c] sm:$0x1]
    %vm852 = vsmask.f32 3328
    %vm853 = vsmask.f32 7440
    %vm854 = vmor %vm852, %vm853
    %v856 = vshrl.u32 %v820, 16
    %v858 = vrot.slane %v856, 4
    %v859 = vshll.u32 %v820, 16
    %v861 = vrot.slane %v859, 5
    %v862 = vor.u32 %v858, %v861
    %v863 = vrot.slane %v862, 4
    %v865 = vshll.u32 %v821, 16
    %v867 = vrot.slane %v865, 5
    %v868 = vsel %vm854, %v863, %v867
    %v870 = vshrl.u32 %v822, 16
    %v872 = vrot.slane %v870, 4
    %v873 = vshll.u32 %v822, 16
    %v875 = vrot.slane %v873, 5
    %v876 = vor.u32 %v872, %v875
    %v877 = vrot.slane %v876, 4
    %v879 = vshll.u32 %v823, 16
    %v881 = vrot.slane %v879, 5
    %v882 = vsel %vm854, %v877, %v881
    %v884 = vshrl.u32 %v824, 16
    %v886 = vrot.slane %v884, 4
    %v887 = vshll.u32 %v824, 16
    %v889 = vrot.slane %v887, 5
    %v890 = vor.u32 %v886, %v889
    %v891 = vrot.slane %v890, 4
    %v893 = vshll.u32 %v825, 16
    %v895 = vrot.slane %v893, 5
    %v896 = vsel %vm854, %v891, %v895
    %v898 = vshrl.u32 %v826, 16
    %v900 = vrot.slane %v898, 4
    %v901 = vshll.u32 %v826, 16
    %v903 = vrot.slane %v901, 5
    %v904 = vor.u32 %v900, %v903
    %v905 = vrot.slane %v904, 4
    %v907 = vshll.u32 %v827, 16
    %v909 = vrot.slane %v907, 5
    %v910 = vsel %vm854, %v905, %v909
    %v912 = vshrl.u32 %v828, 16
    %v914 = vrot.slane %v912, 4
    %v915 = vshll.u32 %v828, 16
    %v917 = vrot.slane %v915, 5
    %v918 = vor.u32 %v914, %v917
    %v919 = vrot.slane %v918, 4
    %v921 = vshll.u32 %v829, 16
    %v923 = vrot.slane %v921, 5
    %v924 = vsel %vm854, %v919, %v923
    %v926 = vshrl.u32 %v830, 16
    %v928 = vrot.slane %v926, 4
    %v929 = vshll.u32 %v830, 16
    %v931 = vrot.slane %v929, 5
    %v932 = vor.u32 %v928, %v931
    %v933 = vrot.slane %v932, 4
    %v935 = vshll.u32 %v831, 16
    %v937 = vrot.slane %v935, 5
    %v938 = vsel %vm854, %v933, %v937
    %v940 = vshrl.u32 %v832, 16
    %v942 = vrot.slane %v940, 4
    %v943 = vshll.u32 %v832, 16
    %v945 = vrot.slane %v943, 5
    %v946 = vor.u32 %v942, %v945
    %v947 = vrot.slane %v946, 4
    %v949 = vshll.u32 %v833, 16
    %v951 = vrot.slane %v949, 5
    %v952 = vsel %vm854, %v947, %v951
    %v954 = vshrl.u32 %v834, 16
    %v956 = vrot.slane %v954, 4
    %v957 = vshll.u32 %v834, 16
    %v959 = vrot.slane %v957, 5
    %v960 = vor.u32 %v956, %v959
    %v961 = vrot.slane %v960, 4
    %v963 = vshll.u32 %v835, 16
    %v965 = vrot.slane %v963, 5
    %v966 = vsel %vm854, %v961, %v965
    %v968 = vshrl.u32 %v836, 16
    %v970 = vrot.slane %v968, 4
    %v971 = vshll.u32 %v836, 16
    %v973 = vrot.slane %v971, 5
    %v974 = vor.u32 %v970, %v973
    %v975 = vrot.slane %v974, 4
    %v977 = vshll.u32 %v837, 16
    %v979 = vrot.slane %v977, 5
    %v980 = vsel %vm854, %v975, %v979
    %v982 = vshrl.u32 %v838, 16
    %v984 = vrot.slane %v982, 4
    %v985 = vshll.u32 %v838, 16
    %v987 = vrot.slane %v985, 5
    %v988 = vor.u32 %v984, %v987
    %v989 = vrot.slane %v988, 4
    %v991 = vshll.u32 %v839, 16
    %v993 = vrot.slane %v991, 5
    %v994 = vsel %vm854, %v989, %v993
    %v996 = vshrl.u32 %v840, 16
    %v998 = vrot.slane %v996, 4
    %v999 = vshll.u32 %v840, 16
    %v1001 = vrot.slane %v999, 5
    %v1002 = vor.u32 %v998, %v1001
    %v1003 = vrot.slane %v1002, 4
    %v1005 = vshll.u32 %v841, 16
    %v1007 = vrot.slane %v1005, 5
    %v1008 = vsel %vm854, %v1003, %v1007
    %v1010 = vshrl.u32 %v842, 16
    %v1012 = vrot.slane %v1010, 4
    %v1013 = vshll.u32 %v842, 16
    %v1015 = vrot.slane %v1013, 5
    %v1016 = vor.u32 %v1012, %v1015
    %v1017 = vrot.slane %v1016, 4
    %v1019 = vshll.u32 %v843, 16
    %v1021 = vrot.slane %v1019, 5
    %v1022 = vsel %vm854, %v1017, %v1021
    %v1024 = vshrl.u32 %v844, 16
    %v1026 = vrot.slane %v1024, 4
    %v1027 = vshll.u32 %v844, 16
    %v1029 = vrot.slane %v1027, 5
    %v1030 = vor.u32 %v1026, %v1029
    %v1031 = vrot.slane %v1030, 4
    %v1033 = vshll.u32 %v845, 16
    %v1035 = vrot.slane %v1033, 5
    %v1036 = vsel %vm854, %v1031, %v1035
    %v1038 = vshrl.u32 %v846, 16
    %v1040 = vrot.slane %v1038, 4
    %v1041 = vshll.u32 %v846, 16
    %v1043 = vrot.slane %v1041, 5
    %v1044 = vor.u32 %v1040, %v1043
    %v1045 = vrot.slane %v1044, 4
    %v1047 = vshll.u32 %v847, 16
    %v1049 = vrot.slane %v1047, 5
    %v1050 = vsel %vm854, %v1045, %v1049
    %v1052 = vshrl.u32 %v848, 16
    %v1054 = vrot.slane %v1052, 4
    %v1055 = vshll.u32 %v848, 16
    %v1057 = vrot.slane %v1055, 5
    %v1058 = vor.u32 %v1054, %v1057
    %v1059 = vrot.slane %v1058, 4
    %v1061 = vshll.u32 %v849, 16
    %v1063 = vrot.slane %v1061, 5
    %v1064 = vsel %vm854, %v1059, %v1063
    %v1066 = vshrl.u32 %v850, 16
    %v1068 = vrot.slane %v1066, 4
    %v1069 = vshll.u32 %v850, 16
    %v1071 = vrot.slane %v1069, 5
    %v1072 = vor.u32 %v1068, %v1071
    %v1073 = vrot.slane %v1072, 4
    %v1075 = vshll.u32 %v851, 16
    %v1077 = vrot.slane %v1075, 5
    %v1078 = vsel %vm854, %v1073, %v1077
    %v1079 = vunpack.c.l.b16 %v868
    %v1080 = vunpack.c.l.b16 %v882
    %v1081 = vunpack.c.l.b16 %v896
    %v1082 = vunpack.c.l.b16 %v910
    %v1083 = vunpack.c.l.b16 %v924
    %v1084 = vunpack.c.l.b16 %v938
    %v1085 = vunpack.c.l.b16 %v952
    %v1086 = vunpack.c.l.b16 %v966
    %v1087 = vunpack.c.l.b16 %v980
    %v1088 = vunpack.c.l.b16 %v994
    %v1089 = vunpack.c.l.b16 %v1008
    %v1090 = vunpack.c.l.b16 %v1022
    %v1091 = vunpack.c.l.b16 %v1036
    %v1092 = vunpack.c.l.b16 %v1050
    %v1093 = vunpack.c.l.b16 %v1064
    %v1094 = vunpack.c.l.b16 %v1078
    %v1095 = vpack.c.b16 %v1080, %v1079
    %v1096 = vpack.c.b16 %v1082, %v1081
    %v1097 = vpack.c.b16 %v1084, %v1083
    %v1098 = vpack.c.b16 %v1086, %v1085
    %v1099 = vpack.c.b16 %v1088, %v1087
    %v1100 = vpack.c.b16 %v1090, %v1089
    %v1101 = vpack.c.b16 %v1092, %v1091
    %v1102 = vpack.c.b16 %v1094, %v1093
    %1103 = vrot.lane.b32.xlu0 %v1095, 64
    %v1104 = vpop.permute.xlu0 %1103
    %1105 = vrot.lane.b32.xlu0 %v1096, 64
    %v1106 = vpop.permute.xlu0 %1105
    %1107 = vrot.lane.b32.xlu0 %v1097, 64
    %v1108 = vpop.permute.xlu0 %1107
    %1109 = vrot.lane.b32.xlu0 %v1098, 64
    %v1110 = vpop.permute.xlu0 %1109
    %1111 = vrot.lane.b32.xlu0 %v1099, 64
    %v1112 = vpop.permute.xlu0 %1111
    %1113 = vrot.lane.b32.xlu0 %v1100, 64
    %v1114 = vpop.permute.xlu0 %1113
    %1115 = vrot.lane.b32.xlu0 %v1101, 64
    %v1116 = vpop.permute.xlu0 %1115
    %1117 = vrot.lane.b32.xlu0 %v1102, 64
    %v1118 = vpop.permute.xlu0 %1117
    %vm1127 = vcmask 1048064
    %1128 = vst.msk [vmem:[#allocation3] sm:$0xff] %vm1127, %v1104
    %1129 = vst.msk [vmem:[#allocation3 + $0x28] sm:$0xff] %vm1127, %v1106
    %1130 = vst.msk [vmem:[#allocation3 + $0x50] sm:$0xff] %vm1127, %v1108
    %1131 = vst.msk [vmem:[#allocation3 + $0x78] sm:$0xff] %vm1127, %v1110
    %1132 = vst.msk [vmem:[#allocation3 + $0xa0] sm:$0xff] %vm1127, %v1112
    %1133 = vst.msk [vmem:[#allocation3 + $0xc8] sm:$0xff] %vm1127, %v1114
    %1134 = vst.msk [vmem:[#allocation3 + $0xf0] sm:$0xff] %vm1127, %v1116
    %1135 = vst.msk [vmem:[#allocation3 + $0x118] sm:$0xff] %vm1127, %v1118
    %v1136 = vld [vmem:[#allocation2] sm:$0xe]
    %v1137 = vld [vmem:[#allocation2 + $0x4] sm:$0x1]
    %v1138 = vld [vmem:[#allocation2 + $0x8] sm:$0xe]
    %v1139 = vld [vmem:[#allocation2 + $0xc] sm:$0x1]
    %v1140 = vld [vmem:[#allocation2 + $0x10] sm:$0xe]
    %v1141 = vld [vmem:[#allocation2 + $0x14] sm:$0x1]
    %v1142 = vld [vmem:[#allocation2 + $0x18] sm:$0xe]
    %v1143 = vld [vmem:[#allocation2 + $0x1c] sm:$0x1]
    %v1144 = vld [vmem:[#allocation2 + $0x20] sm:$0xe]
    %v1145 = vld [vmem:[#allocation2 + $0x24] sm:$0x1]
    %v1146 = vld [vmem:[#allocation2 + $0x28] sm:$0xe]
    %v1147 = vld [vmem:[#allocation2 + $0x2c] sm:$0x1]
    %v1148 = vld [vmem:[#allocation2 + $0x30] sm:$0xe]
    %v1149 = vld [vmem:[#allocation2 + $0x34] sm:$0x1]
    %v1150 = vld [vmem:[#allocation2 + $0x38] sm:$0xe]
    %v1151 = vld [vmem:[#allocation2 + $0x3c] sm:$0x1]
    %v1152 = vld [vmem:[#allocation2 + $0x50] sm:$0xe]
    %v1153 = vld [vmem:[#allocation2 + $0x54] sm:$0x1]
    %v1154 = vld [vmem:[#allocation2 + $0x58] sm:$0xe]
    %v1155 = vld [vmem:[#allocation2 + $0x5c] sm:$0x1]
    %v1156 = vld [vmem:[#allocation2 + $0x60] sm:$0xe]
    %v1157 = vld [vmem:[#allocation2 + $0x64] sm:$0x1]
    %v1158 = vld [vmem:[#allocation2 + $0x68] sm:$0xe]
    %v1159 = vld [vmem:[#allocation2 + $0x6c] sm:$0x1]
    %v1160 = vld [vmem:[#allocation2 + $0x70] sm:$0xe]
    %v1161 = vld [vmem:[#allocation2 + $0x74] sm:$0x1]
    %v1162 = vld [vmem:[#allocation2 + $0x78] sm:$0xe]
    %v1163 = vld [vmem:[#allocation2 + $0x7c] sm:$0x1]
    %v1164 = vld [vmem:[#allocation2 + $0x80] sm:$0xe]
    %v1165 = vld [vmem:[#allocation2 + $0x84] sm:$0x1]
    %v1166 = vld [vmem:[#allocation2 + $0x88] sm:$0xe]
    %v1167 = vld [vmem:[#allocation2 + $0x8c] sm:$0x1]
    %vm1200 = vcmask 1042432
    %vm1201 = vcmask 1046532
    %vm1202 = vmor %vm1200, %vm1201
    %v1203 = vrot.slane %v1136, 5
    %v1204 = vrot.slane %v1203, 4
    %v1205 = vrot.slane %v1137, 5
    %v1206 = vsel %vm1202, %v1204, %v1205
    %v1207 = vrot.slane %v1138, 5
    %v1208 = vrot.slane %v1207, 4
    %v1209 = vrot.slane %v1139, 5
    %v1210 = vsel %vm1202, %v1208, %v1209
    %v1211 = vrot.slane %v1140, 5
    %v1212 = vrot.slane %v1211, 4
    %v1213 = vrot.slane %v1141, 5
    %v1214 = vsel %vm1202, %v1212, %v1213
    %v1215 = vrot.slane %v1142, 5
    %v1216 = vrot.slane %v1215, 4
    %v1217 = vrot.slane %v1143, 5
    %v1218 = vsel %vm1202, %v1216, %v1217
    %v1219 = vrot.slane %v1144, 5
    %v1220 = vrot.slane %v1219, 4
    %v1221 = vrot.slane %v1145, 5
    %v1222 = vsel %vm1202, %v1220, %v1221
    %v1223 = vrot.slane %v1146, 5
    %v1224 = vrot.slane %v1223, 4
    %v1225 = vrot.slane %v1147, 5
    %v1226 = vsel %vm1202, %v1224, %v1225
    %v1227 = vrot.slane %v1148, 5
    %v1228 = vrot.slane %v1227, 4
    %v1229 = vrot.slane %v1149, 5
    %v1230 = vsel %vm1202, %v1228, %v1229
    %v1231 = vrot.slane %v1150, 5
    %v1232 = vrot.slane %v1231, 4
    %v1233 = vrot.slane %v1151, 5
    %v1234 = vsel %vm1202, %v1232, %v1233
    %v1235 = vrot.slane %v1152, 5
    %v1236 = vrot.slane %v1235, 4
    %v1237 = vrot.slane %v1153, 5
    %v1238 = vsel %vm1202, %v1236, %v1237
    %v1239 = vrot.slane %v1154, 5
    %v1240 = vrot.slane %v1239, 4
    %v1241 = vrot.slane %v1155, 5
    %v1242 = vsel %vm1202, %v1240, %v1241
    %v1243 = vrot.slane %v1156, 5
    %v1244 = vrot.slane %v1243, 4
    %v1245 = vrot.slane %v1157, 5
    %v1246 = vsel %vm1202, %v1244, %v1245
    %v1247 = vrot.slane %v1158, 5
    %v1248 = vrot.slane %v1247, 4
    %v1249 = vrot.slane %v1159, 5
    %v1250 = vsel %vm1202, %v1248, %v1249
    %v1251 = vrot.slane %v1160, 5
    %v1252 = vrot.slane %v1251, 4
    %v1253 = vrot.slane %v1161, 5
    %v1254 = vsel %vm1202, %v1252, %v1253
    %v1255 = vrot.slane %v1162, 5
    %v1256 = vrot.slane %v1255, 4
    %v1257 = vrot.slane %v1163, 5
    %v1258 = vsel %vm1202, %v1256, %v1257
    %v1259 = vrot.slane %v1164, 5
    %v1260 = vrot.slane %v1259, 4
    %v1261 = vrot.slane %v1165, 5
    %v1262 = vsel %vm1202, %v1260, %v1261
    %v1263 = vrot.slane %v1166, 5
    %v1264 = vrot.slane %v1263, 4
    %v1265 = vrot.slane %v1167, 5
    %v1266 = vsel %vm1202, %v1264, %v1265
    %v1267 = vunpack.c.l.b16 %v1206
    %v1268 = vunpack.c.l.b16 %v1210
    %v1269 = vunpack.c.l.b16 %v1214
    %v1270 = vunpack.c.l.b16 %v1218
    %v1271 = vunpack.c.l.b16 %v1222
    %v1272 = vunpack.c.l.b16 %v1226
    %v1273 = vunpack.c.l.b16 %v1230
    %v1274 = vunpack.c.l.b16 %v1234
    %v1275 = vunpack.c.l.b16 %v1238
    %v1276 = vunpack.c.l.b16 %v1242
    %v1277 = vunpack.c.l.b16 %v1246
    %v1278 = vunpack.c.l.b16 %v1250
    %v1279 = vunpack.c.l.b16 %v1254
    %v1280 = vunpack.c.l.b16 %v1258
    %v1281 = vunpack.c.l.b16 %v1262
    %v1282 = vunpack.c.l.b16 %v1266
    %v1283 = vpack.c.b16 %v1268, %v1267
    %v1284 = vpack.c.b16 %v1270, %v1269
    %v1285 = vpack.c.b16 %v1272, %v1271
    %v1286 = vpack.c.b16 %v1274, %v1273
    %v1287 = vpack.c.b16 %v1276, %v1275
    %v1288 = vpack.c.b16 %v1278, %v1277
    %v1289 = vpack.c.b16 %v1280, %v1279
    %v1290 = vpack.c.b16 %v1282, %v1281
    %1299 = vst.msk [vmem:[#allocation3 + $0x8] sm:$0xff] %vm811, %v1283
    %1300 = vst.msk [vmem:[#allocation3 + $0x30] sm:$0xff] %vm811, %v1284
    %1301 = vst.msk [vmem:[#allocation3 + $0x58] sm:$0xff] %vm811, %v1285
    %1302 = vst.msk [vmem:[#allocation3 + $0x80] sm:$0xff] %vm811, %v1286
    %1303 = vst.msk [vmem:[#allocation3 + $0xa8] sm:$0xff] %vm811, %v1287
    %1304 = vst.msk [vmem:[#allocation3 + $0xd0] sm:$0xff] %vm811, %v1288
    %1305 = vst.msk [vmem:[#allocation3 + $0xf8] sm:$0xff] %vm811, %v1289
    %1306 = vst.msk [vmem:[#allocation3 + $0x120] sm:$0xff] %vm811, %v1290
    %v1307 = vld [vmem:[%s648] sm:$0xf]
    %v1308 = vld [vmem:[%s648 + $0x8] sm:$0xf]
    %v1309 = vld [vmem:[%s648 + $0x10] sm:$0xf]
    %v1310 = vld [vmem:[%s648 + $0x18] sm:$0xf]
    %v1311 = vld [vmem:[%s648 + $0x20] sm:$0xf]
    %v1312 = vld [vmem:[%s648 + $0x28] sm:$0xf]
    %v1313 = vld [vmem:[%s648 + $0x30] sm:$0xf]
    %v1314 = vld [vmem:[%s648 + $0x38] sm:$0xf]
    %v1315 = vld [vmem:[%s648 + $0x50] sm:$0xf]
    %v1316 = vld [vmem:[%s648 + $0x58] sm:$0xf]
    %v1317 = vld [vmem:[%s648 + $0x60] sm:$0xf]
    %v1318 = vld [vmem:[%s648 + $0x68] sm:$0xf]
    %v1319 = vld [vmem:[%s648 + $0x70] sm:$0xf]
    %v1320 = vld [vmem:[%s648 + $0x78] sm:$0xf]
    %v1321 = vld [vmem:[%s648 + $0x80] sm:$0xf]
    %v1322 = vld [vmem:[%s648 + $0x88] sm:$0xf]
    %v1339 = vunpack.c.l.b16 %v1307
    %v1340 = vunpack.c.l.b16 %v1308
    %v1341 = vunpack.c.l.b16 %v1309
    %v1342 = vunpack.c.l.b16 %v1310
    %v1343 = vunpack.c.l.b16 %v1311
    %v1344 = vunpack.c.l.b16 %v1312
    %v1345 = vunpack.c.l.b16 %v1313
    %v1346 = vunpack.c.l.b16 %v1314
    %v1347 = vunpack.c.l.b16 %v1315
    %v1348 = vunpack.c.l.b16 %v1316
    %v1349 = vunpack.c.l.b16 %v1317
    %v1350 = vunpack.c.l.b16 %v1318
    %v1351 = vunpack.c.l.b16 %v1319
    %v1352 = vunpack.c.l.b16 %v1320
    %v1353 = vunpack.c.l.b16 %v1321
    %v1354 = vunpack.c.l.b16 %v1322
    %v1355 = vpack.c.b16 %v1340, %v1339
    %v1356 = vpack.c.b16 %v1342, %v1341
    %v1357 = vpack.c.b16 %v1344, %v1343
    %v1358 = vpack.c.b16 %v1346, %v1345
    %v1359 = vpack.c.b16 %v1348, %v1347
    %v1360 = vpack.c.b16 %v1350, %v1349
    %v1361 = vpack.c.b16 %v1352, %v1351
    %v1362 = vpack.c.b16 %v1354, %v1353
    %1363 = vrot.lane.b32.xlu0 %v1355, 64
    %v1364 = vpop.permute.xlu0 %1363
    %1365 = vrot.lane.b32.xlu0 %v1356, 64
    %v1366 = vpop.permute.xlu0 %1365
    %1367 = vrot.lane.b32.xlu0 %v1357, 64
    %v1368 = vpop.permute.xlu0 %1367
    %1369 = vrot.lane.b32.xlu0 %v1358, 64
    %v1370 = vpop.permute.xlu0 %1369
    %1371 = vrot.lane.b32.xlu0 %v1359, 64
    %v1372 = vpop.permute.xlu0 %1371
    %1373 = vrot.lane.b32.xlu0 %v1360, 64
    %v1374 = vpop.permute.xlu0 %1373
    %1375 = vrot.lane.b32.xlu0 %v1361, 64
    %v1376 = vpop.permute.xlu0 %1375
    %1377 = vrot.lane.b32.xlu0 %v1362, 64
    %v1378 = vpop.permute.xlu0 %1377
    %1387 = vst.msk [vmem:[#allocation3 + $0x8] sm:$0xff] %vm1127, %v1364
    %1388 = vst.msk [vmem:[#allocation3 + $0x30] sm:$0xff] %vm1127, %v1366
    %1389 = vst.msk [vmem:[#allocation3 + $0x58] sm:$0xff] %vm1127, %v1368
    %1390 = vst.msk [vmem:[#allocation3 + $0x80] sm:$0xff] %vm1127, %v1370
    %1391 = vst.msk [vmem:[#allocation3 + $0xa8] sm:$0xff] %vm1127, %v1372
    %1392 = vst.msk [vmem:[#allocation3 + $0xd0] sm:$0xff] %vm1127, %v1374
    %1393 = vst.msk [vmem:[#allocation3 + $0xf8] sm:$0xff] %vm1127, %v1376
    %1394 = vst.msk [vmem:[#allocation3 + $0x120] sm:$0xff] %vm1127, %v1378
    %v1395 = vld [vmem:[%s648] sm:$0xf]
    %v1396 = vld [vmem:[%s648 + $0x4] sm:$0x1]
    %v1397 = vld [vmem:[%s648 + $0x8] sm:$0xf]
    %v1398 = vld [vmem:[%s648 + $0xc] sm:$0x1]
    %v1399 = vld [vmem:[%s648 + $0x10] sm:$0xf]
    %v1400 = vld [vmem:[%s648 + $0x14] sm:$0x1]
    %v1401 = vld [vmem:[%s648 + $0x18] sm:$0xf]
    %v1402 = vld [vmem:[%s648 + $0x1c] sm:$0x1]
    %v1403 = vld [vmem:[%s648 + $0x20] sm:$0xf]
    %v1404 = vld [vmem:[%s648 + $0x24] sm:$0x1]
    %v1405 = vld [vmem:[%s648 + $0x28] sm:$0xf]
    %v1406 = vld [vmem:[%s648 + $0x2c] sm:$0x1]
    %v1407 = vld [vmem:[%s648 + $0x30] sm:$0xf]
    %v1408 = vld [vmem:[%s648 + $0x34] sm:$0x1]
    %v1409 = vld [vmem:[%s648 + $0x38] sm:$0xf]
    %v1410 = vld [vmem:[%s648 + $0x3c] sm:$0x1]
    %v1411 = vld [vmem:[%s648 + $0x50] sm:$0xf]
    %v1412 = vld [vmem:[%s648 + $0x54] sm:$0x1]
    %v1413 = vld [vmem:[%s648 + $0x58] sm:$0xf]
    %v1414 = vld [vmem:[%s648 + $0x5c] sm:$0x1]
    %v1415 = vld [vmem:[%s648 + $0x60] sm:$0xf]
    %v1416 = vld [vmem:[%s648 + $0x64] sm:$0x1]
    %v1417 = vld [vmem:[%s648 + $0x68] sm:$0xf]
    %v1418 = vld [vmem:[%s648 + $0x6c] sm:$0x1]
    %v1419 = vld [vmem:[%s648 + $0x70] sm:$0xf]
    %v1420 = vld [vmem:[%s648 + $0x74] sm:$0x1]
    %v1421 = vld [vmem:[%s648 + $0x78] sm:$0xf]
    %v1422 = vld [vmem:[%s648 + $0x7c] sm:$0x1]
    %v1423 = vld [vmem:[%s648 + $0x80] sm:$0xf]
    %v1424 = vld [vmem:[%s648 + $0x84] sm:$0x1]
    %v1425 = vld [vmem:[%s648 + $0x88] sm:$0xf]
    %v1426 = vld [vmem:[%s648 + $0x8c] sm:$0x1]
    %v1428 = vshrl.u32 %v1395, 16
    %v1430 = vrot.slane %v1428, 4
    %v1431 = vshll.u32 %v1395, 16
    %v1433 = vrot.slane %v1431, 5
    %v1434 = vor.u32 %v1430, %v1433
    %v1435 = vrot.slane %v1434, 4
    %v1437 = vshll.u32 %v1396, 16
    %v1439 = vrot.slane %v1437, 5
    %v1440 = vsel %vm854, %v1435, %v1439
    %v1442 = vshrl.u32 %v1397, 16
    %v1444 = vrot.slane %v1442, 4
    %v1445 = vshll.u32 %v1397, 16
    %v1447 = vrot.slane %v1445, 5
    %v1448 = vor.u32 %v1444, %v1447
    %v1449 = vrot.slane %v1448, 4
    %v1451 = vshll.u32 %v1398, 16
    %v1453 = vrot.slane %v1451, 5
    %v1454 = vsel %vm854, %v1449, %v1453
    %v1456 = vshrl.u32 %v1399, 16
    %v1458 = vrot.slane %v1456, 4
    %v1459 = vshll.u32 %v1399, 16
    %v1461 = vrot.slane %v1459, 5
    %v1462 = vor.u32 %v1458, %v1461
    %v1463 = vrot.slane %v1462, 4
    %v1465 = vshll.u32 %v1400, 16
    %v1467 = vrot.slane %v1465, 5
    %v1468 = vsel %vm854, %v1463, %v1467
    %v1470 = vshrl.u32 %v1401, 16
    %v1472 = vrot.slane %v1470, 4
    %v1473 = vshll.u32 %v1401, 16
    %v1475 = vrot.slane %v1473, 5
    %v1476 = vor.u32 %v1472, %v1475
    %v1477 = vrot.slane %v1476, 4
    %v1479 = vshll.u32 %v1402, 16
    %v1481 = vrot.slane %v1479, 5
    %v1482 = vsel %vm854, %v1477, %v1481
    %v1484 = vshrl.u32 %v1403, 16
    %v1486 = vrot.slane %v1484, 4
    %v1487 = vshll.u32 %v1403, 16
    %v1489 = vrot.slane %v1487, 5
    %v1490 = vor.u32 %v1486, %v1489
    %v1491 = vrot.slane %v1490, 4
    %v1493 = vshll.u32 %v1404, 16
    %v1495 = vrot.slane %v1493, 5
    %v1496 = vsel %vm854, %v1491, %v1495
    %v1498 = vshrl.u32 %v1405, 16
    %v1500 = vrot.slane %v1498, 4
    %v1501 = vshll.u32 %v1405, 16
    %v1503 = vrot.slane %v1501, 5
    %v1504 = vor.u32 %v1500, %v1503
    %v1505 = vrot.slane %v1504, 4
    %v1507 = vshll.u32 %v1406, 16
    %v1509 = vrot.slane %v1507, 5
    %v1510 = vsel %vm854, %v1505, %v1509
    %v1512 = vshrl.u32 %v1407, 16
    %v1514 = vrot.slane %v1512, 4
    %v1515 = vshll.u32 %v1407, 16
    %v1517 = vrot.slane %v1515, 5
    %v1518 = vor.u32 %v1514, %v1517
    %v1519 = vrot.slane %v1518, 4
    %v1521 = vshll.u32 %v1408, 16
    %v1523 = vrot.slane %v1521, 5
    %v1524 = vsel %vm854, %v1519, %v1523
    %v1526 = vshrl.u32 %v1409, 16
    %v1528 = vrot.slane %v1526, 4
    %v1529 = vshll.u32 %v1409, 16
    %v1531 = vrot.slane %v1529, 5
    %v1532 = vor.u32 %v1528, %v1531
    %v1533 = vrot.slane %v1532, 4
    %v1535 = vshll.u32 %v1410, 16
    %v1537 = vrot.slane %v1535, 5
    %v1538 = vsel %vm854, %v1533, %v1537
    %v1540 = vshrl.u32 %v1411, 16
    %v1542 = vrot.slane %v1540, 4
    %v1543 = vshll.u32 %v1411, 16
    %v1545 = vrot.slane %v1543, 5
    %v1546 = vor.u32 %v1542, %v1545
    %v1547 = vrot.slane %v1546, 4
    %v1549 = vshll.u32 %v1412, 16
    %v1551 = vrot.slane %v1549, 5
    %v1552 = vsel %vm854, %v1547, %v1551
    %v1554 = vshrl.u32 %v1413, 16
    %v1556 = vrot.slane %v1554, 4
    %v1557 = vshll.u32 %v1413, 16
    %v1559 = vrot.slane %v1557, 5
    %v1560 = vor.u32 %v1556, %v1559
    %v1561 = vrot.slane %v1560, 4
    %v1563 = vshll.u32 %v1414, 16
    %v1565 = vrot.slane %v1563, 5
    %v1566 = vsel %vm854, %v1561, %v1565
    %v1568 = vshrl.u32 %v1415, 16
    %v1570 = vrot.slane %v1568, 4
    %v1571 = vshll.u32 %v1415, 16
    %v1573 = vrot.slane %v1571, 5
    %v1574 = vor.u32 %v1570, %v1573
    %v1575 = vrot.slane %v1574, 4
    %v1577 = vshll.u32 %v1416, 16
    %v1579 = vrot.slane %v1577, 5
    %v1580 = vsel %vm854, %v1575, %v1579
    %v1582 = vshrl.u32 %v1417, 16
    %v1584 = vrot.slane %v1582, 4
    %v1585 = vshll.u32 %v1417, 16
    %v1587 = vrot.slane %v1585, 5
    %v1588 = vor.u32 %v1584, %v1587
    %v1589 = vrot.slane %v1588, 4
    %v1591 = vshll.u32 %v1418, 16
    %v1593 = vrot.slane %v1591, 5
    %v1594 = vsel %vm854, %v1589, %v1593
    %v1596 = vshrl.u32 %v1419, 16
    %v1598 = vrot.slane %v1596, 4
    %v1599 = vshll.u32 %v1419, 16
    %v1601 = vrot.slane %v1599, 5
    %v1602 = vor.u32 %v1598, %v1601
    %v1603 = vrot.slane %v1602, 4
    %v1605 = vshll.u32 %v1420, 16
    %v1607 = vrot.slane %v1605, 5
    %v1608 = vsel %vm854, %v1603, %v1607
    %v1610 = vshrl.u32 %v1421, 16
    %v1612 = vrot.slane %v1610, 4
    %v1613 = vshll.u32 %v1421, 16
    %v1615 = vrot.slane %v1613, 5
    %v1616 = vor.u32 %v1612, %v1615
    %v1617 = vrot.slane %v1616, 4
    %v1619 = vshll.u32 %v1422, 16
    %v1621 = vrot.slane %v1619, 5
    %v1622 = vsel %vm854, %v1617, %v1621
    %v1624 = vshrl.u32 %v1423, 16
    %v1626 = vrot.slane %v1624, 4
    %v1627 = vshll.u32 %v1423, 16
    %v1629 = vrot.slane %v1627, 5
    %v1630 = vor.u32 %v1626, %v1629
    %v1631 = vrot.slane %v1630, 4
    %v1633 = vshll.u32 %v1424, 16
    %v1635 = vrot.slane %v1633, 5
    %v1636 = vsel %vm854, %v1631, %v1635
    %v1638 = vshrl.u32 %v1425, 16
    %v1640 = vrot.slane %v1638, 4
    %v1641 = vshll.u32 %v1425, 16
    %v1643 = vrot.slane %v1641, 5
    %v1644 = vor.u32 %v1640, %v1643
    %v1645 = vrot.slane %v1644, 4
    %v1647 = vshll.u32 %v1426, 16
    %v1649 = vrot.slane %v1647, 5
    %v1650 = vsel %vm854, %v1645, %v1649
    %v1651 = vunpack.c.l.b16 %v1440
    %v1652 = vunpack.c.l.b16 %v1454
    %v1653 = vunpack.c.l.b16 %v1468
    %v1654 = vunpack.c.l.b16 %v1482
    %v1655 = vunpack.c.l.b16 %v1496
    %v1656 = vunpack.c.l.b16 %v1510
    %v1657 = vunpack.c.l.b16 %v1524
    %v1658 = vunpack.c.l.b16 %v1538
    %v1659 = vunpack.c.l.b16 %v1552
    %v1660 = vunpack.c.l.b16 %v1566
    %v1661 = vunpack.c.l.b16 %v1580
    %v1662 = vunpack.c.l.b16 %v1594
    %v1663 = vunpack.c.l.b16 %v1608
    %v1664 = vunpack.c.l.b16 %v1622
    %v1665 = vunpack.c.l.b16 %v1636
    %v1666 = vunpack.c.l.b16 %v1650
    %v1667 = vpack.c.b16 %v1652, %v1651
    %v1668 = vpack.c.b16 %v1654, %v1653
    %v1669 = vpack.c.b16 %v1656, %v1655
    %v1670 = vpack.c.b16 %v1658, %v1657
    %v1671 = vpack.c.b16 %v1660, %v1659
    %v1672 = vpack.c.b16 %v1662, %v1661
    %v1673 = vpack.c.b16 %v1664, %v1663
    %v1674 = vpack.c.b16 %v1666, %v1665
    %1683 = vst.msk [vmem:[#allocation3 + $0x10] sm:$0xff] %vm811, %v1667
    %1684 = vst.msk [vmem:[#allocation3 + $0x38] sm:$0xff] %vm811, %v1668
    %1685 = vst.msk [vmem:[#allocation3 + $0x60] sm:$0xff] %vm811, %v1669
    %1686 = vst.msk [vmem:[#allocation3 + $0x88] sm:$0xff] %vm811, %v1670
    %1687 = vst.msk [vmem:[#allocation3 + $0xb0] sm:$0xff] %vm811, %v1671
    %1688 = vst.msk [vmem:[#allocation3 + $0xd8] sm:$0xff] %vm811, %v1672
    %1689 = vst.msk [vmem:[#allocation3 + $0x100] sm:$0xff] %vm811, %v1673
    %1690 = vst.msk [vmem:[#allocation3 + $0x128] sm:$0xff] %vm811, %v1674
    %v1691 = vld [vmem:[%s648] sm:$0xe]
    %v1692 = vld [vmem:[%s648 + $0x4] sm:$0x1]
    %v1693 = vld [vmem:[%s648 + $0x8] sm:$0xe]
    %v1694 = vld [vmem:[%s648 + $0xc] sm:$0x1]
    %v1695 = vld [vmem:[%s648 + $0x10] sm:$0xe]
    %v1696 = vld [vmem:[%s648 + $0x14] sm:$0x1]
    %v1697 = vld [vmem:[%s648 + $0x18] sm:$0xe]
    %v1698 = vld [vmem:[%s648 + $0x1c] sm:$0x1]
    %v1699 = vld [vmem:[%s648 + $0x20] sm:$0xe]
    %v1700 = vld [vmem:[%s648 + $0x24] sm:$0x1]
    %v1701 = vld [vmem:[%s648 + $0x28] sm:$0xe]
    %v1702 = vld [vmem:[%s648 + $0x2c] sm:$0x1]
    %v1703 = vld [vmem:[%s648 + $0x30] sm:$0xe]
    %v1704 = vld [vmem:[%s648 + $0x34] sm:$0x1]
    %v1705 = vld [vmem:[%s648 + $0x38] sm:$0xe]
    %v1706 = vld [vmem:[%s648 + $0x3c] sm:$0x1]
    %v1707 = vld [vmem:[%s648 + $0x50] sm:$0xe]
    %v1708 = vld [vmem:[%s648 + $0x54] sm:$0x1]
    %v1709 = vld [vmem:[%s648 + $0x58] sm:$0xe]
    %v1710 = vld [vmem:[%s648 + $0x5c] sm:$0x1]
    %v1711 = vld [vmem:[%s648 + $0x60] sm:$0xe]
    %v1712 = vld [vmem:[%s648 + $0x64] sm:$0x1]
    %v1713 = vld [vmem:[%s648 + $0x68] sm:$0xe]
    %v1714 = vld [vmem:[%s648 + $0x6c] sm:$0x1]
    %v1715 = vld [vmem:[%s648 + $0x70] sm:$0xe]
    %v1716 = vld [vmem:[%s648 + $0x74] sm:$0x1]
    %v1717 = vld [vmem:[%s648 + $0x78] sm:$0xe]
    %v1718 = vld [vmem:[%s648 + $0x7c] sm:$0x1]
    %v1719 = vld [vmem:[%s648 + $0x80] sm:$0xe]
    %v1720 = vld [vmem:[%s648 + $0x84] sm:$0x1]
    %v1721 = vld [vmem:[%s648 + $0x88] sm:$0xe]
    %v1722 = vld [vmem:[%s648 + $0x8c] sm:$0x1]
    %v1755 = vrot.slane %v1691, 5
    %v1756 = vrot.slane %v1755, 4
    %v1757 = vrot.slane %v1692, 5
    %v1758 = vsel %vm1202, %v1756, %v1757
    %v1759 = vrot.slane %v1693, 5
    %v1760 = vrot.slane %v1759, 4
    %v1761 = vrot.slane %v1694, 5
    %v1762 = vsel %vm1202, %v1760, %v1761
    %v1763 = vrot.slane %v1695, 5
    %v1764 = vrot.slane %v1763, 4
    %v1765 = vrot.slane %v1696, 5
    %v1766 = vsel %vm1202, %v1764, %v1765
    %v1767 = vrot.slane %v1697, 5
    %v1768 = vrot.slane %v1767, 4
    %v1769 = vrot.slane %v1698, 5
    %v1770 = vsel %vm1202, %v1768, %v1769
    %v1771 = vrot.slane %v1699, 5
    %v1772 = vrot.slane %v1771, 4
    %v1773 = vrot.slane %v1700, 5
    %v1774 = vsel %vm1202, %v1772, %v1773
    %v1775 = vrot.slane %v1701, 5
    %v1776 = vrot.slane %v1775, 4
    %v1777 = vrot.slane %v1702, 5
    %v1778 = vsel %vm1202, %v1776, %v1777
    %v1779 = vrot.slane %v1703, 5
    %v1780 = vrot.slane %v1779, 4
    %v1781 = vrot.slane %v1704, 5
    %v1782 = vsel %vm1202, %v1780, %v1781
    %v1783 = vrot.slane %v1705, 5
    %v1784 = vrot.slane %v1783, 4
    %v1785 = vrot.slane %v1706, 5
    %v1786 = vsel %vm1202, %v1784, %v1785
    %v1787 = vrot.slane %v1707, 5
    %v1788 = vrot.slane %v1787, 4
    %v1789 = vrot.slane %v1708, 5
    %v1790 = vsel %vm1202, %v1788, %v1789
    %v1791 = vrot.slane %v1709, 5
    %v1792 = vrot.slane %v1791, 4
    %v1793 = vrot.slane %v1710, 5
    %v1794 = vsel %vm1202, %v1792, %v1793
    %v1795 = vrot.slane %v1711, 5
    %v1796 = vrot.slane %v1795, 4
    %v1797 = vrot.slane %v1712, 5
    %v1798 = vsel %vm1202, %v1796, %v1797
    %v1799 = vrot.slane %v1713, 5
    %v1800 = vrot.slane %v1799, 4
    %v1801 = vrot.slane %v1714, 5
    %v1802 = vsel %vm1202, %v1800, %v1801
    %v1803 = vrot.slane %v1715, 5
    %v1804 = vrot.slane %v1803, 4
    %v1805 = vrot.slane %v1716, 5
    %v1806 = vsel %vm1202, %v1804, %v1805
    %v1807 = vrot.slane %v1717, 5
    %v1808 = vrot.slane %v1807, 4
    %v1809 = vrot.slane %v1718, 5
    %v1810 = vsel %vm1202, %v1808, %v1809
    %v1811 = vrot.slane %v1719, 5
    %v1812 = vrot.slane %v1811, 4
    %v1813 = vrot.slane %v1720, 5
    %v1814 = vsel %vm1202, %v1812, %v1813
    %v1815 = vrot.slane %v1721, 5
    %v1816 = vrot.slane %v1815, 4
    %v1817 = vrot.slane %v1722, 5
    %v1818 = vsel %vm1202, %v1816, %v1817
    %v1819 = vunpack.c.l.b16 %v1758
    %v1820 = vunpack.c.l.b16 %v1762
    %v1821 = vunpack.c.l.b16 %v1766
    %v1822 = vunpack.c.l.b16 %v1770
    %v1823 = vunpack.c.l.b16 %v1774
    %v1824 = vunpack.c.l.b16 %v1778
    %v1825 = vunpack.c.l.b16 %v1782
    %v1826 = vunpack.c.l.b16 %v1786
    %v1827 = vunpack.c.l.b16 %v1790
    %v1828 = vunpack.c.l.b16 %v1794
    %v1829 = vunpack.c.l.b16 %v1798
    %v1830 = vunpack.c.l.b16 %v1802
    %v1831 = vunpack.c.l.b16 %v1806
    %v1832 = vunpack.c.l.b16 %v1810
    %v1833 = vunpack.c.l.b16 %v1814
    %v1834 = vunpack.c.l.b16 %v1818
    %v1835 = vpack.c.b16 %v1820, %v1819
    %v1836 = vpack.c.b16 %v1822, %v1821
    %v1837 = vpack.c.b16 %v1824, %v1823
    %v1838 = vpack.c.b16 %v1826, %v1825
    %v1839 = vpack.c.b16 %v1828, %v1827
    %v1840 = vpack.c.b16 %v1830, %v1829
    %v1841 = vpack.c.b16 %v1832, %v1831
    %v1842 = vpack.c.b16 %v1834, %v1833
    %1843 = vrot.lane.b32.xlu0 %v1835, 64
    %v1844 = vpop.permute.xlu0 %1843
    %1845 = vrot.lane.b32.xlu0 %v1836, 64
    %v1846 = vpop.permute.xlu0 %1845
    %1847 = vrot.lane.b32.xlu0 %v1837, 64
    %v1848 = vpop.permute.xlu0 %1847
    %1849 = vrot.lane.b32.xlu0 %v1838, 64
    %v1850 = vpop.permute.xlu0 %1849
    %1851 = vrot.lane.b32.xlu0 %v1839, 64
    %v1852 = vpop.permute.xlu0 %1851
    %1853 = vrot.lane.b32.xlu0 %v1840, 64
    %v1854 = vpop.permute.xlu0 %1853
    %1855 = vrot.lane.b32.xlu0 %v1841, 64
    %v1856 = vpop.permute.xlu0 %1855
    %1857 = vrot.lane.b32.xlu0 %v1842, 64
    %v1858 = vpop.permute.xlu0 %1857
    %1867 = vst.msk [vmem:[#allocation3 + $0x10] sm:$0xff] %vm1127, %v1844
    %1868 = vst.msk [vmem:[#allocation3 + $0x38] sm:$0xff] %vm1127, %v1846
    %1869 = vst.msk [vmem:[#allocation3 + $0x60] sm:$0xff] %vm1127, %v1848
    %1870 = vst.msk [vmem:[#allocation3 + $0x88] sm:$0xff] %vm1127, %v1850
    %1871 = vst.msk [vmem:[#allocation3 + $0xb0] sm:$0xff] %vm1127, %v1852
    %1872 = vst.msk [vmem:[#allocation3 + $0xd8] sm:$0xff] %vm1127, %v1854
    %1873 = vst.msk [vmem:[#allocation3 + $0x100] sm:$0xff] %vm1127, %v1856
    %1874 = vst.msk [vmem:[#allocation3 + $0x128] sm:$0xff] %vm1127, %v1858
    %s1875 = scalar_lea.vmem [#allocation2], 16
    %v1876 = vld [vmem:[%s1875] sm:$0xf]
    %v1877 = vld [vmem:[%s1875 + $0x8] sm:$0xf]
    %v1878 = vld [vmem:[%s1875 + $0x10] sm:$0xf]
    %v1879 = vld [vmem:[%s1875 + $0x18] sm:$0xf]
    %v1880 = vld [vmem:[%s1875 + $0x20] sm:$0xf]
    %v1881 = vld [vmem:[%s1875 + $0x28] sm:$0xf]
    %v1882 = vld [vmem:[%s1875 + $0x30] sm:$0xf]
    %v1883 = vld [vmem:[%s1875 + $0x38] sm:$0xf]
    %v1884 = vld [vmem:[%s1875 + $0x50] sm:$0xf]
    %v1885 = vld [vmem:[%s1875 + $0x58] sm:$0xf]
    %v1886 = vld [vmem:[%s1875 + $0x60] sm:$0xf]
    %v1887 = vld [vmem:[%s1875 + $0x68] sm:$0xf]
    %v1888 = vld [vmem:[%s1875 + $0x70] sm:$0xf]
    %v1889 = vld [vmem:[%s1875 + $0x78] sm:$0xf]
    %v1890 = vld [vmem:[%s1875 + $0x80] sm:$0xf]
    %v1891 = vld [vmem:[%s1875 + $0x88] sm:$0xf]
    %v1908 = vunpack.c.l.b16 %v1876
    %v1909 = vunpack.c.l.b16 %v1877
    %v1910 = vunpack.c.l.b16 %v1878
    %v1911 = vunpack.c.l.b16 %v1879
    %v1912 = vunpack.c.l.b16 %v1880
    %v1913 = vunpack.c.l.b16 %v1881
    %v1914 = vunpack.c.l.b16 %v1882
    %v1915 = vunpack.c.l.b16 %v1883
    %v1916 = vunpack.c.l.b16 %v1884
    %v1917 = vunpack.c.l.b16 %v1885
    %v1918 = vunpack.c.l.b16 %v1886
    %v1919 = vunpack.c.l.b16 %v1887
    %v1920 = vunpack.c.l.b16 %v1888
    %v1921 = vunpack.c.l.b16 %v1889
    %v1922 = vunpack.c.l.b16 %v1890
    %v1923 = vunpack.c.l.b16 %v1891
    %v1924 = vpack.c.b16 %v1909, %v1908
    %v1925 = vpack.c.b16 %v1911, %v1910
    %v1926 = vpack.c.b16 %v1913, %v1912
    %v1927 = vpack.c.b16 %v1915, %v1914
    %v1928 = vpack.c.b16 %v1917, %v1916
    %v1929 = vpack.c.b16 %v1919, %v1918
    %v1930 = vpack.c.b16 %v1921, %v1920
    %v1931 = vpack.c.b16 %v1923, %v1922
    %1940 = vst.msk [vmem:[#allocation3 + $0x18] sm:$0xff] %vm811, %v1924
    %1941 = vst.msk [vmem:[#allocation3 + $0x40] sm:$0xff] %vm811, %v1925
    %1942 = vst.msk [vmem:[#allocation3 + $0x68] sm:$0xff] %vm811, %v1926
    %1943 = vst.msk [vmem:[#allocation3 + $0x90] sm:$0xff] %vm811, %v1927
    %1944 = vst.msk [vmem:[#allocation3 + $0xb8] sm:$0xff] %vm811, %v1928
    %1945 = vst.msk [vmem:[#allocation3 + $0xe0] sm:$0xff] %vm811, %v1929
    %1946 = vst.msk [vmem:[#allocation3 + $0x108] sm:$0xff] %vm811, %v1930
    %1947 = vst.msk [vmem:[#allocation3 + $0x130] sm:$0xff] %vm811, %v1931
    %v1948 = vld [vmem:[%s1875] sm:$0xf]
    %v1949 = vld [vmem:[%s1875 + $0x4] sm:$0x1]
    %v1950 = vld [vmem:[%s1875 + $0x8] sm:$0xf]
    %v1951 = vld [vmem:[%s1875 + $0xc] sm:$0x1]
    %v1952 = vld [vmem:[%s1875 + $0x10] sm:$0xf]
    %v1953 = vld [vmem:[%s1875 + $0x14] sm:$0x1]
    %v1954 = vld [vmem:[%s1875 + $0x18] sm:$0xf]
    %v1955 = vld [vmem:[%s1875 + $0x1c] sm:$0x1]
    %v1956 = vld [vmem:[%s1875 + $0x20] sm:$0xf]
    %v1957 = vld [vmem:[%s1875 + $0x24] sm:$0x1]
    %v1958 = vld [vmem:[%s1875 + $0x28] sm:$0xf]
    %v1959 = vld [vmem:[%s1875 + $0x2c] sm:$0x1]
    %v1960 = vld [vmem:[%s1875 + $0x30] sm:$0xf]
    %v1961 = vld [vmem:[%s1875 + $0x34] sm:$0x1]
    %v1962 = vld [vmem:[%s1875 + $0x38] sm:$0xf]
    %v1963 = vld [vmem:[%s1875 + $0x3c] sm:$0x1]
    %v1964 = vld [vmem:[%s1875 + $0x50] sm:$0xf]
    %v1965 = vld [vmem:[%s1875 + $0x54] sm:$0x1]
    %v1966 = vld [vmem:[%s1875 + $0x58] sm:$0xf]
    %v1967 = vld [vmem:[%s1875 + $0x5c] sm:$0x1]
    %v1968 = vld [vmem:[%s1875 + $0x60] sm:$0xf]
    %v1969 = vld [vmem:[%s1875 + $0x64] sm:$0x1]
    %v1970 = vld [vmem:[%s1875 + $0x68] sm:$0xf]
    %v1971 = vld [vmem:[%s1875 + $0x6c] sm:$0x1]
    %v1972 = vld [vmem:[%s1875 + $0x70] sm:$0xf]
    %v1973 = vld [vmem:[%s1875 + $0x74] sm:$0x1]
    %v1974 = vld [vmem:[%s1875 + $0x78] sm:$0xf]
    %v1975 = vld [vmem:[%s1875 + $0x7c] sm:$0x1]
    %v1976 = vld [vmem:[%s1875 + $0x80] sm:$0xf]
    %v1977 = vld [vmem:[%s1875 + $0x84] sm:$0x1]
    %v1978 = vld [vmem:[%s1875 + $0x88] sm:$0xf]
    %v1979 = vld [vmem:[%s1875 + $0x8c] sm:$0x1]
    %v1981 = vshrl.u32 %v1948, 16
    %v1983 = vrot.slane %v1981, 4
    %v1984 = vshll.u32 %v1948, 16
    %v1986 = vrot.slane %v1984, 5
    %v1987 = vor.u32 %v1983, %v1986
    %v1988 = vrot.slane %v1987, 4
    %v1990 = vshll.u32 %v1949, 16
    %v1992 = vrot.slane %v1990, 5
    %v1993 = vsel %vm854, %v1988, %v1992
    %v1995 = vshrl.u32 %v1950, 16
    %v1997 = vrot.slane %v1995, 4
    %v1998 = vshll.u32 %v1950, 16
    %v2000 = vrot.slane %v1998, 5
    %v2001 = vor.u32 %v1997, %v2000
    %v2002 = vrot.slane %v2001, 4
    %v2004 = vshll.u32 %v1951, 16
    %v2006 = vrot.slane %v2004, 5
    %v2007 = vsel %vm854, %v2002, %v2006
    %v2009 = vshrl.u32 %v1952, 16
    %v2011 = vrot.slane %v2009, 4
    %v2012 = vshll.u32 %v1952, 16
    %v2014 = vrot.slane %v2012, 5
    %v2015 = vor.u32 %v2011, %v2014
    %v2016 = vrot.slane %v2015, 4
    %v2018 = vshll.u32 %v1953, 16
    %v2020 = vrot.slane %v2018, 5
    %v2021 = vsel %vm854, %v2016, %v2020
    %v2023 = vshrl.u32 %v1954, 16
    %v2025 = vrot.slane %v2023, 4
    %v2026 = vshll.u32 %v1954, 16
    %v2028 = vrot.slane %v2026, 5
    %v2029 = vor.u32 %v2025, %v2028
    %v2030 = vrot.slane %v2029, 4
    %v2032 = vshll.u32 %v1955, 16
    %v2034 = vrot.slane %v2032, 5
    %v2035 = vsel %vm854, %v2030, %v2034
    %v2037 = vshrl.u32 %v1956, 16
    %v2039 = vrot.slane %v2037, 4
    %v2040 = vshll.u32 %v1956, 16
    %v2042 = vrot.slane %v2040, 5
    %v2043 = vor.u32 %v2039, %v2042
    %v2044 = vrot.slane %v2043, 4
    %v2046 = vshll.u32 %v1957, 16
    %v2048 = vrot.slane %v2046, 5
    %v2049 = vsel %vm854, %v2044, %v2048
    %v2051 = vshrl.u32 %v1958, 16
    %v2053 = vrot.slane %v2051, 4
    %v2054 = vshll.u32 %v1958, 16
    %v2056 = vrot.slane %v2054, 5
    %v2057 = vor.u32 %v2053, %v2056
    %v2058 = vrot.slane %v2057, 4
    %v2060 = vshll.u32 %v1959, 16
    %v2062 = vrot.slane %v2060, 5
    %v2063 = vsel %vm854, %v2058, %v2062
    %v2065 = vshrl.u32 %v1960, 16
    %v2067 = vrot.slane %v2065, 4
    %v2068 = vshll.u32 %v1960, 16
    %v2070 = vrot.slane %v2068, 5
    %v2071 = vor.u32 %v2067, %v2070
    %v2072 = vrot.slane %v2071, 4
    %v2074 = vshll.u32 %v1961, 16
    %v2076 = vrot.slane %v2074, 5
    %v2077 = vsel %vm854, %v2072, %v2076
    %v2079 = vshrl.u32 %v1962, 16
    %v2081 = vrot.slane %v2079, 4
    %v2082 = vshll.u32 %v1962, 16
    %v2084 = vrot.slane %v2082, 5
    %v2085 = vor.u32 %v2081, %v2084
    %v2086 = vrot.slane %v2085, 4
    %v2088 = vshll.u32 %v1963, 16
    %v2090 = vrot.slane %v2088, 5
    %v2091 = vsel %vm854, %v2086, %v2090
    %v2093 = vshrl.u32 %v1964, 16
    %v2095 = vrot.slane %v2093, 4
    %v2096 = vshll.u32 %v1964, 16
    %v2098 = vrot.slane %v2096, 5
    %v2099 = vor.u32 %v2095, %v2098
    %v2100 = vrot.slane %v2099, 4
    %v2102 = vshll.u32 %v1965, 16
    %v2104 = vrot.slane %v2102, 5
    %v2105 = vsel %vm854, %v2100, %v2104
    %v2107 = vshrl.u32 %v1966, 16
    %v2109 = vrot.slane %v2107, 4
    %v2110 = vshll.u32 %v1966, 16
    %v2112 = vrot.slane %v2110, 5
    %v2113 = vor.u32 %v2109, %v2112
    %v2114 = vrot.slane %v2113, 4
    %v2116 = vshll.u32 %v1967, 16
    %v2118 = vrot.slane %v2116, 5
    %v2119 = vsel %vm854, %v2114, %v2118
    %v2121 = vshrl.u32 %v1968, 16
    %v2123 = vrot.slane %v2121, 4
    %v2124 = vshll.u32 %v1968, 16
    %v2126 = vrot.slane %v2124, 5
    %v2127 = vor.u32 %v2123, %v2126
    %v2128 = vrot.slane %v2127, 4
    %v2130 = vshll.u32 %v1969, 16
    %v2132 = vrot.slane %v2130, 5
    %v2133 = vsel %vm854, %v2128, %v2132
    %v2135 = vshrl.u32 %v1970, 16
    %v2137 = vrot.slane %v2135, 4
    %v2138 = vshll.u32 %v1970, 16
    %v2140 = vrot.slane %v2138, 5
    %v2141 = vor.u32 %v2137, %v2140
    %v2142 = vrot.slane %v2141, 4
    %v2144 = vshll.u32 %v1971, 16
    %v2146 = vrot.slane %v2144, 5
    %v2147 = vsel %vm854, %v2142, %v2146
    %v2149 = vshrl.u32 %v1972, 16
    %v2151 = vrot.slane %v2149, 4
    %v2152 = vshll.u32 %v1972, 16
    %v2154 = vrot.slane %v2152, 5
    %v2155 = vor.u32 %v2151, %v2154
    %v2156 = vrot.slane %v2155, 4
    %v2158 = vshll.u32 %v1973, 16
    %v2160 = vrot.slane %v2158, 5
    %v2161 = vsel %vm854, %v2156, %v2160
    %v2163 = vshrl.u32 %v1974, 16
    %v2165 = vrot.slane %v2163, 4
    %v2166 = vshll.u32 %v1974, 16
    %v2168 = vrot.slane %v2166, 5
    %v2169 = vor.u32 %v2165, %v2168
    %v2170 = vrot.slane %v2169, 4
    %v2172 = vshll.u32 %v1975, 16
    %v2174 = vrot.slane %v2172, 5
    %v2175 = vsel %vm854, %v2170, %v2174
    %v2177 = vshrl.u32 %v1976, 16
    %v2179 = vrot.slane %v2177, 4
    %v2180 = vshll.u32 %v1976, 16
    %v2182 = vrot.slane %v2180, 5
    %v2183 = vor.u32 %v2179, %v2182
    %v2184 = vrot.slane %v2183, 4
    %v2186 = vshll.u32 %v1977, 16
    %v2188 = vrot.slane %v2186, 5
    %v2189 = vsel %vm854, %v2184, %v2188
    %v2191 = vshrl.u32 %v1978, 16
    %v2193 = vrot.slane %v2191, 4
    %v2194 = vshll.u32 %v1978, 16
    %v2196 = vrot.slane %v2194, 5
    %v2197 = vor.u32 %v2193, %v2196
    %v2198 = vrot.slane %v2197, 4
    %v2200 = vshll.u32 %v1979, 16
    %v2202 = vrot.slane %v2200, 5
    %v2203 = vsel %vm854, %v2198, %v2202
    %v2204 = vunpack.c.l.b16 %v1993
    %v2205 = vunpack.c.l.b16 %v2007
    %v2206 = vunpack.c.l.b16 %v2021
    %v2207 = vunpack.c.l.b16 %v2035
    %v2208 = vunpack.c.l.b16 %v2049
    %v2209 = vunpack.c.l.b16 %v2063
    %v2210 = vunpack.c.l.b16 %v2077
    %v2211 = vunpack.c.l.b16 %v2091
    %v2212 = vunpack.c.l.b16 %v2105
    %v2213 = vunpack.c.l.b16 %v2119
    %v2214 = vunpack.c.l.b16 %v2133
    %v2215 = vunpack.c.l.b16 %v2147
    %v2216 = vunpack.c.l.b16 %v2161
    %v2217 = vunpack.c.l.b16 %v2175
    %v2218 = vunpack.c.l.b16 %v2189
    %v2219 = vunpack.c.l.b16 %v2203
    %v2220 = vpack.c.b16 %v2205, %v2204
    %v2221 = vpack.c.b16 %v2207, %v2206
    %v2222 = vpack.c.b16 %v2209, %v2208
    %v2223 = vpack.c.b16 %v2211, %v2210
    %v2224 = vpack.c.b16 %v2213, %v2212
    %v2225 = vpack.c.b16 %v2215, %v2214
    %v2226 = vpack.c.b16 %v2217, %v2216
    %v2227 = vpack.c.b16 %v2219, %v2218
    %2228 = vrot.lane.b32.xlu0 %v2220, 64
    %v2229 = vpop.permute.xlu0 %2228
    %2230 = vrot.lane.b32.xlu0 %v2221, 64
    %v2231 = vpop.permute.xlu0 %2230
    %2232 = vrot.lane.b32.xlu0 %v2222, 64
    %v2233 = vpop.permute.xlu0 %2232
    %2234 = vrot.lane.b32.xlu0 %v2223, 64
    %v2235 = vpop.permute.xlu0 %2234
    %2236 = vrot.lane.b32.xlu0 %v2224, 64
    %v2237 = vpop.permute.xlu0 %2236
    %2238 = vrot.lane.b32.xlu0 %v2225, 64
    %v2239 = vpop.permute.xlu0 %2238
    %2240 = vrot.lane.b32.xlu0 %v2226, 64
    %v2241 = vpop.permute.xlu0 %2240
    %2242 = vrot.lane.b32.xlu0 %v2227, 64
    %v2243 = vpop.permute.xlu0 %2242
    %2252 = vst.msk [vmem:[#allocation3 + $0x18] sm:$0xff] %vm1127, %v2229
    %2253 = vst.msk [vmem:[#allocation3 + $0x40] sm:$0xff] %vm1127, %v2231
    %2254 = vst.msk [vmem:[#allocation3 + $0x68] sm:$0xff] %vm1127, %v2233
    %2255 = vst.msk [vmem:[#allocation3 + $0x90] sm:$0xff] %vm1127, %v2235
    %2256 = vst.msk [vmem:[#allocation3 + $0xb8] sm:$0xff] %vm1127, %v2237
    %2257 = vst.msk [vmem:[#allocation3 + $0xe0] sm:$0xff] %vm1127, %v2239
    %2258 = vst.msk [vmem:[#allocation3 + $0x108] sm:$0xff] %vm1127, %v2241
    %2259 = vst.msk [vmem:[#allocation3 + $0x130] sm:$0xff] %vm1127, %v2243
    %v2260 = vld [vmem:[%s1875] sm:$0xe]
    %v2261 = vld [vmem:[%s1875 + $0x4] sm:$0x1]
    %v2262 = vld [vmem:[%s1875 + $0x8] sm:$0xe]
    %v2263 = vld [vmem:[%s1875 + $0xc] sm:$0x1]
    %v2264 = vld [vmem:[%s1875 + $0x10] sm:$0xe]
    %v2265 = vld [vmem:[%s1875 + $0x14] sm:$0x1]
    %v2266 = vld [vmem:[%s1875 + $0x18] sm:$0xe]
    %v2267 = vld [vmem:[%s1875 + $0x1c] sm:$0x1]
    %v2268 = vld [vmem:[%s1875 + $0x20] sm:$0xe]
    %v2269 = vld [vmem:[%s1875 + $0x24] sm:$0x1]
    %v2270 = vld [vmem:[%s1875 + $0x28] sm:$0xe]
    %v2271 = vld [vmem:[%s1875 + $0x2c] sm:$0x1]
    %v2272 = vld [vmem:[%s1875 + $0x30] sm:$0xe]
    %v2273 = vld [vmem:[%s1875 + $0x34] sm:$0x1]
    %v2274 = vld [vmem:[%s1875 + $0x38] sm:$0xe]
    %v2275 = vld [vmem:[%s1875 + $0x3c] sm:$0x1]
    %v2276 = vld [vmem:[%s1875 + $0x50] sm:$0xe]
    %v2277 = vld [vmem:[%s1875 + $0x54] sm:$0x1]
    %v2278 = vld [vmem:[%s1875 + $0x58] sm:$0xe]
    %v2279 = vld [vmem:[%s1875 + $0x5c] sm:$0x1]
    %v2280 = vld [vmem:[%s1875 + $0x60] sm:$0xe]
    %v2281 = vld [vmem:[%s1875 + $0x64] sm:$0x1]
    %v2282 = vld [vmem:[%s1875 + $0x68] sm:$0xe]
    %v2283 = vld [vmem:[%s1875 + $0x6c] sm:$0x1]
    %v2284 = vld [vmem:[%s1875 + $0x70] sm:$0xe]
    %v2285 = vld [vmem:[%s1875 + $0x74] sm:$0x1]
    %v2286 = vld [vmem:[%s1875 + $0x78] sm:$0xe]
    %v2287 = vld [vmem:[%s1875 + $0x7c] sm:$0x1]
    %v2288 = vld [vmem:[%s1875 + $0x80] sm:$0xe]
    %v2289 = vld [vmem:[%s1875 + $0x84] sm:$0x1]
    %v2290 = vld [vmem:[%s1875 + $0x88] sm:$0xe]
    %v2291 = vld [vmem:[%s1875 + $0x8c] sm:$0x1]
    %v2324 = vrot.slane %v2260, 5
    %v2325 = vrot.slane %v2324, 4
    %v2326 = vrot.slane %v2261, 5
    %v2327 = vsel %vm1202, %v2325, %v2326
    %v2328 = vrot.slane %v2262, 5
    %v2329 = vrot.slane %v2328, 4
    %v2330 = vrot.slane %v2263, 5
    %v2331 = vsel %vm1202, %v2329, %v2330
    %v2332 = vrot.slane %v2264, 5
    %v2333 = vrot.slane %v2332, 4
    %v2334 = vrot.slane %v2265, 5
    %v2335 = vsel %vm1202, %v2333, %v2334
    %v2336 = vrot.slane %v2266, 5
    %v2337 = vrot.slane %v2336, 4
    %v2338 = vrot.slane %v2267, 5
    %v2339 = vsel %vm1202, %v2337, %v2338
    %v2340 = vrot.slane %v2268, 5
    %v2341 = vrot.slane %v2340, 4
    %v2342 = vrot.slane %v2269, 5
    %v2343 = vsel %vm1202, %v2341, %v2342
    %v2344 = vrot.slane %v2270, 5
    %v2345 = vrot.slane %v2344, 4
    %v2346 = vrot.slane %v2271, 5
    %v2347 = vsel %vm1202, %v2345, %v2346
    %v2348 = vrot.slane %v2272, 5
    %v2349 = vrot.slane %v2348, 4
    %v2350 = vrot.slane %v2273, 5
    %v2351 = vsel %vm1202, %v2349, %v2350
    %v2352 = vrot.slane %v2274, 5
    %v2353 = vrot.slane %v2352, 4
    %v2354 = vrot.slane %v2275, 5
    %v2355 = vsel %vm1202, %v2353, %v2354
    %v2356 = vrot.slane %v2276, 5
    %v2357 = vrot.slane %v2356, 4
    %v2358 = vrot.slane %v2277, 5
    %v2359 = vsel %vm1202, %v2357, %v2358
    %v2360 = vrot.slane %v2278, 5
    %v2361 = vrot.slane %v2360, 4
    %v2362 = vrot.slane %v2279, 5
    %v2363 = vsel %vm1202, %v2361, %v2362
    %v2364 = vrot.slane %v2280, 5
    %v2365 = vrot.slane %v2364, 4
    %v2366 = vrot.slane %v2281, 5
    %v2367 = vsel %vm1202, %v2365, %v2366
    %v2368 = vrot.slane %v2282, 5
    %v2369 = vrot.slane %v2368, 4
    %v2370 = vrot.slane %v2283, 5
    %v2371 = vsel %vm1202, %v2369, %v2370
    %v2372 = vrot.slane %v2284, 5
    %v2373 = vrot.slane %v2372, 4
    %v2374 = vrot.slane %v2285, 5
    %v2375 = vsel %vm1202, %v2373, %v2374
    %v2376 = vrot.slane %v2286, 5
    %v2377 = vrot.slane %v2376, 4
    %v2378 = vrot.slane %v2287, 5
    %v2379 = vsel %vm1202, %v2377, %v2378
    %v2380 = vrot.slane %v2288, 5
    %v2381 = vrot.slane %v2380, 4
    %v2382 = vrot.slane %v2289, 5
    %v2383 = vsel %vm1202, %v2381, %v2382
    %v2384 = vrot.slane %v2290, 5
    %v2385 = vrot.slane %v2384, 4
    %v2386 = vrot.slane %v2291, 5
    %v2387 = vsel %vm1202, %v2385, %v2386
    %v2388 = vunpack.c.l.b16 %v2327
    %v2389 = vunpack.c.l.b16 %v2331
    %v2390 = vunpack.c.l.b16 %v2335
    %v2391 = vunpack.c.l.b16 %v2339
    %v2392 = vunpack.c.l.b16 %v2343
    %v2393 = vunpack.c.l.b16 %v2347
    %v2394 = vunpack.c.l.b16 %v2351
    %v2395 = vunpack.c.l.b16 %v2355
    %v2396 = vunpack.c.l.b16 %v2359
    %v2397 = vunpack.c.l.b16 %v2363
    %v2398 = vunpack.c.l.b16 %v2367
    %v2399 = vunpack.c.l.b16 %v2371
    %v2400 = vunpack.c.l.b16 %v2375
    %v2401 = vunpack.c.l.b16 %v2379
    %v2402 = vunpack.c.l.b16 %v2383
    %v2403 = vunpack.c.l.b16 %v2387
    %v2404 = vpack.c.b16 %v2389, %v2388
    %v2405 = vpack.c.b16 %v2391, %v2390
    %v2406 = vpack.c.b16 %v2393, %v2392
    %v2407 = vpack.c.b16 %v2395, %v2394
    %v2408 = vpack.c.b16 %v2397, %v2396
    %v2409 = vpack.c.b16 %v2399, %v2398
    %v2410 = vpack.c.b16 %v2401, %v2400
    %v2411 = vpack.c.b16 %v2403, %v2402
    %2420 = vst.msk [vmem:[#allocation3 + $0x20] sm:$0xff] %vm811, %v2404
    %2421 = vst.msk [vmem:[#allocation3 + $0x48] sm:$0xff] %vm811, %v2405
    %2422 = vst.msk [vmem:[#allocation3 + $0x70] sm:$0xff] %vm811, %v2406
    %2423 = vst.msk [vmem:[#allocation3 + $0x98] sm:$0xff] %vm811, %v2407
    %2424 = vst.msk [vmem:[#allocation3 + $0xc0] sm:$0xff] %vm811, %v2408
    %2425 = vst.msk [vmem:[#allocation3 + $0xe8] sm:$0xff] %vm811, %v2409
    %2426 = vst.msk [vmem:[#allocation3 + $0x110] sm:$0xff] %vm811, %v2410
    %2427 = vst.msk [vmem:[#allocation3 + $0x138] sm:$0xff] %vm811, %v2411
    %v2428 = vld [vmem:[#allocation3] sm:$0xff]
    %v2429 = vld [vmem:[#allocation3 + $0x8] sm:$0xff]
    %v2430 = vld [vmem:[#allocation3 + $0x10] sm:$0xff]
    %v2431 = vld [vmem:[#allocation3 + $0x18] sm:$0xff]
    %v2432 = vld [vmem:[#allocation3 + $0x20] sm:$0xff]
    %v2433 = vld [vmem:[#allocation3 + $0x28] sm:$0xff]
    %v2434 = vld [vmem:[#allocation3 + $0x30] sm:$0xff]
    %v2435 = vld [vmem:[#allocation3 + $0x38] sm:$0xff]
    %v2436 = vld [vmem:[#allocation3 + $0x40] sm:$0xff]
    %v2437 = vld [vmem:[#allocation3 + $0x48] sm:$0xff]
    %v2438 = vld [vmem:[#allocation3 + $0x50] sm:$0xff]
    %v2439 = vld [vmem:[#allocation3 + $0x58] sm:$0xff]
    %v2440 = vld [vmem:[#allocation3 + $0x60] sm:$0xff]
    %v2441 = vld [vmem:[#allocation3 + $0x68] sm:$0xff]
    %v2442 = vld [vmem:[#allocation3 + $0x70] sm:$0xff]
    %v2443 = vld [vmem:[#allocation3 + $0x78] sm:$0xff]
    %v2444 = vld [vmem:[#allocation3 + $0x80] sm:$0xff]
    %v2445 = vld [vmem:[#allocation3 + $0x88] sm:$0xff]
    %v2446 = vld [vmem:[#allocation3 + $0x90] sm:$0xff]
    %v2447 = vld [vmem:[#allocation3 + $0x98] sm:$0xff]
    %v2448 = vld [vmem:[#allocation3 + $0xa0] sm:$0xff]
    %v2449 = vld [vmem:[#allocation3 + $0xa8] sm:$0xff]
    %v2450 = vld [vmem:[#allocation3 + $0xb0] sm:$0xff]
    %v2451 = vld [vmem:[#allocation3 + $0xb8] sm:$0xff]
    %v2452 = vld [vmem:[#allocation3 + $0xc0] sm:$0xff]
    %v2453 = vld [vmem:[#allocation3 + $0xc8] sm:$0xff]
    %v2454 = vld [vmem:[#allocation3 + $0xd0] sm:$0xff]
    %v2455 = vld [vmem:[#allocation3 + $0xd8] sm:$0xff]
    %v2456 = vld [vmem:[#allocation3 + $0xe0] sm:$0xff]
    %v2457 = vld [vmem:[#allocation3 + $0xe8] sm:$0xff]
    %v2458 = vld [vmem:[#allocation3 + $0xf0] sm:$0xff]
    %v2459 = vld [vmem:[#allocation3 + $0xf8] sm:$0xff]
    %v2460 = vld [vmem:[#allocation3 + $0x100] sm:$0xff]
    %v2461 = vld [vmem:[#allocation3 + $0x108] sm:$0xff]
    %v2462 = vld [vmem:[#allocation3 + $0x110] sm:$0xff]
    %v2463 = vld [vmem:[#allocation3 + $0x118] sm:$0xff]
    %v2464 = vld [vmem:[#allocation3 + $0x120] sm:$0xff]
    %v2465 = vld [vmem:[#allocation3 + $0x128] sm:$0xff]
    %v2466 = vld [vmem:[#allocation3 + $0x130] sm:$0xff]
    %v2467 = vld [vmem:[#allocation3 + $0x138] sm:$0xff]
    %v2468 = vld [vmem:[%s1] sm:$0xf]
    %v2469 = vld [vmem:[%s1 + $0x4] sm:$0xf]
    %v2470 = vld [vmem:[%s1 + $0x8] sm:$0xf]
    %v2471 = vld [vmem:[%s1 + $0xc] sm:$0xf]
    %v2472 = vld [vmem:[%s1 + $0x10] sm:$0xf]
    %v2473 = vld [vmem:[%s1 + $0x14] sm:$0xf]
    %v2474 = vld [vmem:[%s1 + $0x18] sm:$0xf]
    %v2475 = vld [vmem:[%s1 + $0x1c] sm:$0xf]
    %v2476 = vld [vmem:[%s1 + $0x20] sm:$0xf]
    %v2477 = vld [vmem:[%s1 + $0x24] sm:$0xf]
    %v2478 = vld [vmem:[%s1 + $0x28] sm:$0xf]
    %v2479 = vld [vmem:[%s1 + $0x2c] sm:$0xf]
    %v2480 = vld [vmem:[%s1 + $0x30] sm:$0xf]
    %v2481 = vld [vmem:[%s1 + $0x34] sm:$0xf]
    %v2482 = vld [vmem:[%s1 + $0x38] sm:$0xf]
    %v2483 = vld [vmem:[%s1 + $0x3c] sm:$0xf]
    %v2484 = vld [vmem:[%s1 + $0x40] sm:$0xf]
    %v2485 = vld [vmem:[%s1 + $0x44] sm:$0xf]
    %v2486 = vld [vmem:[%s1 + $0x48] sm:$0xf]
    %v2487 = vld [vmem:[%s1 + $0x4c] sm:$0xf]
    %v2488 = vld [vmem:[%s1 + $0x50] sm:$0xf]
    %v2489 = vld [vmem:[%s1 + $0x54] sm:$0xf]
    %v2490 = vld [vmem:[%s1 + $0x58] sm:$0xf]
    %v2491 = vld [vmem:[%s1 + $0x5c] sm:$0xf]
    %v2492 = vld [vmem:[%s1 + $0x60] sm:$0xf]
    %v2493 = vld [vmem:[%s1 + $0x64] sm:$0xf]
    %v2494 = vld [vmem:[%s1 + $0x68] sm:$0xf]
    %v2495 = vld [vmem:[%s1 + $0x6c] sm:$0xf]
    %v2496 = vld [vmem:[%s1 + $0x70] sm:$0xf]
    %v2497 = vld [vmem:[%s1 + $0x74] sm:$0xf]
    %v2498 = vld [vmem:[%s1 + $0x78] sm:$0xf]
    %v2499 = vld [vmem:[%s1 + $0x7c] sm:$0xf]
    %v2500 = vld [vmem:[%s1 + $0x80] sm:$0xf]
    %v2501 = vld [vmem:[%s1 + $0x84] sm:$0xf]
    %v2502 = vld [vmem:[%s1 + $0x88] sm:$0xf]
    %v2503 = vld [vmem:[%s1 + $0x8c] sm:$0xf]
    %v2504 = vld [vmem:[%s1 + $0x90] sm:$0xf]
    %v2505 = vld [vmem:[%s1 + $0x94] sm:$0xf]
    %v2506 = vld [vmem:[%s1 + $0x98] sm:$0xf]
    %v2507 = vld [vmem:[%s1 + $0x9c] sm:$0xf]
    %v2508 = vld [vmem:[%s1 + $0xa0] sm:$0xf]
    %v2509 = vld [vmem:[%s1 + $0xa4] sm:$0xf]
    %v2510 = vld [vmem:[%s1 + $0xa8] sm:$0xf]
    %v2511 = vld [vmem:[%s1 + $0xac] sm:$0xf]
    %v2512 = vld [vmem:[%s1 + $0xb0] sm:$0xf]
    %v2513 = vld [vmem:[%s1 + $0xb4] sm:$0xf]
    %v2514 = vld [vmem:[%s1 + $0xb8] sm:$0xf]
    %v2515 = vld [vmem:[%s1 + $0xbc] sm:$0xf]
    %v2516 = vld [vmem:[%s1 + $0xc0] sm:$0xf]
    %v2517 = vld [vmem:[%s1 + $0xc4] sm:$0xf]
    %v2518 = vld [vmem:[%s1 + $0xc8] sm:$0xf]
    %v2519 = vld [vmem:[%s1 + $0xcc] sm:$0xf]
    %v2520 = vld [vmem:[%s1 + $0xd0] sm:$0xf]
    %v2521 = vld [vmem:[%s1 + $0xd4] sm:$0xf]
    %v2522 = vld [vmem:[%s1 + $0xd8] sm:$0xf]
    %v2523 = vld [vmem:[%s1 + $0xdc] sm:$0xf]
    %v2524 = vld [vmem:[%s1 + $0xe0] sm:$0xf]
    %v2525 = vld [vmem:[%s1 + $0xe4] sm:$0xf]
    %v2526 = vld [vmem:[%s1 + $0xe8] sm:$0xf]
    %v2527 = vld [vmem:[%s1 + $0xec] sm:$0xf]
    %v2528 = vld [vmem:[%s1 + $0xf0] sm:$0xf]
    %v2529 = vld [vmem:[%s1 + $0xf4] sm:$0xf]
    %v2530 = vld [vmem:[%s1 + $0xf8] sm:$0xf]
    %v2531 = vld [vmem:[%s1 + $0xfc] sm:$0xf]
    %v2532 = vld [vmem:[%s1 + $0x100] sm:$0xf]
    %v2533 = vld [vmem:[%s1 + $0x104] sm:$0xf]
    %v2534 = vld [vmem:[%s1 + $0x108] sm:$0xf]
    %v2535 = vld [vmem:[%s1 + $0x10c] sm:$0xf]
    %v2536 = vld [vmem:[%s1 + $0x110] sm:$0xf]
    %v2537 = vld [vmem:[%s1 + $0x114] sm:$0xf]
    %v2538 = vld [vmem:[%s1 + $0x118] sm:$0xf]
    %v2539 = vld [vmem:[%s1 + $0x11c] sm:$0xf]
    %v2612 = vunpack.c.l.b16 %v2468
    %v2613 = vunpack.c.l.b16 %v2469
    %v2614 = vunpack.c.l.b16 %v2470
    %v2615 = vunpack.c.l.b16 %v2471
    %v2616 = vunpack.c.l.b16 %v2472
    %v2617 = vunpack.c.l.b16 %v2473
    %v2618 = vunpack.c.l.b16 %v2474
    %v2619 = vunpack.c.l.b16 %v2475
    %v2620 = vunpack.c.l.b16 %v2476
    %v2621 = vunpack.c.l.b16 %v2477
    %v2622 = vunpack.c.l.b16 %v2478
    %v2623 = vunpack.c.l.b16 %v2479
    %v2624 = vunpack.c.l.b16 %v2480
    %v2625 = vunpack.c.l.b16 %v2481
    %v2626 = vunpack.c.l.b16 %v2482
    %v2627 = vunpack.c.l.b16 %v2483
    %v2628 = vunpack.c.l.b16 %v2484
    %v2629 = vunpack.c.l.b16 %v2485
    %v2630 = vunpack.c.l.b16 %v2486
    %v2631 = vunpack.c.l.b16 %v2487
    %v2632 = vunpack.c.l.b16 %v2488
    %v2633 = vunpack.c.l.b16 %v2489
    %v2634 = vunpack.c.l.b16 %v2490
    %v2635 = vunpack.c.l.b16 %v2491
    %v2636 = vunpack.c.l.b16 %v2492
    %v2637 = vunpack.c.l.b16 %v2493
    %v2638 = vunpack.c.l.b16 %v2494
    %v2639 = vunpack.c.l.b16 %v2495
    %v2640 = vunpack.c.l.b16 %v2496
    %v2641 = vunpack.c.l.b16 %v2497
    %v2642 = vunpack.c.l.b16 %v2498
    %v2643 = vunpack.c.l.b16 %v2499
    %v2644 = vunpack.c.l.b16 %v2500
    %v2645 = vunpack.c.l.b16 %v2501
    %v2646 = vunpack.c.l.b16 %v2502
    %v2647 = vunpack.c.l.b16 %v2503
    %v2648 = vunpack.c.l.b16 %v2504
    %v2649 = vunpack.c.l.b16 %v2505
    %v2650 = vunpack.c.l.b16 %v2506
    %v2651 = vunpack.c.l.b16 %v2507
    %v2652 = vunpack.c.l.b16 %v2508
    %v2653 = vunpack.c.l.b16 %v2509
    %v2654 = vunpack.c.l.b16 %v2510
    %v2655 = vunpack.c.l.b16 %v2511
    %v2656 = vunpack.c.l.b16 %v2512
    %v2657 = vunpack.c.l.b16 %v2513
    %v2658 = vunpack.c.l.b16 %v2514
    %v2659 = vunpack.c.l.b16 %v2515
    %v2660 = vunpack.c.l.b16 %v2516
    %v2661 = vunpack.c.l.b16 %v2517
    %v2662 = vunpack.c.l.b16 %v2518
    %v2663 = vunpack.c.l.b16 %v2519
    %v2664 = vunpack.c.l.b16 %v2520
    %v2665 = vunpack.c.l.b16 %v2521
    %v2666 = vunpack.c.l.b16 %v2522
    %v2667 = vunpack.c.l.b16 %v2523
    %v2668 = vunpack.c.l.b16 %v2524
    %v2669 = vunpack.c.l.b16 %v2525
    %v2670 = vunpack.c.l.b16 %v2526
    %v2671 = vunpack.c.l.b16 %v2527
    %v2672 = vunpack.c.l.b16 %v2528
    %v2673 = vunpack.c.l.b16 %v2529
    %v2674 = vunpack.c.l.b16 %v2530
    %v2675 = vunpack.c.l.b16 %v2531
    %v2676 = vunpack.c.l.b16 %v2532
    %v2677 = vunpack.c.l.b16 %v2533
    %v2678 = vunpack.c.l.b16 %v2534
    %v2679 = vunpack.c.l.b16 %v2535
    %v2680 = vunpack.c.l.b16 %v2536
    %v2681 = vunpack.c.l.b16 %v2537
    %v2682 = vunpack.c.l.b16 %v2538
    %v2683 = vunpack.c.l.b16 %v2539
    %v2684 = vpack.c.b16 %v2613, %v2612
    %v2685 = vpack.c.b16 %v2615, %v2614
    %v2686 = vpack.c.b16 %v2617, %v2616
    %v2687 = vpack.c.b16 %v2619, %v2618
    %v2688 = vpack.c.b16 %v2621, %v2620
    %v2689 = vpack.c.b16 %v2623, %v2622
    %v2690 = vpack.c.b16 %v2625, %v2624
    %v2691 = vpack.c.b16 %v2627, %v2626
    %v2692 = vpack.c.b16 %v2629, %v2628
    %v2693 = vpack.c.b16 %v2631, %v2630
    %v2694 = vpack.c.b16 %v2633, %v2632
    %v2695 = vpack.c.b16 %v2635, %v2634
    %v2696 = vpack.c.b16 %v2637, %v2636
    %v2697 = vpack.c.b16 %v2639, %v2638
    %v2698 = vpack.c.b16 %v2641, %v2640
    %v2699 = vpack.c.b16 %v2643, %v2642
    %v2700 = vpack.c.b16 %v2645, %v2644
    %v2701 = vpack.c.b16 %v2647, %v2646
    %v2702 = vpack.c.b16 %v2649, %v2648
    %v2703 = vpack.c.b16 %v2651, %v2650
    %v2704 = vpack.c.b16 %v2653, %v2652
    %v2705 = vpack.c.b16 %v2655, %v2654
    %v2706 = vpack.c.b16 %v2657, %v2656
    %v2707 = vpack.c.b16 %v2659, %v2658
    %v2708 = vpack.c.b16 %v2661, %v2660
    %v2709 = vpack.c.b16 %v2663, %v2662
    %v2710 = vpack.c.b16 %v2665, %v2664
    %v2711 = vpack.c.b16 %v2667, %v2666
    %v2712 = vpack.c.b16 %v2669, %v2668
    %v2713 = vpack.c.b16 %v2671, %v2670
    %v2714 = vpack.c.b16 %v2673, %v2672
    %v2715 = vpack.c.b16 %v2675, %v2674
    %v2716 = vpack.c.b16 %v2677, %v2676
    %v2717 = vpack.c.b16 %v2679, %v2678
    %v2718 = vpack.c.b16 %v2681, %v2680
    %v2719 = vpack.c.b16 %v2683, %v2682
    %v2757 = vsel %vm811, %v2432, 0
    %v2760 = vsel %vm811, %v2437, 0
    %v2763 = vsel %vm811, %v2442, 0
    %v2766 = vsel %vm811, %v2447, 0
    %v2769 = vsel %vm811, %v2452, 0
    %v2772 = vsel %vm811, %v2457, 0
    %v2775 = vsel %vm811, %v2462, 0
    %v2778 = vsel %vm811, %v2467, 0
    %2780 = vmatprep.subr.bf16.mxu0 0
    %2781 = vmatpush1.bf16.msra.mxu0 %v2684
    %2782 = vmatprep.subr.bf16.mxu0 0
    %2783 = vmatpush1.bf16.msra.mxu0 %v2685
    %2784 = vmatprep.subr.bf16.mxu0 0
    %2785 = vmatpush1.bf16.msra.mxu0 %v2686
    %2786 = vmatprep.subr.bf16.mxu0 0
    %2787 = vmatpush1.bf16.msra.mxu0 %v2687
    %2788 = vmatprep.subr.bf16.mxu0 0
    %2789 = vmatpush1.bf16.msra.mxu0 %v2688
    %2790 = vmatprep.subr.bf16.mxu0 0
    %2791 = vmatpush1.bf16.msra.mxu0 %v2689
    %2792 = vmatprep.subr.bf16.mxu0 0
    %2793 = vmatpush1.bf16.msra.mxu0 %v2690
    %2794 = vmatprep.subr.bf16.mxu0 0
    %2795 = vmatpush1.bf16.msra.mxu0 %v2691
    %2796 = vmatprep.subr.bf16.mxu0 0
    %2797 = vmatpush1.bf16.msra.mxu0 %v2692
    %2798 = vmatprep.subr.bf16.mxu0 0
    %2799 = vmatpush1.bf16.msra.mxu0 %v2693
    %2800 = vmatprep.subr.bf16.mxu0 0
    %2801 = vmatpush1.bf16.msra.mxu0 %v2694
    %2802 = vmatprep.subr.bf16.mxu0 0
    %2803 = vmatpush1.bf16.msra.mxu0 %v2695
    %2804 = vmatprep.subr.bf16.mxu0 0
    %2805 = vmatpush1.bf16.msra.mxu0 %v2696
    %2806 = vmatprep.subr.bf16.mxu0 0
    %2807 = vmatpush1.bf16.msra.mxu0 %v2697
    %2808 = vmatprep.subr.bf16.mxu0 0
    %2809 = vmatpush1.bf16.msra.mxu0 %v2698
    %2810 = vmatprep.subr.bf16.mxu0 0
    %2811 = vmatpush1.bf16.msra.mxu0 %v2699
    %2812 = vmatprep.mubr.bf16.mxu0 %v2429
    %2813 = vmatmul.mubr.bf16.gmra.mrb[0].mxu0 %v2428
    %v2814 = vpop.f32.mrb[0].mxu0
    %v2815 = vadd.f32 0.0, %v2814
    %v2816 = vpop.f32.mrb[0].mxu0
    %v2817 = vpop.f32.mrb[0].mxu0
    %v2818 = vadd.f32 0.0, %v2817
    %v2819 = vpop.f32.mrb[0].mxu0
    %2820 = vmatprep.mubr.bf16.mxu0 %v2434
    %2821 = vmatmul.mubr.bf16.gmra.mrb[0].mxu0 %v2433
    %v2822 = vpop.f32.mrb[0].mxu0
    %v2823 = vadd.f32 0.0, %v2822
    %v2824 = vpop.f32.mrb[0].mxu0
    %v2825 = vpop.f32.mrb[0].mxu0
    %v2826 = vadd.f32 0.0, %v2825
    %v2827 = vpop.f32.mrb[0].mxu0
    %2828 = vmatprep.mubr.bf16.mxu0 %v2439
    %2829 = vmatmul.mubr.bf16.gmra.mrb[0].mxu0 %v2438
    %v2830 = vpop.f32.mrb[0].mxu0
    %v2831 = vadd.f32 0.0, %v2830
    %v2832 = vpop.f32.mrb[0].mxu0
    %v2833 = vpop.f32.mrb[0].mxu0
    %v2834 = vadd.f32 0.0, %v2833
    %v2835 = vpop.f32.mrb[0].mxu0
    %2836 = vmatprep.mubr.bf16.mxu0 %v2444
    %2837 = vmatmul.mubr.bf16.gmra.mrb[0].mxu0 %v2443
    %v2838 = vpop.f32.mrb[0].mxu0
    %v2839 = vadd.f32 0.0, %v2838
    %v2840 = vpop.f32.mrb[0].mxu0
    %v2841 = vpop.f32.mrb[0].mxu0
    %v2842 = vadd.f32 0.0, %v2841
    %v2843 = vpop.f32.mrb[0].mxu0
    %2844 = vmatprep.mubr.bf16.mxu0 %v2449
    %2845 = vmatmul.mubr.bf16.gmra.mrb[0].mxu0 %v2448
    %v2846 = vpop.f32.mrb[0].mxu0
    %v2847 = vadd.f32 0.0, %v2846
    %v2848 = vpop.f32.mrb[0].mxu0
    %v2849 = vpop.f32.mrb[0].mxu0
    %v2850 = vadd.f32 0.0, %v2849
    %v2851 = vpop.f32.mrb[0].mxu0
    %2852 = vmatprep.mubr.bf16.mxu0 %v2454
    %2853 = vmatmul.mubr.bf16.gmra.mrb[0].mxu0 %v2453
    %v2854 = vpop.f32.mrb[0].mxu0
    %v2855 = vadd.f32 0.0, %v2854
    %v2856 = vpop.f32.mrb[0].mxu0
    %v2857 = vpop.f32.mrb[0].mxu0
    %v2858 = vadd.f32 0.0, %v2857
    %v2859 = vpop.f32.mrb[0].mxu0
    %2860 = vmatprep.mubr.bf16.mxu0 %v2459
    %2861 = vmatmul.mubr.bf16.gmra.mrb[0].mxu0 %v2458
    %v2862 = vpop.f32.mrb[0].mxu0
    %v2863 = vadd.f32 0.0, %v2862
    %v2864 = vpop.f32.mrb[0].mxu0
    %v2865 = vpop.f32.mrb[0].mxu0
    %v2866 = vadd.f32 0.0, %v2865
    %v2867 = vpop.f32.mrb[0].mxu0
    %2868 = vmatprep.mubr.bf16.mxu0 %v2464
    %2869 = vmatmul.mubr.bf16.gmra.mrb[0].mxu0 %v2463
    %v2870 = vpop.f32.mrb[0].mxu0
    %v2871 = vadd.f32 0.0, %v2870
    %v2872 = vpop.f32.mrb[0].mxu0
    %v2873 = vpop.f32.mrb[0].mxu0
    %v2874 = vadd.f32 0.0, %v2873
    %v2875 = vpop.f32.mrb[0].mxu0
    %2876 = vdwg.mxu0
    %2877 = vmatprep.subr.bf16.mxu0 0
    %2878 = vmatpush1.bf16.msra.mxu0 %v2700
    %2879 = vmatprep.subr.bf16.mxu0 0
    %2880 = vmatpush1.bf16.msra.mxu0 %v2701
    %2881 = vmatprep.subr.bf16.mxu0 0
    %2882 = vmatpush1.bf16.msra.mxu0 %v2702
    %2883 = vmatprep.subr.bf16.mxu0 0
    %2884 = vmatpush1.bf16.msra.mxu0 %v2703
    %2885 = vmatprep.subr.bf16.mxu0 0
    %2886 = vmatpush1.bf16.msra.mxu0 %v2704
    %2887 = vmatprep.subr.bf16.mxu0 0
    %2888 = vmatpush1.bf16.msra.mxu0 %v2705
    %2889 = vmatprep.subr.bf16.mxu0 0
    %2890 = vmatpush1.bf16.msra.mxu0 %v2706
    %2891 = vmatprep.subr.bf16.mxu0 0
    %2892 = vmatpush1.bf16.msra.mxu0 %v2707
    %2893 = vmatprep.subr.bf16.mxu0 0
    %2894 = vmatpush1.bf16.msra.mxu0 %v2708
    %2895 = vmatprep.subr.bf16.mxu0 0
    %2896 = vmatpush1.bf16.msra.mxu0 %v2709
    %2897 = vmatprep.subr.bf16.mxu0 0
    %2898 = vmatpush1.bf16.msra.mxu0 %v2710
    %2899 = vmatprep.subr.bf16.mxu0 0
    %2900 = vmatpush1.bf16.msra.mxu0 %v2711
    %2901 = vmatprep.subr.bf16.mxu0 0
    %2902 = vmatpush1.bf16.msra.mxu0 %v2712
    %2903 = vmatprep.subr.bf16.mxu0 0
    %2904 = vmatpush1.bf16.msra.mxu0 %v2713
    %2905 = vmatprep.subr.bf16.mxu0 0
    %2906 = vmatpush1.bf16.msra.mxu0 %v2714
    %2907 = vmatprep.subr.bf16.mxu0 0
    %2908 = vmatpush1.bf16.msra.mxu0 %v2715
    %2909 = vmatprep.mubr.bf16.mxu0 %v2431
    %2910 = vmatmul.mubr.bf16.gmra.mrb[0].mxu0 %v2430
    %v2911 = vpop.f32.mrb[0].mxu0
    %v2912 = vadd.f32 %v2815, %v2911
    %v2913 = vpop.f32.mrb[0].mxu0
    %v2914 = vpop.f32.mrb[0].mxu0
    %v2915 = vadd.f32 %v2818, %v2914
    %v2916 = vpop.f32.mrb[0].mxu0
    %2917 = vmatprep.mubr.bf16.mxu0 %v2436
    %2918 = vmatmul.mubr.bf16.gmra.mrb[0].mxu0 %v2435
    %v2919 = vpop.f32.mrb[0].mxu0
    %v2920 = vadd.f32 %v2823, %v2919
    %v2921 = vpop.f32.mrb[0].mxu0
    %v2922 = vpop.f32.mrb[0].mxu0
    %v2923 = vadd.f32 %v2826, %v2922
    %v2924 = vpop.f32.mrb[0].mxu0
    %2925 = vmatprep.mubr.bf16.mxu0 %v2441
    %2926 = vmatmul.mubr.bf16.gmra.mrb[0].mxu0 %v2440
    %v2927 = vpop.f32.mrb[0].mxu0
    %v2928 = vadd.f32 %v2831, %v2927
    %v2929 = vpop.f32.mrb[0].mxu0
    %v2930 = vpop.f32.mrb[0].mxu0
    %v2931 = vadd.f32 %v2834, %v2930
    %v2932 = vpop.f32.mrb[0].mxu0
    %2933 = vmatprep.mubr.bf16.mxu0 %v2446
    %2934 = vmatmul.mubr.bf16.gmra.mrb[0].mxu0 %v2445
    %v2935 = vpop.f32.mrb[0].mxu0
    %v2936 = vadd.f32 %v2839, %v2935
    %v2937 = vpop.f32.mrb[0].mxu0
    %v2938 = vpop.f32.mrb[0].mxu0
    %v2939 = vadd.f32 %v2842, %v2938
    %v2940 = vpop.f32.mrb[0].mxu0
    %2941 = vmatprep.mubr.bf16.mxu0 %v2451
    %2942 = vmatmul.mubr.bf16.gmra.mrb[0].mxu0 %v2450
    %v2943 = vpop.f32.mrb[0].mxu0
    %v2944 = vadd.f32 %v2847, %v2943
    %v2945 = vpop.f32.mrb[0].mxu0
    %v2946 = vpop.f32.mrb[0].mxu0
    %v2947 = vadd.f32 %v2850, %v2946
    %v2948 = vpop.f32.mrb[0].mxu0
    %2949 = vmatprep.mubr.bf16.mxu0 %v2456
    %2950 = vmatmul.mubr.bf16.gmra.mrb[0].mxu0 %v2455
    %v2951 = vpop.f32.mrb[0].mxu0
    %v2952 = vadd.f32 %v2855, %v2951
    %v2953 = vpop.f32.mrb[0].mxu0
    %v2954 = vpop.f32.mrb[0].mxu0
    %v2955 = vadd.f32 %v2858, %v2954
    %v2956 = vpop.f32.mrb[0].mxu0
    %2957 = vmatprep.mubr.bf16.mxu0 %v2461
    %2958 = vmatmul.mubr.bf16.gmra.mrb[0].mxu0 %v2460
    %v2959 = vpop.f32.mrb[0].mxu0
    %v2960 = vadd.f32 %v2863, %v2959
    %v2961 = vpop.f32.mrb[0].mxu0
    %v2962 = vpop.f32.mrb[0].mxu0
    %v2963 = vadd.f32 %v2866, %v2962
    %v2964 = vpop.f32.mrb[0].mxu0
    %2965 = vmatprep.mubr.bf16.mxu0 %v2466
    %2966 = vmatmul.mubr.bf16.gmra.mrb[0].mxu0 %v2465
    %v2967 = vpop.f32.mrb[0].mxu0
    %v2968 = vadd.f32 %v2871, %v2967
    %v2969 = vpop.f32.mrb[0].mxu0
    %v2970 = vpop.f32.mrb[0].mxu0
    %v2971 = vadd.f32 %v2874, %v2970
    %v2972 = vpop.f32.mrb[0].mxu0
    %2973 = vdwg.mxu0
    %2974 = vmatprep.subr.bf16.mxu0 0
    %2975 = vmatpush1.bf16.msra.mxu0 %v2716
    %2976 = vmatprep.subr.bf16.mxu0 0
    %2977 = vmatpush1.bf16.msra.mxu0 %v2717
    %2978 = vmatprep.subr.bf16.mxu0 0
    %2979 = vmatpush1.bf16.msra.mxu0 %v2718
    %2980 = vmatprep.subr.bf16.mxu0 0
    %2981 = vmatpush1.bf16.msra.mxu0 %v2719
    %2982 = vmatprep.subr.bf16.mxu0 0
    %2983 = vmatpush1.bf16.msra.mxu0 0
    %2984 = vmatprep.subr.bf16.mxu0 0
    %2985 = vmatpush1.bf16.msra.mxu0 0
    %2986 = vmatprep.subr.bf16.mxu0 0
    %2987 = vmatpush1.bf16.msra.mxu0 0
    %2988 = vmatprep.subr.bf16.mxu0 0
    %2989 = vmatpush1.bf16.msra.mxu0 0
    %2990 = vmatprep.subr.bf16.mxu0 0
    %2991 = vmatpush1.bf16.msra.mxu0 0
    %2992 = vmatprep.subr.bf16.mxu0 0
    %2993 = vmatpush1.bf16.msra.mxu0 0
    %2994 = vmatprep.subr.bf16.mxu0 0
    %2995 = vmatpush1.bf16.msra.mxu0 0
    %2996 = vmatprep.subr.bf16.mxu0 0
    %2997 = vmatpush1.bf16.msra.mxu0 0
    %2998 = vmatprep.subr.bf16.mxu0 0
    %2999 = vmatpush1.bf16.msra.mxu0 0
    %3000 = vmatprep.subr.bf16.mxu0 0
    %3001 = vmatpush1.bf16.msra.mxu0 0
    %3002 = vmatprep.subr.bf16.mxu0 0
    %3003 = vmatpush1.bf16.msra.mxu0 0
    %3004 = vmatprep.subr.bf16.mxu0 0
    %3005 = vmatpush1.bf16.msra.mxu0 0
    %3006 = vmatprep.mubr.bf16.mxu0 0
    %3007 = vmatmul.mubr.bf16.gmra.mrb[0].mxu0 %v2757
    %v3008 = vpop.f32.mrb[0].mxu0
    %v3009 = vadd.f32 %v2912, %v3008
    %v3010 = vpop.f32.mrb[0].mxu0
    %v3011 = vpop.f32.mrb[0].mxu0
    %v3012 = vadd.f32 %v2915, %v3011
    %v3013 = vpop.f32.mrb[0].mxu0
    %3014 = vmatprep.mubr.bf16.mxu0 0
    %3015 = vmatmul.mubr.bf16.gmra.mrb[0].mxu0 %v2760
    %v3016 = vpop.f32.mrb[0].mxu0
    %v3017 = vadd.f32 %v2920, %v3016
    %v3018 = vpop.f32.mrb[0].mxu0
    %v3019 = vpop.f32.mrb[0].mxu0
    %v3020 = vadd.f32 %v2923, %v3019
    %v3021 = vpop.f32.mrb[0].mxu0
    %3022 = vmatprep.mubr.bf16.mxu0 0
    %3023 = vmatmul.mubr.bf16.gmra.mrb[0].mxu0 %v2763
    %v3024 = vpop.f32.mrb[0].mxu0
    %v3025 = vadd.f32 %v2928, %v3024
    %v3026 = vpop.f32.mrb[0].mxu0
    %v3027 = vpop.f32.mrb[0].mxu0
    %v3028 = vadd.f32 %v2931, %v3027
    %v3029 = vpop.f32.mrb[0].mxu0
    %3030 = vmatprep.mubr.bf16.mxu0 0
    %3031 = vmatmul.mubr.bf16.gmra.mrb[0].mxu0 %v2766
    %v3032 = vpop.f32.mrb[0].mxu0
    %v3033 = vadd.f32 %v2936, %v3032
    %v3034 = vpop.f32.mrb[0].mxu0
    %v3035 = vpop.f32.mrb[0].mxu0
    %v3036 = vadd.f32 %v2939, %v3035
    %v3037 = vpop.f32.mrb[0].mxu0
    %3038 = vmatprep.mubr.bf16.mxu0 0
    %3039 = vmatmul.mubr.bf16.gmra.mrb[0].mxu0 %v2769
    %v3040 = vpop.f32.mrb[0].mxu0
    %v3041 = vadd.f32 %v2944, %v3040
    %v3042 = vpop.f32.mrb[0].mxu0
    %v3043 = vpop.f32.mrb[0].mxu0
    %v3044 = vadd.f32 %v2947, %v3043
    %v3045 = vpop.f32.mrb[0].mxu0
    %3046 = vmatprep.mubr.bf16.mxu0 0
    %3047 = vmatmul.mubr.bf16.gmra.mrb[0].mxu0 %v2772
    %v3048 = vpop.f32.mrb[0].mxu0
    %v3049 = vadd.f32 %v2952, %v3048
    %v3050 = vpop.f32.mrb[0].mxu0
    %v3051 = vpop.f32.mrb[0].mxu0
    %v3052 = vadd.f32 %v2955, %v3051
    %v3053 = vpop.f32.mrb[0].mxu0
    %3054 = vmatprep.mubr.bf16.mxu0 0
    %3055 = vmatmul.mubr.bf16.gmra.mrb[0].mxu0 %v2775
    %v3056 = vpop.f32.mrb[0].mxu0
    %v3057 = vadd.f32 %v2960, %v3056
    %v3058 = vpop.f32.mrb[0].mxu0
    %v3059 = vpop.f32.mrb[0].mxu0
    %v3060 = vadd.f32 %v2963, %v3059
    %v3061 = vpop.f32.mrb[0].mxu0
    %3062 = vmatprep.mubr.bf16.mxu0 0
    %3063 = vmatmul.mubr.bf16.gmra.mrb[0].mxu0 %v2778
    %v3064 = vpop.f32.mrb[0].mxu0
    %v3065 = vadd.f32 %v2968, %v3064
    %v3066 = vpop.f32.mrb[0].mxu0
    %v3067 = vpop.f32.mrb[0].mxu0
    %v3068 = vadd.f32 %v2971, %v3067
    %v3069 = vpop.f32.mrb[0].mxu0
    %3070 = vdwg.mxu0
    %v3071 = vld [vmem:[%s2] sm:$0x1]
    %v3073 = vlaneseq
    %v3074 = vshrl.u32 %v3073, 7
    %v3075 = vsub.s32 0, %v3074
    %v3076 = vrot.slane %v3071, %v3075
    %v3078 = vmul.f32 %v3009, %v3076
    %v3079 = vmul.f32 %v3012, %v3076
    %v3080 = vmul.f32 %v3017, %v3076
    %v3081 = vmul.f32 %v3020, %v3076
    %v3082 = vmul.f32 %v3025, %v3076
    %v3083 = vmul.f32 %v3028, %v3076
    %v3084 = vmul.f32 %v3033, %v3076
    %v3085 = vmul.f32 %v3036, %v3076
    %v3086 = vmul.f32 %v3041, %v3076
    %v3087 = vmul.f32 %v3044, %v3076
    %v3088 = vmul.f32 %v3049, %v3076
    %v3089 = vmul.f32 %v3052, %v3076
    %v3090 = vmul.f32 %v3057, %v3076
    %v3091 = vmul.f32 %v3060, %v3076
    %v3092 = vmul.f32 %v3065, %v3076
    %v3093 = vmul.f32 %v3068, %v3076
    %v3094 = vld [vmem:[%s3] sm:$0x1]
    %v3096 = vlaneseq
    %v3097 = vshrl.u32 %v3096, 7
    %v3098 = vsub.s32 0, %v3097
    %v3099 = vrot.slane %v3094, %v3098
    %v3101 = vadd.f32 %v3078, %v3099
    %v3102 = vadd.f32 %v3079, %v3099
    %v3103 = vadd.f32 %v3080, %v3099
    %v3104 = vadd.f32 %v3081, %v3099
    %v3105 = vadd.f32 %v3082, %v3099
    %v3106 = vadd.f32 %v3083, %v3099
    %v3107 = vadd.f32 %v3084, %v3099
    %v3108 = vadd.f32 %v3085, %v3099
    %v3109 = vadd.f32 %v3086, %v3099
    %v3110 = vadd.f32 %v3087, %v3099
    %v3111 = vadd.f32 %v3088, %v3099
    %v3112 = vadd.f32 %v3089, %v3099
    %v3113 = vadd.f32 %v3090, %v3099
    %v3114 = vadd.f32 %v3091, %v3099
    %v3115 = vadd.f32 %v3092, %v3099
    %v3116 = vadd.f32 %v3093, %v3099
    %v3117 = vmax.f32 %v3101, 0.0
    %v3118 = vmax.f32 %v3102, 0.0
    %v3119 = vmax.f32 %v3103, 0.0
    %v3120 = vmax.f32 %v3104, 0.0
    %v3121 = vmax.f32 %v3105, 0.0
    %v3122 = vmax.f32 %v3106, 0.0
    %v3123 = vmax.f32 %v3107, 0.0
    %v3124 = vmax.f32 %v3108, 0.0
    %v3125 = vmax.f32 %v3109, 0.0
    %v3126 = vmax.f32 %v3110, 0.0
    %v3127 = vmax.f32 %v3111, 0.0
    %v3128 = vmax.f32 %v3112, 0.0
    %v3129 = vmax.f32 %v3113, 0.0
    %v3130 = vmax.f32 %v3114, 0.0
    %v3131 = vmax.f32 %v3115, 0.0
    %v3132 = vmax.f32 %v3116, 0.0
    %v3133 = vpack.c.bf16 %v3117, %v3117
    %v3134 = vpack.c.bf16 %v3118, %v3118
    %v3135 = vpack.c.bf16 %v3119, %v3119
    %v3136 = vpack.c.bf16 %v3120, %v3120
    %v3137 = vpack.c.bf16 %v3121, %v3121
    %v3138 = vpack.c.bf16 %v3122, %v3122
    %v3139 = vpack.c.bf16 %v3123, %v3123
    %v3140 = vpack.c.bf16 %v3124, %v3124
    %v3141 = vpack.c.bf16 %v3125, %v3125
    %v3142 = vpack.c.bf16 %v3126, %v3126
    %v3143 = vpack.c.bf16 %v3127, %v3127
    %v3144 = vpack.c.bf16 %v3128, %v3128
    %v3145 = vpack.c.bf16 %v3129, %v3129
    %v3146 = vpack.c.bf16 %v3130, %v3130
    %v3147 = vpack.c.bf16 %v3131, %v3131
    %v3148 = vpack.c.bf16 %v3132, %v3132
    %v3165 = vunpack.c.l.b16 %v3133
    %v3166 = vunpack.c.l.b16 %v3134
    %v3167 = vunpack.c.l.b16 %v3135
    %v3168 = vunpack.c.l.b16 %v3136
    %v3169 = vunpack.c.l.b16 %v3137
    %v3170 = vunpack.c.l.b16 %v3138
    %v3171 = vunpack.c.l.b16 %v3139
    %v3172 = vunpack.c.l.b16 %v3140
    %v3173 = vunpack.c.l.b16 %v3141
    %v3174 = vunpack.c.l.b16 %v3142
    %v3175 = vunpack.c.l.b16 %v3143
    %v3176 = vunpack.c.l.b16 %v3144
    %v3177 = vunpack.c.l.b16 %v3145
    %v3178 = vunpack.c.l.b16 %v3146
    %v3179 = vunpack.c.l.b16 %v3147
    %v3180 = vunpack.c.l.b16 %v3148
    %v3181 = vpack.c.b16 %v3165, %v3165
    %v3182 = vpack.c.b16 %v3166, %v3166
    %v3183 = vpack.c.b16 %v3167, %v3167
    %v3184 = vpack.c.b16 %v3168, %v3168
    %v3185 = vpack.c.b16 %v3169, %v3169
    %v3186 = vpack.c.b16 %v3170, %v3170
    %v3187 = vpack.c.b16 %v3171, %v3171
    %v3188 = vpack.c.b16 %v3172, %v3172
    %v3189 = vpack.c.b16 %v3173, %v3173
    %v3190 = vpack.c.b16 %v3174, %v3174
    %v3191 = vpack.c.b16 %v3175, %v3175
    %v3192 = vpack.c.b16 %v3176, %v3176
    %v3193 = vpack.c.b16 %v3177, %v3177
    %v3194 = vpack.c.b16 %v3178, %v3178
    %v3195 = vpack.c.b16 %v3179, %v3179
    %v3196 = vpack.c.b16 %v3180, %v3180
    %v3198 = vshrl.u32 %v3181, 16
    %v3200 = vrot.slane %v3198, 7
    %v3201 = vshll.u32 %v3181, 16
    %v3203 = vor.u32 %v3200, %v3201
    %v3204 = vrot.slane %v3200, 4
    %v3206 = vshrl.u32 %v3182, 16
    %v3208 = vrot.slane %v3206, 7
    %v3209 = vshll.u32 %v3182, 16
    %v3211 = vor.u32 %v3208, %v3209
    %v3212 = vrot.slane %v3208, 4
    %v3214 = vshrl.u32 %v3183, 16
    %v3216 = vrot.slane %v3214, 7
    %v3217 = vshll.u32 %v3183, 16
    %v3219 = vor.u32 %v3216, %v3217
    %v3220 = vrot.slane %v3216, 4
    %v3222 = vshrl.u32 %v3184, 16
    %v3224 = vrot.slane %v3222, 7
    %v3225 = vshll.u32 %v3184, 16
    %v3227 = vor.u32 %v3224, %v3225
    %v3228 = vrot.slane %v3224, 4
    %v3230 = vshrl.u32 %v3185, 16
    %v3232 = vrot.slane %v3230, 7
    %v3233 = vshll.u32 %v3185, 16
    %v3235 = vor.u32 %v3232, %v3233
    %v3236 = vrot.slane %v3232, 4
    %v3238 = vshrl.u32 %v3186, 16
    %v3240 = vrot.slane %v3238, 7
    %v3241 = vshll.u32 %v3186, 16
    %v3243 = vor.u32 %v3240, %v3241
    %v3244 = vrot.slane %v3240, 4
    %v3246 = vshrl.u32 %v3187, 16
    %v3248 = vrot.slane %v3246, 7
    %v3249 = vshll.u32 %v3187, 16
    %v3251 = vor.u32 %v3248, %v3249
    %v3252 = vrot.slane %v3248, 4
    %v3254 = vshrl.u32 %v3188, 16
    %v3256 = vrot.slane %v3254, 7
    %v3257 = vshll.u32 %v3188, 16
    %v3259 = vor.u32 %v3256, %v3257
    %v3260 = vrot.slane %v3256, 4
    %v3262 = vshrl.u32 %v3189, 16
    %v3264 = vrot.slane %v3262, 7
    %v3265 = vshll.u32 %v3189, 16
    %v3267 = vor.u32 %v3264, %v3265
    %v3268 = vrot.slane %v3264, 4
    %v3270 = vshrl.u32 %v3190, 16
    %v3272 = vrot.slane %v3270, 7
    %v3273 = vshll.u32 %v3190, 16
    %v3275 = vor.u32 %v3272, %v3273
    %v3276 = vrot.slane %v3272, 4
    %v3278 = vshrl.u32 %v3191, 16
    %v3280 = vrot.slane %v3278, 7
    %v3281 = vshll.u32 %v3191, 16
    %v3283 = vor.u32 %v3280, %v3281
    %v3284 = vrot.slane %v3280, 4
    %v3286 = vshrl.u32 %v3192, 16
    %v3288 = vrot.slane %v3286, 7
    %v3289 = vshll.u32 %v3192, 16
    %v3291 = vor.u32 %v3288, %v3289
    %v3292 = vrot.slane %v3288, 4
    %v3294 = vshrl.u32 %v3193, 16
    %v3296 = vrot.slane %v3294, 7
    %v3297 = vshll.u32 %v3193, 16
    %v3299 = vor.u32 %v3296, %v3297
    %v3300 = vrot.slane %v3296, 4
    %v3302 = vshrl.u32 %v3194, 16
    %v3304 = vrot.slane %v3302, 7
    %v3305 = vshll.u32 %v3194, 16
    %v3307 = vor.u32 %v3304, %v3305
    %v3308 = vrot.slane %v3304, 4
    %v3310 = vshrl.u32 %v3195, 16
    %v3312 = vrot.slane %v3310, 7
    %v3313 = vshll.u32 %v3195, 16
    %v3315 = vor.u32 %v3312, %v3313
    %v3316 = vrot.slane %v3312, 4
    %v3318 = vshrl.u32 %v3196, 16
    %v3320 = vrot.slane %v3318, 7
    %v3321 = vshll.u32 %v3196, 16
    %v3323 = vor.u32 %v3320, %v3321
    %v3324 = vrot.slane %v3320, 4
    %s3357 = scalar_lea.vmem [#allocation4], 8
    %vm3358 = vcmask 1043456
    %vm3359 = vmand %vm3358, %vm102
    %v3360 = vld [vmem:[%s3357] sm:$0xf]
    %v3361 = vsel %vm3359, %v3203, %v3360
    %3362 = vst [vmem:[%s3357] sm:$0xf] %v3361
    %v3363 = vld [vmem:[%s3357 + $0x4] sm:$0x1]
    %v3364 = vsel %vm174, %v3204, %v3363
    %3365 = vst [vmem:[%s3357 + $0x4] sm:$0x1] %v3364
    %v3366 = vld [vmem:[%s3357 + $0x8] sm:$0xf]
    %v3367 = vsel %vm3359, %v3211, %v3366
    %3368 = vst [vmem:[%s3357 + $0x8] sm:$0xf] %v3367
    %v3369 = vld [vmem:[%s3357 + $0xc] sm:$0x1]
    %v3370 = vsel %vm174, %v3212, %v3369
    %3371 = vst [vmem:[%s3357 + $0xc] sm:$0x1] %v3370
    %v3372 = vld [vmem:[%s3357 + $0x10] sm:$0xf]
    %v3373 = vsel %vm3359, %v3219, %v3372
    %3374 = vst [vmem:[%s3357 + $0x10] sm:$0xf] %v3373
    %v3375 = vld [vmem:[%s3357 + $0x14] sm:$0x1]
    %v3376 = vsel %vm174, %v3220, %v3375
    %3377 = vst [vmem:[%s3357 + $0x14] sm:$0x1] %v3376
    %v3378 = vld [vmem:[%s3357 + $0x18] sm:$0xf]
    %v3379 = vsel %vm3359, %v3227, %v3378
    %3380 = vst [vmem:[%s3357 + $0x18] sm:$0xf] %v3379
    %v3381 = vld [vmem:[%s3357 + $0x1c] sm:$0x1]
    %v3382 = vsel %vm174, %v3228, %v3381
    %3383 = vst [vmem:[%s3357 + $0x1c] sm:$0x1] %v3382
    %v3384 = vld [vmem:[%s3357 + $0x20] sm:$0xf]
    %v3385 = vsel %vm3359, %v3235, %v3384
    %3386 = vst [vmem:[%s3357 + $0x20] sm:$0xf] %v3385
    %v3387 = vld [vmem:[%s3357 + $0x24] sm:$0x1]
    %v3388 = vsel %vm174, %v3236, %v3387
    %3389 = vst [vmem:[%s3357 + $0x24] sm:$0x1] %v3388
    %v3390 = vld [vmem:[%s3357 + $0x28] sm:$0xf]
    %v3391 = vsel %vm3359, %v3243, %v3390
    %3392 = vst [vmem:[%s3357 + $0x28] sm:$0xf] %v3391
    %v3393 = vld [vmem:[%s3357 + $0x2c] sm:$0x1]
    %v3394 = vsel %vm174, %v3244, %v3393
    %3395 = vst [vmem:[%s3357 + $0x2c] sm:$0x1] %v3394
    %v3396 = vld [vmem:[%s3357 + $0x30] sm:$0xf]
    %v3397 = vsel %vm3359, %v3251, %v3396
    %3398 = vst [vmem:[%s3357 + $0x30] sm:$0xf] %v3397
    %v3399 = vld [vmem:[%s3357 + $0x34] sm:$0x1]
    %v3400 = vsel %vm174, %v3252, %v3399
    %3401 = vst [vmem:[%s3357 + $0x34] sm:$0x1] %v3400
    %v3402 = vld [vmem:[%s3357 + $0x38] sm:$0xf]
    %v3403 = vsel %vm3359, %v3259, %v3402
    %3404 = vst [vmem:[%s3357 + $0x38] sm:$0xf] %v3403
    %v3405 = vld [vmem:[%s3357 + $0x3c] sm:$0x1]
    %v3406 = vsel %vm174, %v3260, %v3405
    %3407 = vst [vmem:[%s3357 + $0x3c] sm:$0x1] %v3406
    %v3408 = vld [vmem:[%s3357 + $0x50] sm:$0xf]
    %v3409 = vsel %vm3359, %v3267, %v3408
    %3410 = vst [vmem:[%s3357 + $0x50] sm:$0xf] %v3409
    %v3411 = vld [vmem:[%s3357 + $0x54] sm:$0x1]
    %v3412 = vsel %vm174, %v3268, %v3411
    %3413 = vst [vmem:[%s3357 + $0x54] sm:$0x1] %v3412
    %v3414 = vld [vmem:[%s3357 + $0x58] sm:$0xf]
    %v3415 = vsel %vm3359, %v3275, %v3414
    %3416 = vst [vmem:[%s3357 + $0x58] sm:$0xf] %v3415
    %v3417 = vld [vmem:[%s3357 + $0x5c] sm:$0x1]
    %v3418 = vsel %vm174, %v3276, %v3417
    %3419 = vst [vmem:[%s3357 + $0x5c] sm:$0x1] %v3418
    %v3420 = vld [vmem:[%s3357 + $0x60] sm:$0xf]
    %v3421 = vsel %vm3359, %v3283, %v3420
    %3422 = vst [vmem:[%s3357 + $0x60] sm:$0xf] %v3421
    %v3423 = vld [vmem:[%s3357 + $0x64] sm:$0x1]
    %v3424 = vsel %vm174, %v3284, %v3423
    %3425 = vst [vmem:[%s3357 + $0x64] sm:$0x1] %v3424
    %v3426 = vld [vmem:[%s3357 + $0x68] sm:$0xf]
    %v3427 = vsel %vm3359, %v3291, %v3426
    %3428 = vst [vmem:[%s3357 + $0x68] sm:$0xf] %v3427
    %v3429 = vld [vmem:[%s3357 + $0x6c] sm:$0x1]
    %v3430 = vsel %vm174, %v3292, %v3429
    %3431 = vst [vmem:[%s3357 + $0x6c] sm:$0x1] %v3430
    %v3432 = vld [vmem:[%s3357 + $0x70] sm:$0xf]
    %v3433 = vsel %vm3359, %v3299, %v3432
    %3434 = vst [vmem:[%s3357 + $0x70] sm:$0xf] %v3433
    %v3435 = vld [vmem:[%s3357 + $0x74] sm:$0x1]
    %v3436 = vsel %vm174, %v3300, %v3435
    %3437 = vst [vmem:[%s3357 + $0x74] sm:$0x1] %v3436
    %v3438 = vld [vmem:[%s3357 + $0x78] sm:$0xf]
    %v3439 = vsel %vm3359, %v3307, %v3438
    %3440 = vst [vmem:[%s3357 + $0x78] sm:$0xf] %v3439
    %v3441 = vld [vmem:[%s3357 + $0x7c] sm:$0x1]
    %v3442 = vsel %vm174, %v3308, %v3441
    %3443 = vst [vmem:[%s3357 + $0x7c] sm:$0x1] %v3442
    %v3444 = vld [vmem:[%s3357 + $0x80] sm:$0xf]
    %v3445 = vsel %vm3359, %v3315, %v3444
    %3446 = vst [vmem:[%s3357 + $0x80] sm:$0xf] %v3445
    %v3447 = vld [vmem:[%s3357 + $0x84] sm:$0x1]
    %v3448 = vsel %vm174, %v3316, %v3447
    %3449 = vst [vmem:[%s3357 + $0x84] sm:$0x1] %v3448
    %v3450 = vld [vmem:[%s3357 + $0x88] sm:$0xf]
    %v3451 = vsel %vm3359, %v3323, %v3450
    %3452 = vst [vmem:[%s3357 + $0x88] sm:$0xf] %v3451
    %v3453 = vld [vmem:[%s3357 + $0x8c] sm:$0x1]
    %v3454 = vsel %vm174, %v3324, %v3453
    %3455 = vst [vmem:[%s3357 + $0x8c] sm:$0x1] %v3454
    %v3456 = vld [vmem:[#allocation4] sm:$0xf]
    %v3457 = vld [vmem:[#allocation4 + $0x8] sm:$0xf]
    %v3458 = vld [vmem:[#allocation4 + $0x10] sm:$0xf]
    %v3459 = vld [vmem:[#allocation4 + $0x18] sm:$0xf]
    %v3460 = vld [vmem:[#allocation4 + $0x20] sm:$0xf]
    %v3461 = vld [vmem:[#allocation4 + $0x28] sm:$0xf]
    %v3462 = vld [vmem:[#allocation4 + $0x30] sm:$0xf]
    %v3463 = vld [vmem:[#allocation4 + $0x38] sm:$0xf]
    %v3464 = vld [vmem:[#allocation4 + $0x50] sm:$0xf]
    %v3465 = vld [vmem:[#allocation4 + $0x58] sm:$0xf]
    %v3466 = vld [vmem:[#allocation4 + $0x60] sm:$0xf]
    %v3467 = vld [vmem:[#allocation4 + $0x68] sm:$0xf]
    %v3468 = vld [vmem:[#allocation4 + $0x70] sm:$0xf]
    %v3469 = vld [vmem:[#allocation4 + $0x78] sm:$0xf]
    %v3470 = vld [vmem:[#allocation4 + $0x80] sm:$0xf]
    %v3471 = vld [vmem:[#allocation4 + $0x88] sm:$0xf]
    %v3488 = vunpack.c.l.b16 %v3456
    %v3489 = vunpack.c.l.b16 %v3457
    %v3490 = vunpack.c.l.b16 %v3458
    %v3491 = vunpack.c.l.b16 %v3459
    %v3492 = vunpack.c.l.b16 %v3460
    %v3493 = vunpack.c.l.b16 %v3461
    %v3494 = vunpack.c.l.b16 %v3462
    %v3495 = vunpack.c.l.b16 %v3463
    %v3496 = vunpack.c.l.b16 %v3464
    %v3497 = vunpack.c.l.b16 %v3465
    %v3498 = vunpack.c.l.b16 %v3466
    %v3499 = vunpack.c.l.b16 %v3467
    %v3500 = vunpack.c.l.b16 %v3468
    %v3501 = vunpack.c.l.b16 %v3469
    %v3502 = vunpack.c.l.b16 %v3470
    %v3503 = vunpack.c.l.b16 %v3471
    %v3504 = vpack.c.b16 %v3489, %v3488
    %v3505 = vpack.c.b16 %v3491, %v3490
    %v3506 = vpack.c.b16 %v3493, %v3492
    %v3507 = vpack.c.b16 %v3495, %v3494
    %v3508 = vpack.c.b16 %v3497, %v3496
    %v3509 = vpack.c.b16 %v3499, %v3498
    %v3510 = vpack.c.b16 %v3501, %v3500
    %v3511 = vpack.c.b16 %v3503, %v3502
    %3520 = vst [vmem:[#allocation5] sm:$0xff] %v3504
    %3521 = vst [vmem:[#allocation5 + $0x48] sm:$0xff] %v3505
    %3522 = vst [vmem:[#allocation5 + $0x90] sm:$0xff] %v3506
    %3523 = vst [vmem:[#allocation5 + $0xd8] sm:$0xff] %v3507
    %3524 = vst [vmem:[#allocation5 + $0x120] sm:$0xff] %v3508
    %3525 = vst [vmem:[#allocation5 + $0x168] sm:$0xff] %v3509
    %3526 = vst [vmem:[#allocation5 + $0x1b0] sm:$0xff] %v3510
    %3527 = vst [vmem:[#allocation5 + $0x1f8] sm:$0xff] %v3511
    %v3528 = vld [vmem:[#allocation4] sm:$0xf]
    %v3529 = vld [vmem:[#allocation4 + $0x4] sm:$0x1]
    %v3530 = vld [vmem:[#allocation4 + $0x8] sm:$0xf]
    %v3531 = vld [vmem:[#allocation4 + $0xc] sm:$0x1]
    %v3532 = vld [vmem:[#allocation4 + $0x10] sm:$0xf]
    %v3533 = vld [vmem:[#allocation4 + $0x14] sm:$0x1]
    %v3534 = vld [vmem:[#allocation4 + $0x18] sm:$0xf]
    %v3535 = vld [vmem:[#allocation4 + $0x1c] sm:$0x1]
    %v3536 = vld [vmem:[#allocation4 + $0x20] sm:$0xf]
    %v3537 = vld [vmem:[#allocation4 + $0x24] sm:$0x1]
    %v3538 = vld [vmem:[#allocation4 + $0x28] sm:$0xf]
    %v3539 = vld [vmem:[#allocation4 + $0x2c] sm:$0x1]
    %v3540 = vld [vmem:[#allocation4 + $0x30] sm:$0xf]
    %v3541 = vld [vmem:[#allocation4 + $0x34] sm:$0x1]
    %v3542 = vld [vmem:[#allocation4 + $0x38] sm:$0xf]
    %v3543 = vld [vmem:[#allocation4 + $0x3c] sm:$0x1]
    %v3544 = vld [vmem:[#allocation4 + $0x50] sm:$0xf]
    %v3545 = vld [vmem:[#allocation4 + $0x54] sm:$0x1]
    %v3546 = vld [vmem:[#allocation4 + $0x58] sm:$0xf]
    %v3547 = vld [vmem:[#allocation4 + $0x5c] sm:$0x1]
    %v3548 = vld [vmem:[#allocation4 + $0x60] sm:$0xf]
    %v3549 = vld [vmem:[#allocation4 + $0x64] sm:$0x1]
    %v3550 = vld [vmem:[#allocation4 + $0x68] sm:$0xf]
    %v3551 = vld [vmem:[#allocation4 + $0x6c] sm:$0x1]
    %v3552 = vld [vmem:[#allocation4 + $0x70] sm:$0xf]
    %v3553 = vld [vmem:[#allocation4 + $0x74] sm:$0x1]
    %v3554 = vld [vmem:[#allocation4 + $0x78] sm:$0xf]
    %v3555 = vld [vmem:[#allocation4 + $0x7c] sm:$0x1]
    %v3556 = vld [vmem:[#allocation4 + $0x80] sm:$0xf]
    %v3557 = vld [vmem:[#allocation4 + $0x84] sm:$0x1]
    %v3558 = vld [vmem:[#allocation4 + $0x88] sm:$0xf]
    %v3559 = vld [vmem:[#allocation4 + $0x8c] sm:$0x1]
    %v3561 = vshrl.u32 %v3528, 16
    %v3563 = vrot.slane %v3561, 4
    %v3564 = vshll.u32 %v3528, 16
    %v3566 = vrot.slane %v3564, 5
    %v3567 = vor.u32 %v3563, %v3566
    %v3568 = vrot.slane %v3567, 4
    %v3570 = vshll.u32 %v3529, 16
    %v3572 = vrot.slane %v3570, 5
    %v3573 = vsel %vm854, %v3568, %v3572
    %v3575 = vshrl.u32 %v3530, 16
    %v3577 = vrot.slane %v3575, 4
    %v3578 = vshll.u32 %v3530, 16
    %v3580 = vrot.slane %v3578, 5
    %v3581 = vor.u32 %v3577, %v3580
    %v3582 = vrot.slane %v3581, 4
    %v3584 = vshll.u32 %v3531, 16
    %v3586 = vrot.slane %v3584, 5
    %v3587 = vsel %vm854, %v3582, %v3586
    %v3589 = vshrl.u32 %v3532, 16
    %v3591 = vrot.slane %v3589, 4
    %v3592 = vshll.u32 %v3532, 16
    %v3594 = vrot.slane %v3592, 5
    %v3595 = vor.u32 %v3591, %v3594
    %v3596 = vrot.slane %v3595, 4
    %v3598 = vshll.u32 %v3533, 16
    %v3600 = vrot.slane %v3598, 5
    %v3601 = vsel %vm854, %v3596, %v3600
    %v3603 = vshrl.u32 %v3534, 16
    %v3605 = vrot.slane %v3603, 4
    %v3606 = vshll.u32 %v3534, 16
    %v3608 = vrot.slane %v3606, 5
    %v3609 = vor.u32 %v3605, %v3608
    %v3610 = vrot.slane %v3609, 4
    %v3612 = vshll.u32 %v3535, 16
    %v3614 = vrot.slane %v3612, 5
    %v3615 = vsel %vm854, %v3610, %v3614
    %v3617 = vshrl.u32 %v3536, 16
    %v3619 = vrot.slane %v3617, 4
    %v3620 = vshll.u32 %v3536, 16
    %v3622 = vrot.slane %v3620, 5
    %v3623 = vor.u32 %v3619, %v3622
    %v3624 = vrot.slane %v3623, 4
    %v3626 = vshll.u32 %v3537, 16
    %v3628 = vrot.slane %v3626, 5
    %v3629 = vsel %vm854, %v3624, %v3628
    %v3631 = vshrl.u32 %v3538, 16
    %v3633 = vrot.slane %v3631, 4
    %v3634 = vshll.u32 %v3538, 16
    %v3636 = vrot.slane %v3634, 5
    %v3637 = vor.u32 %v3633, %v3636
    %v3638 = vrot.slane %v3637, 4
    %v3640 = vshll.u32 %v3539, 16
    %v3642 = vrot.slane %v3640, 5
    %v3643 = vsel %vm854, %v3638, %v3642
    %v3645 = vshrl.u32 %v3540, 16
    %v3647 = vrot.slane %v3645, 4
    %v3648 = vshll.u32 %v3540, 16
    %v3650 = vrot.slane %v3648, 5
    %v3651 = vor.u32 %v3647, %v3650
    %v3652 = vrot.slane %v3651, 4
    %v3654 = vshll.u32 %v3541, 16
    %v3656 = vrot.slane %v3654, 5
    %v3657 = vsel %vm854, %v3652, %v3656
    %v3659 = vshrl.u32 %v3542, 16
    %v3661 = vrot.slane %v3659, 4
    %v3662 = vshll.u32 %v3542, 16
    %v3664 = vrot.slane %v3662, 5
    %v3665 = vor.u32 %v3661, %v3664
    %v3666 = vrot.slane %v3665, 4
    %v3668 = vshll.u32 %v3543, 16
    %v3670 = vrot.slane %v3668, 5
    %v3671 = vsel %vm854, %v3666, %v3670
    %v3673 = vshrl.u32 %v3544, 16
    %v3675 = vrot.slane %v3673, 4
    %v3676 = vshll.u32 %v3544, 16
    %v3678 = vrot.slane %v3676, 5
    %v3679 = vor.u32 %v3675, %v3678
    %v3680 = vrot.slane %v3679, 4
    %v3682 = vshll.u32 %v3545, 16
    %v3684 = vrot.slane %v3682, 5
    %v3685 = vsel %vm854, %v3680, %v3684
    %v3687 = vshrl.u32 %v3546, 16
    %v3689 = vrot.slane %v3687, 4
    %v3690 = vshll.u32 %v3546, 16
    %v3692 = vrot.slane %v3690, 5
    %v3693 = vor.u32 %v3689, %v3692
    %v3694 = vrot.slane %v3693, 4
    %v3696 = vshll.u32 %v3547, 16
    %v3698 = vrot.slane %v3696, 5
    %v3699 = vsel %vm854, %v3694, %v3698
    %v3701 = vshrl.u32 %v3548, 16
    %v3703 = vrot.slane %v3701, 4
    %v3704 = vshll.u32 %v3548, 16
    %v3706 = vrot.slane %v3704, 5
    %v3707 = vor.u32 %v3703, %v3706
    %v3708 = vrot.slane %v3707, 4
    %v3710 = vshll.u32 %v3549, 16
    %v3712 = vrot.slane %v3710, 5
    %v3713 = vsel %vm854, %v3708, %v3712
    %v3715 = vshrl.u32 %v3550, 16
    %v3717 = vrot.slane %v3715, 4
    %v3718 = vshll.u32 %v3550, 16
    %v3720 = vrot.slane %v3718, 5
    %v3721 = vor.u32 %v3717, %v3720
    %v3722 = vrot.slane %v3721, 4
    %v3724 = vshll.u32 %v3551, 16
    %v3726 = vrot.slane %v3724, 5
    %v3727 = vsel %vm854, %v3722, %v3726
    %v3729 = vshrl.u32 %v3552, 16
    %v3731 = vrot.slane %v3729, 4
    %v3732 = vshll.u32 %v3552, 16
    %v3734 = vrot.slane %v3732, 5
    %v3735 = vor.u32 %v3731, %v3734
    %v3736 = vrot.slane %v3735, 4
    %v3738 = vshll.u32 %v3553, 16
    %v3740 = vrot.slane %v3738, 5
    %v3741 = vsel %vm854, %v3736, %v3740
    %v3743 = vshrl.u32 %v3554, 16
    %v3745 = vrot.slane %v3743, 4
    %v3746 = vshll.u32 %v3554, 16
    %v3748 = vrot.slane %v3746, 5
    %v3749 = vor.u32 %v3745, %v3748
    %v3750 = vrot.slane %v3749, 4
    %v3752 = vshll.u32 %v3555, 16
    %v3754 = vrot.slane %v3752, 5
    %v3755 = vsel %vm854, %v3750, %v3754
    %v3757 = vshrl.u32 %v3556, 16
    %v3759 = vrot.slane %v3757, 4
    %v3760 = vshll.u32 %v3556, 16
    %v3762 = vrot.slane %v3760, 5
    %v3763 = vor.u32 %v3759, %v3762
    %v3764 = vrot.slane %v3763, 4
    %v3766 = vshll.u32 %v3557, 16
    %v3768 = vrot.slane %v3766, 5
    %v3769 = vsel %vm854, %v3764, %v3768
    %v3771 = vshrl.u32 %v3558, 16
    %v3773 = vrot.slane %v3771, 4
    %v3774 = vshll.u32 %v3558, 16
    %v3776 = vrot.slane %v3774, 5
    %v3777 = vor.u32 %v3773, %v3776
    %v3778 = vrot.slane %v3777, 4
    %v3780 = vshll.u32 %v3559, 16
    %v3782 = vrot.slane %v3780, 5
    %v3783 = vsel %vm854, %v3778, %v3782
    %v3784 = vunpack.c.l.b16 %v3573
    %v3785 = vunpack.c.l.b16 %v3587
    %v3786 = vunpack.c.l.b16 %v3601
    %v3787 = vunpack.c.l.b16 %v3615
    %v3788 = vunpack.c.l.b16 %v3629
    %v3789 = vunpack.c.l.b16 %v3643
    %v3790 = vunpack.c.l.b16 %v3657
    %v3791 = vunpack.c.l.b16 %v3671
    %v3792 = vunpack.c.l.b16 %v3685
    %v3793 = vunpack.c.l.b16 %v3699
    %v3794 = vunpack.c.l.b16 %v3713
    %v3795 = vunpack.c.l.b16 %v3727
    %v3796 = vunpack.c.l.b16 %v3741
    %v3797 = vunpack.c.l.b16 %v3755
    %v3798 = vunpack.c.l.b16 %v3769
    %v3799 = vunpack.c.l.b16 %v3783
    %v3800 = vpack.c.b16 %v3785, %v3784
    %v3801 = vpack.c.b16 %v3787, %v3786
    %v3802 = vpack.c.b16 %v3789, %v3788
    %v3803 = vpack.c.b16 %v3791, %v3790
    %v3804 = vpack.c.b16 %v3793, %v3792
    %v3805 = vpack.c.b16 %v3795, %v3794
    %v3806 = vpack.c.b16 %v3797, %v3796
    %v3807 = vpack.c.b16 %v3799, %v3798
    %3816 = vst [vmem:[#allocation5 + $0x8] sm:$0xff] %v3800
    %3817 = vst [vmem:[#allocation5 + $0x50] sm:$0xff] %v3801
    %3818 = vst [vmem:[#allocation5 + $0x98] sm:$0xff] %v3802
    %3819 = vst [vmem:[#allocation5 + $0xe0] sm:$0xff] %v3803
    %3820 = vst [vmem:[#allocation5 + $0x128] sm:$0xff] %v3804
    %3821 = vst [vmem:[#allocation5 + $0x170] sm:$0xff] %v3805
    %3822 = vst [vmem:[#allocation5 + $0x1b8] sm:$0xff] %v3806
    %3823 = vst [vmem:[#allocation5 + $0x200] sm:$0xff] %v3807
    %v3824 = vld [vmem:[#allocation4] sm:$0xe]
    %v3825 = vld [vmem:[#allocation4 + $0x4] sm:$0x1]
    %v3826 = vld [vmem:[#allocation4 + $0x8] sm:$0xe]
    %v3827 = vld [vmem:[#allocation4 + $0xc] sm:$0x1]
    %v3828 = vld [vmem:[#allocation4 + $0x10] sm:$0xe]
    %v3829 = vld [vmem:[#allocation4 + $0x14] sm:$0x1]
    %v3830 = vld [vmem:[#allocation4 + $0x18] sm:$0xe]
    %v3831 = vld [vmem:[#allocation4 + $0x1c] sm:$0x1]
    %v3832 = vld [vmem:[#allocation4 + $0x20] sm:$0xe]
    %v3833 = vld [vmem:[#allocation4 + $0x24] sm:$0x1]
    %v3834 = vld [vmem:[#allocation4 + $0x28] sm:$0xe]
    %v3835 = vld [vmem:[#allocation4 + $0x2c] sm:$0x1]
    %v3836 = vld [vmem:[#allocation4 + $0x30] sm:$0xe]
    %v3837 = vld [vmem:[#allocation4 + $0x34] sm:$0x1]
    %v3838 = vld [vmem:[#allocation4 + $0x38] sm:$0xe]
    %v3839 = vld [vmem:[#allocation4 + $0x3c] sm:$0x1]
    %v3840 = vld [vmem:[#allocation4 + $0x50] sm:$0xe]
    %v3841 = vld [vmem:[#allocation4 + $0x54] sm:$0x1]
    %v3842 = vld [vmem:[#allocation4 + $0x58] sm:$0xe]
    %v3843 = vld [vmem:[#allocation4 + $0x5c] sm:$0x1]
    %v3844 = vld [vmem:[#allocation4 + $0x60] sm:$0xe]
    %v3845 = vld [vmem:[#allocation4 + $0x64] sm:$0x1]
    %v3846 = vld [vmem:[#allocation4 + $0x68] sm:$0xe]
    %v3847 = vld [vmem:[#allocation4 + $0x6c] sm:$0x1]
    %v3848 = vld [vmem:[#allocation4 + $0x70] sm:$0xe]
    %v3849 = vld [vmem:[#allocation4 + $0x74] sm:$0x1]
    %v3850 = vld [vmem:[#allocation4 + $0x78] sm:$0xe]
    %v3851 = vld [vmem:[#allocation4 + $0x7c] sm:$0x1]
    %v3852 = vld [vmem:[#allocation4 + $0x80] sm:$0xe]
    %v3853 = vld [vmem:[#allocation4 + $0x84] sm:$0x1]
    %v3854 = vld [vmem:[#allocation4 + $0x88] sm:$0xe]
    %v3855 = vld [vmem:[#allocation4 + $0x8c] sm:$0x1]
    %v3888 = vrot.slane %v3824, 5
    %v3889 = vrot.slane %v3888, 4
    %v3890 = vrot.slane %v3825, 5
    %v3891 = vsel %vm1202, %v3889, %v3890
    %v3892 = vrot.slane %v3826, 5
    %v3893 = vrot.slane %v3892, 4
    %v3894 = vrot.slane %v3827, 5
    %v3895 = vsel %vm1202, %v3893, %v3894
    %v3896 = vrot.slane %v3828, 5
    %v3897 = vrot.slane %v3896, 4
    %v3898 = vrot.slane %v3829, 5
    %v3899 = vsel %vm1202, %v3897, %v3898
    %v3900 = vrot.slane %v3830, 5
    %v3901 = vrot.slane %v3900, 4
    %v3902 = vrot.slane %v3831, 5
    %v3903 = vsel %vm1202, %v3901, %v3902
    %v3904 = vrot.slane %v3832, 5
    %v3905 = vrot.slane %v3904, 4
    %v3906 = vrot.slane %v3833, 5
    %v3907 = vsel %vm1202, %v3905, %v3906
    %v3908 = vrot.slane %v3834, 5
    %v3909 = vrot.slane %v3908, 4
    %v3910 = vrot.slane %v3835, 5
    %v3911 = vsel %vm1202, %v3909, %v3910
    %v3912 = vrot.slane %v3836, 5
    %v3913 = vrot.slane %v3912, 4
    %v3914 = vrot.slane %v3837, 5
    %v3915 = vsel %vm1202, %v3913, %v3914
    %v3916 = vrot.slane %v3838, 5
    %v3917 = vrot.slane %v3916, 4
    %v3918 = vrot.slane %v3839, 5
    %v3919 = vsel %vm1202, %v3917, %v3918
    %v3920 = vrot.slane %v3840, 5
    %v3921 = vrot.slane %v3920, 4
    %v3922 = vrot.slane %v3841, 5
    %v3923 = vsel %vm1202, %v3921, %v3922
    %v3924 = vrot.slane %v3842, 5
    %v3925 = vrot.slane %v3924, 4
    %v3926 = vrot.slane %v3843, 5
    %v3927 = vsel %vm1202, %v3925, %v3926
    %v3928 = vrot.slane %v3844, 5
    %v3929 = vrot.slane %v3928, 4
    %v3930 = vrot.slane %v3845, 5
    %v3931 = vsel %vm1202, %v3929, %v3930
    %v3932 = vrot.slane %v3846, 5
    %v3933 = vrot.slane %v3932, 4
    %v3934 = vrot.slane %v3847, 5
    %v3935 = vsel %vm1202, %v3933, %v3934
    %v3936 = vrot.slane %v3848, 5
    %v3937 = vrot.slane %v3936, 4
    %v3938 = vrot.slane %v3849, 5
    %v3939 = vsel %vm1202, %v3937, %v3938
    %v3940 = vrot.slane %v3850, 5
    %v3941 = vrot.slane %v3940, 4
    %v3942 = vrot.slane %v3851, 5
    %v3943 = vsel %vm1202, %v3941, %v3942
    %v3944 = vrot.slane %v3852, 5
    %v3945 = vrot.slane %v3944, 4
    %v3946 = vrot.slane %v3853, 5
    %v3947 = vsel %vm1202, %v3945, %v3946
    %v3948 = vrot.slane %v3854, 5
    %v3949 = vrot.slane %v3948, 4
    %v3950 = vrot.slane %v3855, 5
    %v3951 = vsel %vm1202, %v3949, %v3950
    %v3952 = vunpack.c.l.b16 %v3891
    %v3953 = vunpack.c.l.b16 %v3895
    %v3954 = vunpack.c.l.b16 %v3899
    %v3955 = vunpack.c.l.b16 %v3903
    %v3956 = vunpack.c.l.b16 %v3907
    %v3957 = vunpack.c.l.b16 %v3911
    %v3958 = vunpack.c.l.b16 %v3915
    %v3959 = vunpack.c.l.b16 %v3919
    %v3960 = vunpack.c.l.b16 %v3923
    %v3961 = vunpack.c.l.b16 %v3927
    %v3962 = vunpack.c.l.b16 %v3931
    %v3963 = vunpack.c.l.b16 %v3935
    %v3964 = vunpack.c.l.b16 %v3939
    %v3965 = vunpack.c.l.b16 %v3943
    %v3966 = vunpack.c.l.b16 %v3947
    %v3967 = vunpack.c.l.b16 %v3951
    %v3968 = vpack.c.b16 %v3953, %v3952
    %v3969 = vpack.c.b16 %v3955, %v3954
    %v3970 = vpack.c.b16 %v3957, %v3956
    %v3971 = vpack.c.b16 %v3959, %v3958
    %v3972 = vpack.c.b16 %v3961, %v3960
    %v3973 = vpack.c.b16 %v3963, %v3962
    %v3974 = vpack.c.b16 %v3965, %v3964
    %v3975 = vpack.c.b16 %v3967, %v3966
    %3984 = vst [vmem:[#allocation5 + $0x10] sm:$0xff] %v3968
    %3985 = vst [vmem:[#allocation5 + $0x58] sm:$0xff] %v3969
    %3986 = vst [vmem:[#allocation5 + $0xa0] sm:$0xff] %v3970
    %3987 = vst [vmem:[#allocation5 + $0xe8] sm:$0xff] %v3971
    %3988 = vst [vmem:[#allocation5 + $0x130] sm:$0xff] %v3972
    %3989 = vst [vmem:[#allocation5 + $0x178] sm:$0xff] %v3973
    %3990 = vst [vmem:[#allocation5 + $0x1c0] sm:$0xff] %v3974
    %3991 = vst [vmem:[#allocation5 + $0x208] sm:$0xff] %v3975
    %v3992 = vld [vmem:[%s3357] sm:$0xf]
    %v3993 = vld [vmem:[%s3357 + $0x8] sm:$0xf]
    %v3994 = vld [vmem:[%s3357 + $0x10] sm:$0xf]
    %v3995 = vld [vmem:[%s3357 + $0x18] sm:$0xf]
    %v3996 = vld [vmem:[%s3357 + $0x20] sm:$0xf]
    %v3997 = vld [vmem:[%s3357 + $0x28] sm:$0xf]
    %v3998 = vld [vmem:[%s3357 + $0x30] sm:$0xf]
    %v3999 = vld [vmem:[%s3357 + $0x38] sm:$0xf]
    %v4000 = vld [vmem:[%s3357 + $0x50] sm:$0xf]
    %v4001 = vld [vmem:[%s3357 + $0x58] sm:$0xf]
    %v4002 = vld [vmem:[%s3357 + $0x60] sm:$0xf]
    %v4003 = vld [vmem:[%s3357 + $0x68] sm:$0xf]
    %v4004 = vld [vmem:[%s3357 + $0x70] sm:$0xf]
    %v4005 = vld [vmem:[%s3357 + $0x78] sm:$0xf]
    %v4006 = vld [vmem:[%s3357 + $0x80] sm:$0xf]
    %v4007 = vld [vmem:[%s3357 + $0x88] sm:$0xf]
    %v4024 = vunpack.c.l.b16 %v3992
    %v4025 = vunpack.c.l.b16 %v3993
    %v4026 = vunpack.c.l.b16 %v3994
    %v4027 = vunpack.c.l.b16 %v3995
    %v4028 = vunpack.c.l.b16 %v3996
    %v4029 = vunpack.c.l.b16 %v3997
    %v4030 = vunpack.c.l.b16 %v3998
    %v4031 = vunpack.c.l.b16 %v3999
    %v4032 = vunpack.c.l.b16 %v4000
    %v4033 = vunpack.c.l.b16 %v4001
    %v4034 = vunpack.c.l.b16 %v4002
    %v4035 = vunpack.c.l.b16 %v4003
    %v4036 = vunpack.c.l.b16 %v4004
    %v4037 = vunpack.c.l.b16 %v4005
    %v4038 = vunpack.c.l.b16 %v4006
    %v4039 = vunpack.c.l.b16 %v4007
    %v4040 = vpack.c.b16 %v4025, %v4024
    %v4041 = vpack.c.b16 %v4027, %v4026
    %v4042 = vpack.c.b16 %v4029, %v4028
    %v4043 = vpack.c.b16 %v4031, %v4030
    %v4044 = vpack.c.b16 %v4033, %v4032
    %v4045 = vpack.c.b16 %v4035, %v4034
    %v4046 = vpack.c.b16 %v4037, %v4036
    %v4047 = vpack.c.b16 %v4039, %v4038
    %4056 = vst [vmem:[#allocation5 + $0x18] sm:$0xff] %v4040
    %4057 = vst [vmem:[#allocation5 + $0x60] sm:$0xff] %v4041
    %4058 = vst [vmem:[#allocation5 + $0xa8] sm:$0xff] %v4042
    %4059 = vst [vmem:[#allocation5 + $0xf0] sm:$0xff] %v4043
    %4060 = vst [vmem:[#allocation5 + $0x138] sm:$0xff] %v4044
    %4061 = vst [vmem:[#allocation5 + $0x180] sm:$0xff] %v4045
    %4062 = vst [vmem:[#allocation5 + $0x1c8] sm:$0xff] %v4046
    %4063 = vst [vmem:[#allocation5 + $0x210] sm:$0xff] %v4047
    %v4064 = vld [vmem:[%s3357] sm:$0xf]
    %v4065 = vld [vmem:[%s3357 + $0x4] sm:$0x1]
    %v4066 = vld [vmem:[%s3357 + $0x8] sm:$0xf]
    %v4067 = vld [vmem:[%s3357 + $0xc] sm:$0x1]
    %v4068 = vld [vmem:[%s3357 + $0x10] sm:$0xf]
    %v4069 = vld [vmem:[%s3357 + $0x14] sm:$0x1]
    %v4070 = vld [vmem:[%s3357 + $0x18] sm:$0xf]
    %v4071 = vld [vmem:[%s3357 + $0x1c] sm:$0x1]
    %v4072 = vld [vmem:[%s3357 + $0x20] sm:$0xf]
    %v4073 = vld [vmem:[%s3357 + $0x24] sm:$0x1]
    %v4074 = vld [vmem:[%s3357 + $0x28] sm:$0xf]
    %v4075 = vld [vmem:[%s3357 + $0x2c] sm:$0x1]
    %v4076 = vld [vmem:[%s3357 + $0x30] sm:$0xf]
    %v4077 = vld [vmem:[%s3357 + $0x34] sm:$0x1]
    %v4078 = vld [vmem:[%s3357 + $0x38] sm:$0xf]
    %v4079 = vld [vmem:[%s3357 + $0x3c] sm:$0x1]
    %v4080 = vld [vmem:[%s3357 + $0x50] sm:$0xf]
    %v4081 = vld [vmem:[%s3357 + $0x54] sm:$0x1]
    %v4082 = vld [vmem:[%s3357 + $0x58] sm:$0xf]
    %v4083 = vld [vmem:[%s3357 + $0x5c] sm:$0x1]
    %v4084 = vld [vmem:[%s3357 + $0x60] sm:$0xf]
    %v4085 = vld [vmem:[%s3357 + $0x64] sm:$0x1]
    %v4086 = vld [vmem:[%s3357 + $0x68] sm:$0xf]
    %v4087 = vld [vmem:[%s3357 + $0x6c] sm:$0x1]
    %v4088 = vld [vmem:[%s3357 + $0x70] sm:$0xf]
    %v4089 = vld [vmem:[%s3357 + $0x74] sm:$0x1]
    %v4090 = vld [vmem:[%s3357 + $0x78] sm:$0xf]
    %v4091 = vld [vmem:[%s3357 + $0x7c] sm:$0x1]
    %v4092 = vld [vmem:[%s3357 + $0x80] sm:$0xf]
    %v4093 = vld [vmem:[%s3357 + $0x84] sm:$0x1]
    %v4094 = vld [vmem:[%s3357 + $0x88] sm:$0xf]
    %v4095 = vld [vmem:[%s3357 + $0x8c] sm:$0x1]
    %v4097 = vshrl.u32 %v4064, 16
    %v4099 = vrot.slane %v4097, 4
    %v4100 = vshll.u32 %v4064, 16
    %v4102 = vrot.slane %v4100, 5
    %v4103 = vor.u32 %v4099, %v4102
    %v4104 = vrot.slane %v4103, 4
    %v4106 = vshll.u32 %v4065, 16
    %v4108 = vrot.slane %v4106, 5
    %v4109 = vsel %vm854, %v4104, %v4108
    %v4111 = vshrl.u32 %v4066, 16
    %v4113 = vrot.slane %v4111, 4
    %v4114 = vshll.u32 %v4066, 16
    %v4116 = vrot.slane %v4114, 5
    %v4117 = vor.u32 %v4113, %v4116
    %v4118 = vrot.slane %v4117, 4
    %v4120 = vshll.u32 %v4067, 16
    %v4122 = vrot.slane %v4120, 5
    %v4123 = vsel %vm854, %v4118, %v4122
    %v4125 = vshrl.u32 %v4068, 16
    %v4127 = vrot.slane %v4125, 4
    %v4128 = vshll.u32 %v4068, 16
    %v4130 = vrot.slane %v4128, 5
    %v4131 = vor.u32 %v4127, %v4130
    %v4132 = vrot.slane %v4131, 4
    %v4134 = vshll.u32 %v4069, 16
    %v4136 = vrot.slane %v4134, 5
    %v4137 = vsel %vm854, %v4132, %v4136
    %v4139 = vshrl.u32 %v4070, 16
    %v4141 = vrot.slane %v4139, 4
    %v4142 = vshll.u32 %v4070, 16
    %v4144 = vrot.slane %v4142, 5
    %v4145 = vor.u32 %v4141, %v4144
    %v4146 = vrot.slane %v4145, 4
    %v4148 = vshll.u32 %v4071, 16
    %v4150 = vrot.slane %v4148, 5
    %v4151 = vsel %vm854, %v4146, %v4150
    %v4153 = vshrl.u32 %v4072, 16
    %v4155 = vrot.slane %v4153, 4
    %v4156 = vshll.u32 %v4072, 16
    %v4158 = vrot.slane %v4156, 5
    %v4159 = vor.u32 %v4155, %v4158
    %v4160 = vrot.slane %v4159, 4
    %v4162 = vshll.u32 %v4073, 16
    %v4164 = vrot.slane %v4162, 5
    %v4165 = vsel %vm854, %v4160, %v4164
    %v4167 = vshrl.u32 %v4074, 16
    %v4169 = vrot.slane %v4167, 4
    %v4170 = vshll.u32 %v4074, 16
    %v4172 = vrot.slane %v4170, 5
    %v4173 = vor.u32 %v4169, %v4172
    %v4174 = vrot.slane %v4173, 4
    %v4176 = vshll.u32 %v4075, 16
    %v4178 = vrot.slane %v4176, 5
    %v4179 = vsel %vm854, %v4174, %v4178
    %v4181 = vshrl.u32 %v4076, 16
    %v4183 = vrot.slane %v4181, 4
    %v4184 = vshll.u32 %v4076, 16
    %v4186 = vrot.slane %v4184, 5
    %v4187 = vor.u32 %v4183, %v4186
    %v4188 = vrot.slane %v4187, 4
    %v4190 = vshll.u32 %v4077, 16
    %v4192 = vrot.slane %v4190, 5
    %v4193 = vsel %vm854, %v4188, %v4192
    %v4195 = vshrl.u32 %v4078, 16
    %v4197 = vrot.slane %v4195, 4
    %v4198 = vshll.u32 %v4078, 16
    %v4200 = vrot.slane %v4198, 5
    %v4201 = vor.u32 %v4197, %v4200
    %v4202 = vrot.slane %v4201, 4
    %v4204 = vshll.u32 %v4079, 16
    %v4206 = vrot.slane %v4204, 5
    %v4207 = vsel %vm854, %v4202, %v4206
    %v4209 = vshrl.u32 %v4080, 16
    %v4211 = vrot.slane %v4209, 4
    %v4212 = vshll.u32 %v4080, 16
    %v4214 = vrot.slane %v4212, 5
    %v4215 = vor.u32 %v4211, %v4214
    %v4216 = vrot.slane %v4215, 4
    %v4218 = vshll.u32 %v4081, 16
    %v4220 = vrot.slane %v4218, 5
    %v4221 = vsel %vm854, %v4216, %v4220
    %v4223 = vshrl.u32 %v4082, 16
    %v4225 = vrot.slane %v4223, 4
    %v4226 = vshll.u32 %v4082, 16
    %v4228 = vrot.slane %v4226, 5
    %v4229 = vor.u32 %v4225, %v4228
    %v4230 = vrot.slane %v4229, 4
    %v4232 = vshll.u32 %v4083, 16
    %v4234 = vrot.slane %v4232, 5
    %v4235 = vsel %vm854, %v4230, %v4234
    %v4237 = vshrl.u32 %v4084, 16
    %v4239 = vrot.slane %v4237, 4
    %v4240 = vshll.u32 %v4084, 16
    %v4242 = vrot.slane %v4240, 5
    %v4243 = vor.u32 %v4239, %v4242
    %v4244 = vrot.slane %v4243, 4
    %v4246 = vshll.u32 %v4085, 16
    %v4248 = vrot.slane %v4246, 5
    %v4249 = vsel %vm854, %v4244, %v4248
    %v4251 = vshrl.u32 %v4086, 16
    %v4253 = vrot.slane %v4251, 4
    %v4254 = vshll.u32 %v4086, 16
    %v4256 = vrot.slane %v4254, 5
    %v4257 = vor.u32 %v4253, %v4256
    %v4258 = vrot.slane %v4257, 4
    %v4260 = vshll.u32 %v4087, 16
    %v4262 = vrot.slane %v4260, 5
    %v4263 = vsel %vm854, %v4258, %v4262
    %v4265 = vshrl.u32 %v4088, 16
    %v4267 = vrot.slane %v4265, 4
    %v4268 = vshll.u32 %v4088, 16
    %v4270 = vrot.slane %v4268, 5
    %v4271 = vor.u32 %v4267, %v4270
    %v4272 = vrot.slane %v4271, 4
    %v4274 = vshll.u32 %v4089, 16
    %v4276 = vrot.slane %v4274, 5
    %v4277 = vsel %vm854, %v4272, %v4276
    %v4279 = vshrl.u32 %v4090, 16
    %v4281 = vrot.slane %v4279, 4
    %v4282 = vshll.u32 %v4090, 16
    %v4284 = vrot.slane %v4282, 5
    %v4285 = vor.u32 %v4281, %v4284
    %v4286 = vrot.slane %v4285, 4
    %v4288 = vshll.u32 %v4091, 16
    %v4290 = vrot.slane %v4288, 5
    %v4291 = vsel %vm854, %v4286, %v4290
    %v4293 = vshrl.u32 %v4092, 16
    %v4295 = vrot.slane %v4293, 4
    %v4296 = vshll.u32 %v4092, 16
    %v4298 = vrot.slane %v4296, 5
    %v4299 = vor.u32 %v4295, %v4298
    %v4300 = vrot.slane %v4299, 4
    %v4302 = vshll.u32 %v4093, 16
    %v4304 = vrot.slane %v4302, 5
    %v4305 = vsel %vm854, %v4300, %v4304
    %v4307 = vshrl.u32 %v4094, 16
    %v4309 = vrot.slane %v4307, 4
    %v4310 = vshll.u32 %v4094, 16
    %v4312 = vrot.slane %v4310, 5
    %v4313 = vor.u32 %v4309, %v4312
    %v4314 = vrot.slane %v4313, 4
    %v4316 = vshll.u32 %v4095, 16
    %v4318 = vrot.slane %v4316, 5
    %v4319 = vsel %vm854, %v4314, %v4318
    %v4320 = vunpack.c.l.b16 %v4109
    %v4321 = vunpack.c.l.b16 %v4123
    %v4322 = vunpack.c.l.b16 %v4137
    %v4323 = vunpack.c.l.b16 %v4151
    %v4324 = vunpack.c.l.b16 %v4165
    %v4325 = vunpack.c.l.b16 %v4179
    %v4326 = vunpack.c.l.b16 %v4193
    %v4327 = vunpack.c.l.b16 %v4207
    %v4328 = vunpack.c.l.b16 %v4221
    %v4329 = vunpack.c.l.b16 %v4235
    %v4330 = vunpack.c.l.b16 %v4249
    %v4331 = vunpack.c.l.b16 %v4263
    %v4332 = vunpack.c.l.b16 %v4277
    %v4333 = vunpack.c.l.b16 %v4291
    %v4334 = vunpack.c.l.b16 %v4305
    %v4335 = vunpack.c.l.b16 %v4319
    %v4336 = vpack.c.b16 %v4321, %v4320
    %v4337 = vpack.c.b16 %v4323, %v4322
    %v4338 = vpack.c.b16 %v4325, %v4324
    %v4339 = vpack.c.b16 %v4327, %v4326
    %v4340 = vpack.c.b16 %v4329, %v4328
    %v4341 = vpack.c.b16 %v4331, %v4330
    %v4342 = vpack.c.b16 %v4333, %v4332
    %v4343 = vpack.c.b16 %v4335, %v4334
    %4352 = vst [vmem:[#allocation5 + $0x20] sm:$0xff] %v4336
    %4353 = vst [vmem:[#allocation5 + $0x68] sm:$0xff] %v4337
    %4354 = vst [vmem:[#allocation5 + $0xb0] sm:$0xff] %v4338
    %4355 = vst [vmem:[#allocation5 + $0xf8] sm:$0xff] %v4339
    %4356 = vst [vmem:[#allocation5 + $0x140] sm:$0xff] %v4340
    %4357 = vst [vmem:[#allocation5 + $0x188] sm:$0xff] %v4341
    %4358 = vst [vmem:[#allocation5 + $0x1d0] sm:$0xff] %v4342
    %4359 = vst [vmem:[#allocation5 + $0x218] sm:$0xff] %v4343
    %v4360 = vld [vmem:[%s3357] sm:$0xe]
    %v4361 = vld [vmem:[%s3357 + $0x4] sm:$0x1]
    %v4362 = vld [vmem:[%s3357 + $0x8] sm:$0xe]
    %v4363 = vld [vmem:[%s3357 + $0xc] sm:$0x1]
    %v4364 = vld [vmem:[%s3357 + $0x10] sm:$0xe]
    %v4365 = vld [vmem:[%s3357 + $0x14] sm:$0x1]
    %v4366 = vld [vmem:[%s3357 + $0x18] sm:$0xe]
    %v4367 = vld [vmem:[%s3357 + $0x1c] sm:$0x1]
    %v4368 = vld [vmem:[%s3357 + $0x20] sm:$0xe]
    %v4369 = vld [vmem:[%s3357 + $0x24] sm:$0x1]
    %v4370 = vld [vmem:[%s3357 + $0x28] sm:$0xe]
    %v4371 = vld [vmem:[%s3357 + $0x2c] sm:$0x1]
    %v4372 = vld [vmem:[%s3357 + $0x30] sm:$0xe]
    %v4373 = vld [vmem:[%s3357 + $0x34] sm:$0x1]
    %v4374 = vld [vmem:[%s3357 + $0x38] sm:$0xe]
    %v4375 = vld [vmem:[%s3357 + $0x3c] sm:$0x1]
    %v4376 = vld [vmem:[%s3357 + $0x50] sm:$0xe]
    %v4377 = vld [vmem:[%s3357 + $0x54] sm:$0x1]
    %v4378 = vld [vmem:[%s3357 + $0x58] sm:$0xe]
    %v4379 = vld [vmem:[%s3357 + $0x5c] sm:$0x1]
    %v4380 = vld [vmem:[%s3357 + $0x60] sm:$0xe]
    %v4381 = vld [vmem:[%s3357 + $0x64] sm:$0x1]
    %v4382 = vld [vmem:[%s3357 + $0x68] sm:$0xe]
    %v4383 = vld [vmem:[%s3357 + $0x6c] sm:$0x1]
    %v4384 = vld [vmem:[%s3357 + $0x70] sm:$0xe]
    %v4385 = vld [vmem:[%s3357 + $0x74] sm:$0x1]
    %v4386 = vld [vmem:[%s3357 + $0x78] sm:$0xe]
    %v4387 = vld [vmem:[%s3357 + $0x7c] sm:$0x1]
    %v4388 = vld [vmem:[%s3357 + $0x80] sm:$0xe]
    %v4389 = vld [vmem:[%s3357 + $0x84] sm:$0x1]
    %v4390 = vld [vmem:[%s3357 + $0x88] sm:$0xe]
    %v4391 = vld [vmem:[%s3357 + $0x8c] sm:$0x1]
    %v4424 = vrot.slane %v4360, 5
    %v4425 = vrot.slane %v4424, 4
    %v4426 = vrot.slane %v4361, 5
    %v4427 = vsel %vm1202, %v4425, %v4426
    %v4428 = vrot.slane %v4362, 5
    %v4429 = vrot.slane %v4428, 4
    %v4430 = vrot.slane %v4363, 5
    %v4431 = vsel %vm1202, %v4429, %v4430
    %v4432 = vrot.slane %v4364, 5
    %v4433 = vrot.slane %v4432, 4
    %v4434 = vrot.slane %v4365, 5
    %v4435 = vsel %vm1202, %v4433, %v4434
    %v4436 = vrot.slane %v4366, 5
    %v4437 = vrot.slane %v4436, 4
    %v4438 = vrot.slane %v4367, 5
    %v4439 = vsel %vm1202, %v4437, %v4438
    %v4440 = vrot.slane %v4368, 5
    %v4441 = vrot.slane %v4440, 4
    %v4442 = vrot.slane %v4369, 5
    %v4443 = vsel %vm1202, %v4441, %v4442
    %v4444 = vrot.slane %v4370, 5
    %v4445 = vrot.slane %v4444, 4
    %v4446 = vrot.slane %v4371, 5
    %v4447 = vsel %vm1202, %v4445, %v4446
    %v4448 = vrot.slane %v4372, 5
    %v4449 = vrot.slane %v4448, 4
    %v4450 = vrot.slane %v4373, 5
    %v4451 = vsel %vm1202, %v4449, %v4450
    %v4452 = vrot.slane %v4374, 5
    %v4453 = vrot.slane %v4452, 4
    %v4454 = vrot.slane %v4375, 5
    %v4455 = vsel %vm1202, %v4453, %v4454
    %v4456 = vrot.slane %v4376, 5
    %v4457 = vrot.slane %v4456, 4
    %v4458 = vrot.slane %v4377, 5
    %v4459 = vsel %vm1202, %v4457, %v4458
    %v4460 = vrot.slane %v4378, 5
    %v4461 = vrot.slane %v4460, 4
    %v4462 = vrot.slane %v4379, 5
    %v4463 = vsel %vm1202, %v4461, %v4462
    %v4464 = vrot.slane %v4380, 5
    %v4465 = vrot.slane %v4464, 4
    %v4466 = vrot.slane %v4381, 5
    %v4467 = vsel %vm1202, %v4465, %v4466
    %v4468 = vrot.slane %v4382, 5
    %v4469 = vrot.slane %v4468, 4
    %v4470 = vrot.slane %v4383, 5
    %v4471 = vsel %vm1202, %v4469, %v4470
    %v4472 = vrot.slane %v4384, 5
    %v4473 = vrot.slane %v4472, 4
    %v4474 = vrot.slane %v4385, 5
    %v4475 = vsel %vm1202, %v4473, %v4474
    %v4476 = vrot.slane %v4386, 5
    %v4477 = vrot.slane %v4476, 4
    %v4478 = vrot.slane %v4387, 5
    %v4479 = vsel %vm1202, %v4477, %v4478
    %v4480 = vrot.slane %v4388, 5
    %v4481 = vrot.slane %v4480, 4
    %v4482 = vrot.slane %v4389, 5
    %v4483 = vsel %vm1202, %v4481, %v4482
    %v4484 = vrot.slane %v4390, 5
    %v4485 = vrot.slane %v4484, 4
    %v4486 = vrot.slane %v4391, 5
    %v4487 = vsel %vm1202, %v4485, %v4486
    %v4488 = vunpack.c.l.b16 %v4427
    %v4489 = vunpack.c.l.b16 %v4431
    %v4490 = vunpack.c.l.b16 %v4435
    %v4491 = vunpack.c.l.b16 %v4439
    %v4492 = vunpack.c.l.b16 %v4443
    %v4493 = vunpack.c.l.b16 %v4447
    %v4494 = vunpack.c.l.b16 %v4451
    %v4495 = vunpack.c.l.b16 %v4455
    %v4496 = vunpack.c.l.b16 %v4459
    %v4497 = vunpack.c.l.b16 %v4463
    %v4498 = vunpack.c.l.b16 %v4467
    %v4499 = vunpack.c.l.b16 %v4471
    %v4500 = vunpack.c.l.b16 %v4475
    %v4501 = vunpack.c.l.b16 %v4479
    %v4502 = vunpack.c.l.b16 %v4483
    %v4503 = vunpack.c.l.b16 %v4487
    %v4504 = vpack.c.b16 %v4489, %v4488
    %v4505 = vpack.c.b16 %v4491, %v4490
    %v4506 = vpack.c.b16 %v4493, %v4492
    %v4507 = vpack.c.b16 %v4495, %v4494
    %v4508 = vpack.c.b16 %v4497, %v4496
    %v4509 = vpack.c.b16 %v4499, %v4498
    %v4510 = vpack.c.b16 %v4501, %v4500
    %v4511 = vpack.c.b16 %v4503, %v4502
    %4520 = vst [vmem:[#allocation5 + $0x28] sm:$0xff] %v4504
    %4521 = vst [vmem:[#allocation5 + $0x70] sm:$0xff] %v4505
    %4522 = vst [vmem:[#allocation5 + $0xb8] sm:$0xff] %v4506
    %4523 = vst [vmem:[#allocation5 + $0x100] sm:$0xff] %v4507
    %4524 = vst [vmem:[#allocation5 + $0x148] sm:$0xff] %v4508
    %4525 = vst [vmem:[#allocation5 + $0x190] sm:$0xff] %v4509
    %4526 = vst [vmem:[#allocation5 + $0x1d8] sm:$0xff] %v4510
    %4527 = vst [vmem:[#allocation5 + $0x220] sm:$0xff] %v4511
    %s4528 = scalar_lea.vmem [#allocation4], 16
    %v4529 = vld [vmem:[%s4528] sm:$0xf]
    %v4530 = vld [vmem:[%s4528 + $0x8] sm:$0xf]
    %v4531 = vld [vmem:[%s4528 + $0x10] sm:$0xf]
    %v4532 = vld [vmem:[%s4528 + $0x18] sm:$0xf]
    %v4533 = vld [vmem:[%s4528 + $0x20] sm:$0xf]
    %v4534 = vld [vmem:[%s4528 + $0x28] sm:$0xf]
    %v4535 = vld [vmem:[%s4528 + $0x30] sm:$0xf]
    %v4536 = vld [vmem:[%s4528 + $0x38] sm:$0xf]
    %v4537 = vld [vmem:[%s4528 + $0x50] sm:$0xf]
    %v4538 = vld [vmem:[%s4528 + $0x58] sm:$0xf]
    %v4539 = vld [vmem:[%s4528 + $0x60] sm:$0xf]
    %v4540 = vld [vmem:[%s4528 + $0x68] sm:$0xf]
    %v4541 = vld [vmem:[%s4528 + $0x70] sm:$0xf]
    %v4542 = vld [vmem:[%s4528 + $0x78] sm:$0xf]
    %v4543 = vld [vmem:[%s4528 + $0x80] sm:$0xf]
    %v4544 = vld [vmem:[%s4528 + $0x88] sm:$0xf]
    %v4561 = vunpack.c.l.b16 %v4529
    %v4562 = vunpack.c.l.b16 %v4530
    %v4563 = vunpack.c.l.b16 %v4531
    %v4564 = vunpack.c.l.b16 %v4532
    %v4565 = vunpack.c.l.b16 %v4533
    %v4566 = vunpack.c.l.b16 %v4534
    %v4567 = vunpack.c.l.b16 %v4535
    %v4568 = vunpack.c.l.b16 %v4536
    %v4569 = vunpack.c.l.b16 %v4537
    %v4570 = vunpack.c.l.b16 %v4538
    %v4571 = vunpack.c.l.b16 %v4539
    %v4572 = vunpack.c.l.b16 %v4540
    %v4573 = vunpack.c.l.b16 %v4541
    %v4574 = vunpack.c.l.b16 %v4542
    %v4575 = vunpack.c.l.b16 %v4543
    %v4576 = vunpack.c.l.b16 %v4544
    %v4577 = vpack.c.b16 %v4562, %v4561
    %v4578 = vpack.c.b16 %v4564, %v4563
    %v4579 = vpack.c.b16 %v4566, %v4565
    %v4580 = vpack.c.b16 %v4568, %v4567
    %v4581 = vpack.c.b16 %v4570, %v4569
    %v4582 = vpack.c.b16 %v4572, %v4571
    %v4583 = vpack.c.b16 %v4574, %v4573
    %v4584 = vpack.c.b16 %v4576, %v4575
    %4593 = vst [vmem:[#allocation5 + $0x30] sm:$0xff] %v4577
    %4594 = vst [vmem:[#allocation5 + $0x78] sm:$0xff] %v4578
    %4595 = vst [vmem:[#allocation5 + $0xc0] sm:$0xff] %v4579
    %4596 = vst [vmem:[#allocation5 + $0x108] sm:$0xff] %v4580
    %4597 = vst [vmem:[#allocation5 + $0x150] sm:$0xff] %v4581
    %4598 = vst [vmem:[#allocation5 + $0x198] sm:$0xff] %v4582
    %4599 = vst [vmem:[#allocation5 + $0x1e0] sm:$0xff] %v4583
    %4600 = vst [vmem:[#allocation5 + $0x228] sm:$0xff] %v4584
    %v4601 = vld [vmem:[%s4528] sm:$0xf]
    %v4602 = vld [vmem:[%s4528 + $0x4] sm:$0x1]
    %v4603 = vld [vmem:[%s4528 + $0x8] sm:$0xf]
    %v4604 = vld [vmem:[%s4528 + $0xc] sm:$0x1]
    %v4605 = vld [vmem:[%s4528 + $0x10] sm:$0xf]
    %v4606 = vld [vmem:[%s4528 + $0x14] sm:$0x1]
    %v4607 = vld [vmem:[%s4528 + $0x18] sm:$0xf]
    %v4608 = vld [vmem:[%s4528 + $0x1c] sm:$0x1]
    %v4609 = vld [vmem:[%s4528 + $0x20] sm:$0xf]
    %v4610 = vld [vmem:[%s4528 + $0x24] sm:$0x1]
    %v4611 = vld [vmem:[%s4528 + $0x28] sm:$0xf]
    %v4612 = vld [vmem:[%s4528 + $0x2c] sm:$0x1]
    %v4613 = vld [vmem:[%s4528 + $0x30] sm:$0xf]
    %v4614 = vld [vmem:[%s4528 + $0x34] sm:$0x1]
    %v4615 = vld [vmem:[%s4528 + $0x38] sm:$0xf]
    %v4616 = vld [vmem:[%s4528 + $0x3c] sm:$0x1]
    %v4617 = vld [vmem:[%s4528 + $0x50] sm:$0xf]
    %v4618 = vld [vmem:[%s4528 + $0x54] sm:$0x1]
    %v4619 = vld [vmem:[%s4528 + $0x58] sm:$0xf]
    %v4620 = vld [vmem:[%s4528 + $0x5c] sm:$0x1]
    %v4621 = vld [vmem:[%s4528 + $0x60] sm:$0xf]
    %v4622 = vld [vmem:[%s4528 + $0x64] sm:$0x1]
    %v4623 = vld [vmem:[%s4528 + $0x68] sm:$0xf]
    %v4624 = vld [vmem:[%s4528 + $0x6c] sm:$0x1]
    %v4625 = vld [vmem:[%s4528 + $0x70] sm:$0xf]
    %v4626 = vld [vmem:[%s4528 + $0x74] sm:$0x1]
    %v4627 = vld [vmem:[%s4528 + $0x78] sm:$0xf]
    %v4628 = vld [vmem:[%s4528 + $0x7c] sm:$0x1]
    %v4629 = vld [vmem:[%s4528 + $0x80] sm:$0xf]
    %v4630 = vld [vmem:[%s4528 + $0x84] sm:$0x1]
    %v4631 = vld [vmem:[%s4528 + $0x88] sm:$0xf]
    %v4632 = vld [vmem:[%s4528 + $0x8c] sm:$0x1]
    %v4634 = vshrl.u32 %v4601, 16
    %v4636 = vrot.slane %v4634, 4
    %v4637 = vshll.u32 %v4601, 16
    %v4639 = vrot.slane %v4637, 5
    %v4640 = vor.u32 %v4636, %v4639
    %v4641 = vrot.slane %v4640, 4
    %v4643 = vshll.u32 %v4602, 16
    %v4645 = vrot.slane %v4643, 5
    %v4646 = vsel %vm854, %v4641, %v4645
    %v4648 = vshrl.u32 %v4603, 16
    %v4650 = vrot.slane %v4648, 4
    %v4651 = vshll.u32 %v4603, 16
    %v4653 = vrot.slane %v4651, 5
    %v4654 = vor.u32 %v4650, %v4653
    %v4655 = vrot.slane %v4654, 4
    %v4657 = vshll.u32 %v4604, 16
    %v4659 = vrot.slane %v4657, 5
    %v4660 = vsel %vm854, %v4655, %v4659
    %v4662 = vshrl.u32 %v4605, 16
    %v4664 = vrot.slane %v4662, 4
    %v4665 = vshll.u32 %v4605, 16
    %v4667 = vrot.slane %v4665, 5
    %v4668 = vor.u32 %v4664, %v4667
    %v4669 = vrot.slane %v4668, 4
    %v4671 = vshll.u32 %v4606, 16
    %v4673 = vrot.slane %v4671, 5
    %v4674 = vsel %vm854, %v4669, %v4673
    %v4676 = vshrl.u32 %v4607, 16
    %v4678 = vrot.slane %v4676, 4
    %v4679 = vshll.u32 %v4607, 16
    %v4681 = vrot.slane %v4679, 5
    %v4682 = vor.u32 %v4678, %v4681
    %v4683 = vrot.slane %v4682, 4
    %v4685 = vshll.u32 %v4608, 16
    %v4687 = vrot.slane %v4685, 5
    %v4688 = vsel %vm854, %v4683, %v4687
    %v4690 = vshrl.u32 %v4609, 16
    %v4692 = vrot.slane %v4690, 4
    %v4693 = vshll.u32 %v4609, 16
    %v4695 = vrot.slane %v4693, 5
    %v4696 = vor.u32 %v4692, %v4695
    %v4697 = vrot.slane %v4696, 4
    %v4699 = vshll.u32 %v4610, 16
    %v4701 = vrot.slane %v4699, 5
    %v4702 = vsel %vm854, %v4697, %v4701
    %v4704 = vshrl.u32 %v4611, 16
    %v4706 = vrot.slane %v4704, 4
    %v4707 = vshll.u32 %v4611, 16
    %v4709 = vrot.slane %v4707, 5
    %v4710 = vor.u32 %v4706, %v4709
    %v4711 = vrot.slane %v4710, 4
    %v4713 = vshll.u32 %v4612, 16
    %v4715 = vrot.slane %v4713, 5
    %v4716 = vsel %vm854, %v4711, %v4715
    %v4718 = vshrl.u32 %v4613, 16
    %v4720 = vrot.slane %v4718, 4
    %v4721 = vshll.u32 %v4613, 16
    %v4723 = vrot.slane %v4721, 5
    %v4724 = vor.u32 %v4720, %v4723
    %v4725 = vrot.slane %v4724, 4
    %v4727 = vshll.u32 %v4614, 16
    %v4729 = vrot.slane %v4727, 5
    %v4730 = vsel %vm854, %v4725, %v4729
    %v4732 = vshrl.u32 %v4615, 16
    %v4734 = vrot.slane %v4732, 4
    %v4735 = vshll.u32 %v4615, 16
    %v4737 = vrot.slane %v4735, 5
    %v4738 = vor.u32 %v4734, %v4737
    %v4739 = vrot.slane %v4738, 4
    %v4741 = vshll.u32 %v4616, 16
    %v4743 = vrot.slane %v4741, 5
    %v4744 = vsel %vm854, %v4739, %v4743
    %v4746 = vshrl.u32 %v4617, 16
    %v4748 = vrot.slane %v4746, 4
    %v4749 = vshll.u32 %v4617, 16
    %v4751 = vrot.slane %v4749, 5
    %v4752 = vor.u32 %v4748, %v4751
    %v4753 = vrot.slane %v4752, 4
    %v4755 = vshll.u32 %v4618, 16
    %v4757 = vrot.slane %v4755, 5
    %v4758 = vsel %vm854, %v4753, %v4757
    %v4760 = vshrl.u32 %v4619, 16
    %v4762 = vrot.slane %v4760, 4
    %v4763 = vshll.u32 %v4619, 16
    %v4765 = vrot.slane %v4763, 5
    %v4766 = vor.u32 %v4762, %v4765
    %v4767 = vrot.slane %v4766, 4
    %v4769 = vshll.u32 %v4620, 16
    %v4771 = vrot.slane %v4769, 5
    %v4772 = vsel %vm854, %v4767, %v4771
    %v4774 = vshrl.u32 %v4621, 16
    %v4776 = vrot.slane %v4774, 4
    %v4777 = vshll.u32 %v4621, 16
    %v4779 = vrot.slane %v4777, 5
    %v4780 = vor.u32 %v4776, %v4779
    %v4781 = vrot.slane %v4780, 4
    %v4783 = vshll.u32 %v4622, 16
    %v4785 = vrot.slane %v4783, 5
    %v4786 = vsel %vm854, %v4781, %v4785
    %v4788 = vshrl.u32 %v4623, 16
    %v4790 = vrot.slane %v4788, 4
    %v4791 = vshll.u32 %v4623, 16
    %v4793 = vrot.slane %v4791, 5
    %v4794 = vor.u32 %v4790, %v4793
    %v4795 = vrot.slane %v4794, 4
    %v4797 = vshll.u32 %v4624, 16
    %v4799 = vrot.slane %v4797, 5
    %v4800 = vsel %vm854, %v4795, %v4799
    %v4802 = vshrl.u32 %v4625, 16
    %v4804 = vrot.slane %v4802, 4
    %v4805 = vshll.u32 %v4625, 16
    %v4807 = vrot.slane %v4805, 5
    %v4808 = vor.u32 %v4804, %v4807
    %v4809 = vrot.slane %v4808, 4
    %v4811 = vshll.u32 %v4626, 16
    %v4813 = vrot.slane %v4811, 5
    %v4814 = vsel %vm854, %v4809, %v4813
    %v4816 = vshrl.u32 %v4627, 16
    %v4818 = vrot.slane %v4816, 4
    %v4819 = vshll.u32 %v4627, 16
    %v4821 = vrot.slane %v4819, 5
    %v4822 = vor.u32 %v4818, %v4821
    %v4823 = vrot.slane %v4822, 4
    %v4825 = vshll.u32 %v4628, 16
    %v4827 = vrot.slane %v4825, 5
    %v4828 = vsel %vm854, %v4823, %v4827
    %v4830 = vshrl.u32 %v4629, 16
    %v4832 = vrot.slane %v4830, 4
    %v4833 = vshll.u32 %v4629, 16
    %v4835 = vrot.slane %v4833, 5
    %v4836 = vor.u32 %v4832, %v4835
    %v4837 = vrot.slane %v4836, 4
    %v4839 = vshll.u32 %v4630, 16
    %v4841 = vrot.slane %v4839, 5
    %v4842 = vsel %vm854, %v4837, %v4841
    %v4844 = vshrl.u32 %v4631, 16
    %v4846 = vrot.slane %v4844, 4
    %v4847 = vshll.u32 %v4631, 16
    %v4849 = vrot.slane %v4847, 5
    %v4850 = vor.u32 %v4846, %v4849
    %v4851 = vrot.slane %v4850, 4
    %v4853 = vshll.u32 %v4632, 16
    %v4855 = vrot.slane %v4853, 5
    %v4856 = vsel %vm854, %v4851, %v4855
    %v4857 = vunpack.c.l.b16 %v4646
    %v4858 = vunpack.c.l.b16 %v4660
    %v4859 = vunpack.c.l.b16 %v4674
    %v4860 = vunpack.c.l.b16 %v4688
    %v4861 = vunpack.c.l.b16 %v4702
    %v4862 = vunpack.c.l.b16 %v4716
    %v4863 = vunpack.c.l.b16 %v4730
    %v4864 = vunpack.c.l.b16 %v4744
    %v4865 = vunpack.c.l.b16 %v4758
    %v4866 = vunpack.c.l.b16 %v4772
    %v4867 = vunpack.c.l.b16 %v4786
    %v4868 = vunpack.c.l.b16 %v4800
    %v4869 = vunpack.c.l.b16 %v4814
    %v4870 = vunpack.c.l.b16 %v4828
    %v4871 = vunpack.c.l.b16 %v4842
    %v4872 = vunpack.c.l.b16 %v4856
    %v4873 = vpack.c.b16 %v4858, %v4857
    %v4874 = vpack.c.b16 %v4860, %v4859
    %v4875 = vpack.c.b16 %v4862, %v4861
    %v4876 = vpack.c.b16 %v4864, %v4863
    %v4877 = vpack.c.b16 %v4866, %v4865
    %v4878 = vpack.c.b16 %v4868, %v4867
    %v4879 = vpack.c.b16 %v4870, %v4869
    %v4880 = vpack.c.b16 %v4872, %v4871
    %4889 = vst [vmem:[#allocation5 + $0x38] sm:$0xff] %v4873
    %4890 = vst [vmem:[#allocation5 + $0x80] sm:$0xff] %v4874
    %4891 = vst [vmem:[#allocation5 + $0xc8] sm:$0xff] %v4875
    %4892 = vst [vmem:[#allocation5 + $0x110] sm:$0xff] %v4876
    %4893 = vst [vmem:[#allocation5 + $0x158] sm:$0xff] %v4877
    %4894 = vst [vmem:[#allocation5 + $0x1a0] sm:$0xff] %v4878
    %4895 = vst [vmem:[#allocation5 + $0x1e8] sm:$0xff] %v4879
    %4896 = vst [vmem:[#allocation5 + $0x230] sm:$0xff] %v4880
    %v4897 = vld [vmem:[%s4528] sm:$0xe]
    %v4898 = vld [vmem:[%s4528 + $0x4] sm:$0x1]
    %v4899 = vld [vmem:[%s4528 + $0x8] sm:$0xe]
    %v4900 = vld [vmem:[%s4528 + $0xc] sm:$0x1]
    %v4901 = vld [vmem:[%s4528 + $0x10] sm:$0xe]
    %v4902 = vld [vmem:[%s4528 + $0x14] sm:$0x1]
    %v4903 = vld [vmem:[%s4528 + $0x18] sm:$0xe]
    %v4904 = vld [vmem:[%s4528 + $0x1c] sm:$0x1]
    %v4905 = vld [vmem:[%s4528 + $0x20] sm:$0xe]
    %v4906 = vld [vmem:[%s4528 + $0x24] sm:$0x1]
    %v4907 = vld [vmem:[%s4528 + $0x28] sm:$0xe]
    %v4908 = vld [vmem:[%s4528 + $0x2c] sm:$0x1]
    %v4909 = vld [vmem:[%s4528 + $0x30] sm:$0xe]
    %v4910 = vld [vmem:[%s4528 + $0x34] sm:$0x1]
    %v4911 = vld [vmem:[%s4528 + $0x38] sm:$0xe]
    %v4912 = vld [vmem:[%s4528 + $0x3c] sm:$0x1]
    %v4913 = vld [vmem:[%s4528 + $0x50] sm:$0xe]
    %v4914 = vld [vmem:[%s4528 + $0x54] sm:$0x1]
    %v4915 = vld [vmem:[%s4528 + $0x58] sm:$0xe]
    %v4916 = vld [vmem:[%s4528 + $0x5c] sm:$0x1]
    %v4917 = vld [vmem:[%s4528 + $0x60] sm:$0xe]
    %v4918 = vld [vmem:[%s4528 + $0x64] sm:$0x1]
    %v4919 = vld [vmem:[%s4528 + $0x68] sm:$0xe]
    %v4920 = vld [vmem:[%s4528 + $0x6c] sm:$0x1]
    %v4921 = vld [vmem:[%s4528 + $0x70] sm:$0xe]
    %v4922 = vld [vmem:[%s4528 + $0x74] sm:$0x1]
    %v4923 = vld [vmem:[%s4528 + $0x78] sm:$0xe]
    %v4924 = vld [vmem:[%s4528 + $0x7c] sm:$0x1]
    %v4925 = vld [vmem:[%s4528 + $0x80] sm:$0xe]
    %v4926 = vld [vmem:[%s4528 + $0x84] sm:$0x1]
    %v4927 = vld [vmem:[%s4528 + $0x88] sm:$0xe]
    %v4928 = vld [vmem:[%s4528 + $0x8c] sm:$0x1]
    %v4961 = vrot.slane %v4897, 5
    %v4962 = vrot.slane %v4961, 4
    %v4963 = vrot.slane %v4898, 5
    %v4964 = vsel %vm1202, %v4962, %v4963
    %v4965 = vrot.slane %v4899, 5
    %v4966 = vrot.slane %v4965, 4
    %v4967 = vrot.slane %v4900, 5
    %v4968 = vsel %vm1202, %v4966, %v4967
    %v4969 = vrot.slane %v4901, 5
    %v4970 = vrot.slane %v4969, 4
    %v4971 = vrot.slane %v4902, 5
    %v4972 = vsel %vm1202, %v4970, %v4971
    %v4973 = vrot.slane %v4903, 5
    %v4974 = vrot.slane %v4973, 4
    %v4975 = vrot.slane %v4904, 5
    %v4976 = vsel %vm1202, %v4974, %v4975
    %v4977 = vrot.slane %v4905, 5
    %v4978 = vrot.slane %v4977, 4
    %v4979 = vrot.slane %v4906, 5
    %v4980 = vsel %vm1202, %v4978, %v4979
    %v4981 = vrot.slane %v4907, 5
    %v4982 = vrot.slane %v4981, 4
    %v4983 = vrot.slane %v4908, 5
    %v4984 = vsel %vm1202, %v4982, %v4983
    %v4985 = vrot.slane %v4909, 5
    %v4986 = vrot.slane %v4985, 4
    %v4987 = vrot.slane %v4910, 5
    %v4988 = vsel %vm1202, %v4986, %v4987
    %v4989 = vrot.slane %v4911, 5
    %v4990 = vrot.slane %v4989, 4
    %v4991 = vrot.slane %v4912, 5
    %v4992 = vsel %vm1202, %v4990, %v4991
    %v4993 = vrot.slane %v4913, 5
    %v4994 = vrot.slane %v4993, 4
    %v4995 = vrot.slane %v4914, 5
    %v4996 = vsel %vm1202, %v4994, %v4995
    %v4997 = vrot.slane %v4915, 5
    %v4998 = vrot.slane %v4997, 4
    %v4999 = vrot.slane %v4916, 5
    %v5000 = vsel %vm1202, %v4998, %v4999
    %v5001 = vrot.slane %v4917, 5
    %v5002 = vrot.slane %v5001, 4
    %v5003 = vrot.slane %v4918, 5
    %v5004 = vsel %vm1202, %v5002, %v5003
    %v5005 = vrot.slane %v4919, 5
    %v5006 = vrot.slane %v5005, 4
    %v5007 = vrot.slane %v4920, 5
    %v5008 = vsel %vm1202, %v5006, %v5007
    %v5009 = vrot.slane %v4921, 5
    %v5010 = vrot.slane %v5009, 4
    %v5011 = vrot.slane %v4922, 5
    %v5012 = vsel %vm1202, %v5010, %v5011
    %v5013 = vrot.slane %v4923, 5
    %v5014 = vrot.slane %v5013, 4
    %v5015 = vrot.slane %v4924, 5
    %v5016 = vsel %vm1202, %v5014, %v5015
    %v5017 = vrot.slane %v4925, 5
    %v5018 = vrot.slane %v5017, 4
    %v5019 = vrot.slane %v4926, 5
    %v5020 = vsel %vm1202, %v5018, %v5019
    %v5021 = vrot.slane %v4927, 5
    %v5022 = vrot.slane %v5021, 4
    %v5023 = vrot.slane %v4928, 5
    %v5024 = vsel %vm1202, %v5022, %v5023
    %v5025 = vunpack.c.l.b16 %v4964
    %v5026 = vunpack.c.l.b16 %v4968
    %v5027 = vunpack.c.l.b16 %v4972
    %v5028 = vunpack.c.l.b16 %v4976
    %v5029 = vunpack.c.l.b16 %v4980
    %v5030 = vunpack.c.l.b16 %v4984
    %v5031 = vunpack.c.l.b16 %v4988
    %v5032 = vunpack.c.l.b16 %v4992
    %v5033 = vunpack.c.l.b16 %v4996
    %v5034 = vunpack.c.l.b16 %v5000
    %v5035 = vunpack.c.l.b16 %v5004
    %v5036 = vunpack.c.l.b16 %v5008
    %v5037 = vunpack.c.l.b16 %v5012
    %v5038 = vunpack.c.l.b16 %v5016
    %v5039 = vunpack.c.l.b16 %v5020
    %v5040 = vunpack.c.l.b16 %v5024
    %v5041 = vpack.c.b16 %v5026, %v5025
    %v5042 = vpack.c.b16 %v5028, %v5027
    %v5043 = vpack.c.b16 %v5030, %v5029
    %v5044 = vpack.c.b16 %v5032, %v5031
    %v5045 = vpack.c.b16 %v5034, %v5033
    %v5046 = vpack.c.b16 %v5036, %v5035
    %v5047 = vpack.c.b16 %v5038, %v5037
    %v5048 = vpack.c.b16 %v5040, %v5039
    %5057 = vst [vmem:[#allocation5 + $0x40] sm:$0xff] %v5041
    %5058 = vst [vmem:[#allocation5 + $0x88] sm:$0xff] %v5042
    %5059 = vst [vmem:[#allocation5 + $0xd0] sm:$0xff] %v5043
    %5060 = vst [vmem:[#allocation5 + $0x118] sm:$0xff] %v5044
    %5061 = vst [vmem:[#allocation5 + $0x160] sm:$0xff] %v5045
    %5062 = vst [vmem:[#allocation5 + $0x1a8] sm:$0xff] %v5046
    %5063 = vst [vmem:[#allocation5 + $0x1f0] sm:$0xff] %v5047
    %5064 = vst [vmem:[#allocation5 + $0x238] sm:$0xff] %v5048
    %v5065 = vld [vmem:[#allocation5] sm:$0xff]
    %v5066 = vld [vmem:[#allocation5 + $0x8] sm:$0xff]
    %v5067 = vld [vmem:[#allocation5 + $0x10] sm:$0xff]
    %v5068 = vld [vmem:[#allocation5 + $0x18] sm:$0xff]
    %v5069 = vld [vmem:[#allocation5 + $0x20] sm:$0xff]
    %v5070 = vld [vmem:[#allocation5 + $0x28] sm:$0xff]
    %v5071 = vld [vmem:[#allocation5 + $0x30] sm:$0xff]
    %v5072 = vld [vmem:[#allocation5 + $0x38] sm:$0xff]
    %v5073 = vld [vmem:[#allocation5 + $0x40] sm:$0xff]
    %v5074 = vld [vmem:[#allocation5 + $0x48] sm:$0xff]
    %v5075 = vld [vmem:[#allocation5 + $0x50] sm:$0xff]
    %v5076 = vld [vmem:[#allocation5 + $0x58] sm:$0xff]
    %v5077 = vld [vmem:[#allocation5 + $0x60] sm:$0xff]
    %v5078 = vld [vmem:[#allocation5 + $0x68] sm:$0xff]
    %v5079 = vld [vmem:[#allocation5 + $0x70] sm:$0xff]
    %v5080 = vld [vmem:[#allocation5 + $0x78] sm:$0xff]
    %v5081 = vld [vmem:[#allocation5 + $0x80] sm:$0xff]
    %v5082 = vld [vmem:[#allocation5 + $0x88] sm:$0xff]
    %v5083 = vld [vmem:[#allocation5 + $0x90] sm:$0xff]
    %v5084 = vld [vmem:[#allocation5 + $0x98] sm:$0xff]
    %v5085 = vld [vmem:[#allocation5 + $0xa0] sm:$0xff]
    %v5086 = vld [vmem:[#allocation5 + $0xa8] sm:$0xff]
    %v5087 = vld [vmem:[#allocation5 + $0xb0] sm:$0xff]
    %v5088 = vld [vmem:[#allocation5 + $0xb8] sm:$0xff]
    %v5089 = vld [vmem:[#allocation5 + $0xc0] sm:$0xff]
    %v5090 = vld [vmem:[#allocation5 + $0xc8] sm:$0xff]
    %v5091 = vld [vmem:[#allocation5 + $0xd0] sm:$0xff]
    %v5092 = vld [vmem:[#allocation5 + $0xd8] sm:$0xff]
    %v5093 = vld [vmem:[#allocation5 + $0xe0] sm:$0xff]
    %v5094 = vld [vmem:[#allocation5 + $0xe8] sm:$0xff]
    %v5095 = vld [vmem:[#allocation5 + $0xf0] sm:$0xff]
    %v5096 = vld [vmem:[#allocation5 + $0xf8] sm:$0xff]
    %v5097 = vld [vmem:[#allocation5 + $0x100] sm:$0xff]
    %v5098 = vld [vmem:[#allocation5 + $0x108] sm:$0xff]
    %v5099 = vld [vmem:[#allocation5 + $0x110] sm:$0xff]
    %v5100 = vld [vmem:[#allocation5 + $0x118] sm:$0xff]
    %v5101 = vld [vmem:[#allocation5 + $0x120] sm:$0xff]
    %v5102 = vld [vmem:[#allocation5 + $0x128] sm:$0xff]
    %v5103 = vld [vmem:[#allocation5 + $0x130] sm:$0xff]
    %v5104 = vld [vmem:[#allocation5 + $0x138] sm:$0xff]
    %v5105 = vld [vmem:[#allocation5 + $0x140] sm:$0xff]
    %v5106 = vld [vmem:[#allocation5 + $0x148] sm:$0xff]
    %v5107 = vld [vmem:[#allocation5 + $0x150] sm:$0xff]
    %v5108 = vld [vmem:[#allocation5 + $0x158] sm:$0xff]
    %v5109 = vld [vmem:[#allocation5 + $0x160] sm:$0xff]
    %v5110 = vld [vmem:[#allocation5 + $0x168] sm:$0xff]
    %v5111 = vld [vmem:[#allocation5 + $0x170] sm:$0xff]
    %v5112 = vld [vmem:[#allocation5 + $0x178] sm:$0xff]
    %v5113 = vld [vmem:[#allocation5 + $0x180] sm:$0xff]
    %v5114 = vld [vmem:[#allocation5 + $0x188] sm:$0xff]
    %v5115 = vld [vmem:[#allocation5 + $0x190] sm:$0xff]
    %v5116 = vld [vmem:[#allocation5 + $0x198] sm:$0xff]
    %v5117 = vld [vmem:[#allocation5 + $0x1a0] sm:$0xff]
    %v5118 = vld [vmem:[#allocation5 + $0x1a8] sm:$0xff]
    %v5119 = vld [vmem:[#allocation5 + $0x1b0] sm:$0xff]
    %v5120 = vld [vmem:[#allocation5 + $0x1b8] sm:$0xff]
    %v5121 = vld [vmem:[#allocation5 + $0x1c0] sm:$0xff]
    %v5122 = vld [vmem:[#allocation5 + $0x1c8] sm:$0xff]
    %v5123 = vld [vmem:[#allocation5 + $0x1d0] sm:$0xff]
    %v5124 = vld [vmem:[#allocation5 + $0x1d8] sm:$0xff]
    %v5125 = vld [vmem:[#allocation5 + $0x1e0] sm:$0xff]
    %v5126 = vld [vmem:[#allocation5 + $0x1e8] sm:$0xff]
    %v5127 = vld [vmem:[#allocation5 + $0x1f0] sm:$0xff]
    %v5128 = vld [vmem:[#allocation5 + $0x1f8] sm:$0xff]
    %v5129 = vld [vmem:[#allocation5 + $0x200] sm:$0xff]
    %v5130 = vld [vmem:[#allocation5 + $0x208] sm:$0xff]
    %v5131 = vld [vmem:[#allocation5 + $0x210] sm:$0xff]
    %v5132 = vld [vmem:[#allocation5 + $0x218] sm:$0xff]
    %v5133 = vld [vmem:[#allocation5 + $0x220] sm:$0xff]
    %v5134 = vld [vmem:[#allocation5 + $0x228] sm:$0xff]
    %v5135 = vld [vmem:[#allocation5 + $0x230] sm:$0xff]
    %v5136 = vld [vmem:[#allocation5 + $0x238] sm:$0xff]
    %v5137 = vld [vmem:[%s4] sm:$0xf]
    %v5138 = vld [vmem:[%s4 + $0x4] sm:$0xf]
    %v5139 = vld [vmem:[%s4 + $0x8] sm:$0xf]
    %v5140 = vld [vmem:[%s4 + $0xc] sm:$0xf]
    %v5141 = vld [vmem:[%s4 + $0x10] sm:$0xf]
    %v5142 = vld [vmem:[%s4 + $0x14] sm:$0xf]
    %v5143 = vld [vmem:[%s4 + $0x18] sm:$0xf]
    %v5144 = vld [vmem:[%s4 + $0x1c] sm:$0xf]
    %v5145 = vld [vmem:[%s4 + $0x20] sm:$0xf]
    %v5146 = vld [vmem:[%s4 + $0x24] sm:$0xf]
    %v5147 = vld [vmem:[%s4 + $0x28] sm:$0xf]
    %v5148 = vld [vmem:[%s4 + $0x2c] sm:$0xf]
    %v5149 = vld [vmem:[%s4 + $0x30] sm:$0xf]
    %v5150 = vld [vmem:[%s4 + $0x34] sm:$0xf]
    %v5151 = vld [vmem:[%s4 + $0x38] sm:$0xf]
    %v5152 = vld [vmem:[%s4 + $0x3c] sm:$0xf]
    %v5153 = vld [vmem:[%s4 + $0x40] sm:$0xf]
    %v5154 = vld [vmem:[%s4 + $0x44] sm:$0xf]
    %v5155 = vld [vmem:[%s4 + $0x48] sm:$0xf]
    %v5156 = vld [vmem:[%s4 + $0x4c] sm:$0xf]
    %v5157 = vld [vmem:[%s4 + $0x50] sm:$0xf]
    %v5158 = vld [vmem:[%s4 + $0x54] sm:$0xf]
    %v5159 = vld [vmem:[%s4 + $0x58] sm:$0xf]
    %v5160 = vld [vmem:[%s4 + $0x5c] sm:$0xf]
    %v5161 = vld [vmem:[%s4 + $0x60] sm:$0xf]
    %v5162 = vld [vmem:[%s4 + $0x64] sm:$0xf]
    %v5163 = vld [vmem:[%s4 + $0x68] sm:$0xf]
    %v5164 = vld [vmem:[%s4 + $0x6c] sm:$0xf]
    %v5165 = vld [vmem:[%s4 + $0x70] sm:$0xf]
    %v5166 = vld [vmem:[%s4 + $0x74] sm:$0xf]
    %v5167 = vld [vmem:[%s4 + $0x78] sm:$0xf]
    %v5168 = vld [vmem:[%s4 + $0x7c] sm:$0xf]
    %v5169 = vld [vmem:[%s4 + $0x80] sm:$0xf]
    %v5170 = vld [vmem:[%s4 + $0x84] sm:$0xf]
    %v5171 = vld [vmem:[%s4 + $0x88] sm:$0xf]
    %v5172 = vld [vmem:[%s4 + $0x8c] sm:$0xf]
    %v5173 = vld [vmem:[%s4 + $0x90] sm:$0xf]
    %v5174 = vld [vmem:[%s4 + $0x94] sm:$0xf]
    %v5175 = vld [vmem:[%s4 + $0x98] sm:$0xf]
    %v5176 = vld [vmem:[%s4 + $0x9c] sm:$0xf]
    %v5177 = vld [vmem:[%s4 + $0xa0] sm:$0xf]
    %v5178 = vld [vmem:[%s4 + $0xa4] sm:$0xf]
    %v5179 = vld [vmem:[%s4 + $0xa8] sm:$0xf]
    %v5180 = vld [vmem:[%s4 + $0xac] sm:$0xf]
    %v5181 = vld [vmem:[%s4 + $0xb0] sm:$0xf]
    %v5182 = vld [vmem:[%s4 + $0xb4] sm:$0xf]
    %v5183 = vld [vmem:[%s4 + $0xb8] sm:$0xf]
    %v5184 = vld [vmem:[%s4 + $0xbc] sm:$0xf]
    %v5185 = vld [vmem:[%s4 + $0xc0] sm:$0xf]
    %v5186 = vld [vmem:[%s4 + $0xc4] sm:$0xf]
    %v5187 = vld [vmem:[%s4 + $0xc8] sm:$0xf]
    %v5188 = vld [vmem:[%s4 + $0xcc] sm:$0xf]
    %v5189 = vld [vmem:[%s4 + $0xd0] sm:$0xf]
    %v5190 = vld [vmem:[%s4 + $0xd4] sm:$0xf]
    %v5191 = vld [vmem:[%s4 + $0xd8] sm:$0xf]
    %v5192 = vld [vmem:[%s4 + $0xdc] sm:$0xf]
    %v5193 = vld [vmem:[%s4 + $0xe0] sm:$0xf]
    %v5194 = vld [vmem:[%s4 + $0xe4] sm:$0xf]
    %v5195 = vld [vmem:[%s4 + $0xe8] sm:$0xf]
    %v5196 = vld [vmem:[%s4 + $0xec] sm:$0xf]
    %v5197 = vld [vmem:[%s4 + $0xf0] sm:$0xf]
    %v5198 = vld [vmem:[%s4 + $0xf4] sm:$0xf]
    %v5199 = vld [vmem:[%s4 + $0xf8] sm:$0xf]
    %v5200 = vld [vmem:[%s4 + $0xfc] sm:$0xf]
    %v5201 = vld [vmem:[%s4 + $0x100] sm:$0xf]
    %v5202 = vld [vmem:[%s4 + $0x104] sm:$0xf]
    %v5203 = vld [vmem:[%s4 + $0x108] sm:$0xf]
    %v5204 = vld [vmem:[%s4 + $0x10c] sm:$0xf]
    %v5205 = vld [vmem:[%s4 + $0x110] sm:$0xf]
    %v5206 = vld [vmem:[%s4 + $0x114] sm:$0xf]
    %v5207 = vld [vmem:[%s4 + $0x118] sm:$0xf]
    %v5208 = vld [vmem:[%s4 + $0x11c] sm:$0xf]
    %v5209 = vld [vmem:[%s4 + $0x120] sm:$0xf]
    %v5210 = vld [vmem:[%s4 + $0x124] sm:$0xf]
    %v5211 = vld [vmem:[%s4 + $0x128] sm:$0xf]
    %v5212 = vld [vmem:[%s4 + $0x12c] sm:$0xf]
    %v5213 = vld [vmem:[%s4 + $0x130] sm:$0xf]
    %v5214 = vld [vmem:[%s4 + $0x134] sm:$0xf]
    %v5215 = vld [vmem:[%s4 + $0x138] sm:$0xf]
    %v5216 = vld [vmem:[%s4 + $0x13c] sm:$0xf]
    %v5217 = vld [vmem:[%s4 + $0x140] sm:$0xf]
    %v5218 = vld [vmem:[%s4 + $0x144] sm:$0xf]
    %v5219 = vld [vmem:[%s4 + $0x148] sm:$0xf]
    %v5220 = vld [vmem:[%s4 + $0x14c] sm:$0xf]
    %v5221 = vld [vmem:[%s4 + $0x150] sm:$0xf]
    %v5222 = vld [vmem:[%s4 + $0x154] sm:$0xf]
    %v5223 = vld [vmem:[%s4 + $0x158] sm:$0xf]
    %v5224 = vld [vmem:[%s4 + $0x15c] sm:$0xf]
    %v5225 = vld [vmem:[%s4 + $0x160] sm:$0xf]
    %v5226 = vld [vmem:[%s4 + $0x164] sm:$0xf]
    %v5227 = vld [vmem:[%s4 + $0x168] sm:$0xf]
    %v5228 = vld [vmem:[%s4 + $0x16c] sm:$0xf]
    %v5229 = vld [vmem:[%s4 + $0x170] sm:$0xf]
    %v5230 = vld [vmem:[%s4 + $0x174] sm:$0xf]
    %v5231 = vld [vmem:[%s4 + $0x178] sm:$0xf]
    %v5232 = vld [vmem:[%s4 + $0x17c] sm:$0xf]
    %v5233 = vld [vmem:[%s4 + $0x180] sm:$0xf]
    %v5234 = vld [vmem:[%s4 + $0x184] sm:$0xf]
    %v5235 = vld [vmem:[%s4 + $0x188] sm:$0xf]
    %v5236 = vld [vmem:[%s4 + $0x18c] sm:$0xf]
    %v5237 = vld [vmem:[%s4 + $0x190] sm:$0xf]
    %v5238 = vld [vmem:[%s4 + $0x194] sm:$0xf]
    %v5239 = vld [vmem:[%s4 + $0x198] sm:$0xf]
    %v5240 = vld [vmem:[%s4 + $0x19c] sm:$0xf]
    %v5241 = vld [vmem:[%s4 + $0x1a0] sm:$0xf]
    %v5242 = vld [vmem:[%s4 + $0x1a4] sm:$0xf]
    %v5243 = vld [vmem:[%s4 + $0x1a8] sm:$0xf]
    %v5244 = vld [vmem:[%s4 + $0x1ac] sm:$0xf]
    %v5245 = vld [vmem:[%s4 + $0x1b0] sm:$0xf]
    %v5246 = vld [vmem:[%s4 + $0x1b4] sm:$0xf]
    %v5247 = vld [vmem:[%s4 + $0x1b8] sm:$0xf]
    %v5248 = vld [vmem:[%s4 + $0x1bc] sm:$0xf]
    %v5249 = vld [vmem:[%s4 + $0x1c0] sm:$0xf]
    %v5250 = vld [vmem:[%s4 + $0x1c4] sm:$0xf]
    %v5251 = vld [vmem:[%s4 + $0x1c8] sm:$0xf]
    %v5252 = vld [vmem:[%s4 + $0x1cc] sm:$0xf]
    %v5253 = vld [vmem:[%s4 + $0x1d0] sm:$0xf]
    %v5254 = vld [vmem:[%s4 + $0x1d4] sm:$0xf]
    %v5255 = vld [vmem:[%s4 + $0x1d8] sm:$0xf]
    %v5256 = vld [vmem:[%s4 + $0x1dc] sm:$0xf]
    %v5257 = vld [vmem:[%s4 + $0x1e0] sm:$0xf]
    %v5258 = vld [vmem:[%s4 + $0x1e4] sm:$0xf]
    %v5259 = vld [vmem:[%s4 + $0x1e8] sm:$0xf]
    %v5260 = vld [vmem:[%s4 + $0x1ec] sm:$0xf]
    %v5261 = vld [vmem:[%s4 + $0x1f0] sm:$0xf]
    %v5262 = vld [vmem:[%s4 + $0x1f4] sm:$0xf]
    %v5263 = vld [vmem:[%s4 + $0x1f8] sm:$0xf]
    %v5264 = vld [vmem:[%s4 + $0x1fc] sm:$0xf]
    %v5265 = vld [vmem:[%s4 + $0x200] sm:$0xf]
    %v5266 = vld [vmem:[%s4 + $0x204] sm:$0xf]
    %v5267 = vld [vmem:[%s4 + $0x208] sm:$0xf]
    %v5268 = vld [vmem:[%s4 + $0x20c] sm:$0xf]
    %v5269 = vld [vmem:[%s4 + $0x210] sm:$0xf]
    %v5270 = vld [vmem:[%s4 + $0x214] sm:$0xf]
    %v5271 = vld [vmem:[%s4 + $0x218] sm:$0xf]
    %v5272 = vld [vmem:[%s4 + $0x21c] sm:$0xf]
    %v5273 = vld [vmem:[%s4 + $0x220] sm:$0xf]
    %v5274 = vld [vmem:[%s4 + $0x224] sm:$0xf]
    %v5275 = vld [vmem:[%s4 + $0x228] sm:$0xf]
    %v5276 = vld [vmem:[%s4 + $0x22c] sm:$0xf]
    %v5277 = vld [vmem:[%s4 + $0x230] sm:$0xf]
    %v5278 = vld [vmem:[%s4 + $0x234] sm:$0xf]
    %v5279 = vld [vmem:[%s4 + $0x238] sm:$0xf]
    %v5280 = vld [vmem:[%s4 + $0x23c] sm:$0xf]
    %v5425 = vunpack.c.l.b16 %v5137
    %v5426 = vunpack.c.l.b16 %v5138
    %v5427 = vunpack.c.l.b16 %v5139
    %v5428 = vunpack.c.l.b16 %v5140
    %v5429 = vunpack.c.l.b16 %v5141
    %v5430 = vunpack.c.l.b16 %v5142
    %v5431 = vunpack.c.l.b16 %v5143
    %v5432 = vunpack.c.l.b16 %v5144
    %v5433 = vunpack.c.l.b16 %v5145
    %v5434 = vunpack.c.l.b16 %v5146
    %v5435 = vunpack.c.l.b16 %v5147
    %v5436 = vunpack.c.l.b16 %v5148
    %v5437 = vunpack.c.l.b16 %v5149
    %v5438 = vunpack.c.l.b16 %v5150
    %v5439 = vunpack.c.l.b16 %v5151
    %v5440 = vunpack.c.l.b16 %v5152
    %v5441 = vunpack.c.l.b16 %v5153
    %v5442 = vunpack.c.l.b16 %v5154
    %v5443 = vunpack.c.l.b16 %v5155
    %v5444 = vunpack.c.l.b16 %v5156
    %v5445 = vunpack.c.l.b16 %v5157
    %v5446 = vunpack.c.l.b16 %v5158
    %v5447 = vunpack.c.l.b16 %v5159
    %v5448 = vunpack.c.l.b16 %v5160
    %v5449 = vunpack.c.l.b16 %v5161
    %v5450 = vunpack.c.l.b16 %v5162
    %v5451 = vunpack.c.l.b16 %v5163
    %v5452 = vunpack.c.l.b16 %v5164
    %v5453 = vunpack.c.l.b16 %v5165
    %v5454 = vunpack.c.l.b16 %v5166
    %v5455 = vunpack.c.l.b16 %v5167
    %v5456 = vunpack.c.l.b16 %v5168
    %v5457 = vunpack.c.l.b16 %v5169
    %v5458 = vunpack.c.l.b16 %v5170
    %v5459 = vunpack.c.l.b16 %v5171
    %v5460 = vunpack.c.l.b16 %v5172
    %v5461 = vunpack.c.l.b16 %v5173
    %v5462 = vunpack.c.l.b16 %v5174
    %v5463 = vunpack.c.l.b16 %v5175
    %v5464 = vunpack.c.l.b16 %v5176
    %v5465 = vunpack.c.l.b16 %v5177
    %v5466 = vunpack.c.l.b16 %v5178
    %v5467 = vunpack.c.l.b16 %v5179
    %v5468 = vunpack.c.l.b16 %v5180
    %v5469 = vunpack.c.l.b16 %v5181
    %v5470 = vunpack.c.l.b16 %v5182
    %v5471 = vunpack.c.l.b16 %v5183
    %v5472 = vunpack.c.l.b16 %v5184
    %v5473 = vunpack.c.l.b16 %v5185
    %v5474 = vunpack.c.l.b16 %v5186
    %v5475 = vunpack.c.l.b16 %v5187
    %v5476 = vunpack.c.l.b16 %v5188
    %v5477 = vunpack.c.l.b16 %v5189
    %v5478 = vunpack.c.l.b16 %v5190
    %v5479 = vunpack.c.l.b16 %v5191
    %v5480 = vunpack.c.l.b16 %v5192
    %v5481 = vunpack.c.l.b16 %v5193
    %v5482 = vunpack.c.l.b16 %v5194
    %v5483 = vunpack.c.l.b16 %v5195
    %v5484 = vunpack.c.l.b16 %v5196
    %v5485 = vunpack.c.l.b16 %v5197
    %v5486 = vunpack.c.l.b16 %v5198
    %v5487 = vunpack.c.l.b16 %v5199
    %v5488 = vunpack.c.l.b16 %v5200
    %v5489 = vunpack.c.l.b16 %v5201
    %v5490 = vunpack.c.l.b16 %v5202
    %v5491 = vunpack.c.l.b16 %v5203
    %v5492 = vunpack.c.l.b16 %v5204
    %v5493 = vunpack.c.l.b16 %v5205
    %v5494 = vunpack.c.l.b16 %v5206
    %v5495 = vunpack.c.l.b16 %v5207
    %v5496 = vunpack.c.l.b16 %v5208
    %v5497 = vunpack.c.l.b16 %v5209
    %v5498 = vunpack.c.l.b16 %v5210
    %v5499 = vunpack.c.l.b16 %v5211
    %v5500 = vunpack.c.l.b16 %v5212
    %v5501 = vunpack.c.l.b16 %v5213
    %v5502 = vunpack.c.l.b16 %v5214
    %v5503 = vunpack.c.l.b16 %v5215
    %v5504 = vunpack.c.l.b16 %v5216
    %v5505 = vunpack.c.l.b16 %v5217
    %v5506 = vunpack.c.l.b16 %v5218
    %v5507 = vunpack.c.l.b16 %v5219
    %v5508 = vunpack.c.l.b16 %v5220
    %v5509 = vunpack.c.l.b16 %v5221
    %v5510 = vunpack.c.l.b16 %v5222
    %v5511 = vunpack.c.l.b16 %v5223
    %v5512 = vunpack.c.l.b16 %v5224
    %v5513 = vunpack.c.l.b16 %v5225
    %v5514 = vunpack.c.l.b16 %v5226
    %v5515 = vunpack.c.l.b16 %v5227
    %v5516 = vunpack.c.l.b16 %v5228
    %v5517 = vunpack.c.l.b16 %v5229
    %v5518 = vunpack.c.l.b16 %v5230
    %v5519 = vunpack.c.l.b16 %v5231
    %v5520 = vunpack.c.l.b16 %v5232
    %v5521 = vunpack.c.l.b16 %v5233
    %v5522 = vunpack.c.l.b16 %v5234
    %v5523 = vunpack.c.l.b16 %v5235
    %v5524 = vunpack.c.l.b16 %v5236
    %v5525 = vunpack.c.l.b16 %v5237
    %v5526 = vunpack.c.l.b16 %v5238
    %v5527 = vunpack.c.l.b16 %v5239
    %v5528 = vunpack.c.l.b16 %v5240
    %v5529 = vunpack.c.l.b16 %v5241
    %v5530 = vunpack.c.l.b16 %v5242
    %v5531 = vunpack.c.l.b16 %v5243
    %v5532 = vunpack.c.l.b16 %v5244
    %v5533 = vunpack.c.l.b16 %v5245
    %v5534 = vunpack.c.l.b16 %v5246
    %v5535 = vunpack.c.l.b16 %v5247
    %v5536 = vunpack.c.l.b16 %v5248
    %v5537 = vunpack.c.l.b16 %v5249
    %v5538 = vunpack.c.l.b16 %v5250
    %v5539 = vunpack.c.l.b16 %v5251
    %v5540 = vunpack.c.l.b16 %v5252
    %v5541 = vunpack.c.l.b16 %v5253
    %v5542 = vunpack.c.l.b16 %v5254
    %v5543 = vunpack.c.l.b16 %v5255
    %v5544 = vunpack.c.l.b16 %v5256
    %v5545 = vunpack.c.l.b16 %v5257
    %v5546 = vunpack.c.l.b16 %v5258
    %v5547 = vunpack.c.l.b16 %v5259
    %v5548 = vunpack.c.l.b16 %v5260
    %v5549 = vunpack.c.l.b16 %v5261
    %v5550 = vunpack.c.l.b16 %v5262
    %v5551 = vunpack.c.l.b16 %v5263
    %v5552 = vunpack.c.l.b16 %v5264
    %v5553 = vunpack.c.l.b16 %v5265
    %v5554 = vunpack.c.l.b16 %v5266
    %v5555 = vunpack.c.l.b16 %v5267
    %v5556 = vunpack.c.l.b16 %v5268
    %v5557 = vunpack.c.l.b16 %v5269
    %v5558 = vunpack.c.l.b16 %v5270
    %v5559 = vunpack.c.l.b16 %v5271
    %v5560 = vunpack.c.l.b16 %v5272
    %v5561 = vunpack.c.l.b16 %v5273
    %v5562 = vunpack.c.l.b16 %v5274
    %v5563 = vunpack.c.l.b16 %v5275
    %v5564 = vunpack.c.l.b16 %v5276
    %v5565 = vunpack.c.l.b16 %v5277
    %v5566 = vunpack.c.l.b16 %v5278
    %v5567 = vunpack.c.l.b16 %v5279
    %v5568 = vunpack.c.l.b16 %v5280
    %v5569 = vpack.c.b16 %v5426, %v5425
    %v5570 = vpack.c.b16 %v5428, %v5427
    %v5571 = vpack.c.b16 %v5430, %v5429
    %v5572 = vpack.c.b16 %v5432, %v5431
    %v5573 = vpack.c.b16 %v5434, %v5433
    %v5574 = vpack.c.b16 %v5436, %v5435
    %v5575 = vpack.c.b16 %v5438, %v5437
    %v5576 = vpack.c.b16 %v5440, %v5439
    %v5577 = vpack.c.b16 %v5442, %v5441
    %v5578 = vpack.c.b16 %v5444, %v5443
    %v5579 = vpack.c.b16 %v5446, %v5445
    %v5580 = vpack.c.b16 %v5448, %v5447
    %v5581 = vpack.c.b16 %v5450, %v5449
    %v5582 = vpack.c.b16 %v5452, %v5451
    %v5583 = vpack.c.b16 %v5454, %v5453
    %v5584 = vpack.c.b16 %v5456, %v5455
    %v5585 = vpack.c.b16 %v5458, %v5457
    %v5586 = vpack.c.b16 %v5460, %v5459
    %v5587 = vpack.c.b16 %v5462, %v5461
    %v5588 = vpack.c.b16 %v5464, %v5463
    %v5589 = vpack.c.b16 %v5466, %v5465
    %v5590 = vpack.c.b16 %v5468, %v5467
    %v5591 = vpack.c.b16 %v5470, %v5469
    %v5592 = vpack.c.b16 %v5472, %v5471
    %v5593 = vpack.c.b16 %v5474, %v5473
    %v5594 = vpack.c.b16 %v5476, %v5475
    %v5595 = vpack.c.b16 %v5478, %v5477
    %v5596 = vpack.c.b16 %v5480, %v5479
    %v5597 = vpack.c.b16 %v5482, %v5481
    %v5598 = vpack.c.b16 %v5484, %v5483
    %v5599 = vpack.c.b16 %v5486, %v5485
    %v5600 = vpack.c.b16 %v5488, %v5487
    %v5601 = vpack.c.b16 %v5490, %v5489
    %v5602 = vpack.c.b16 %v5492, %v5491
    %v5603 = vpack.c.b16 %v5494, %v5493
    %v5604 = vpack.c.b16 %v5496, %v5495
    %v5605 = vpack.c.b16 %v5498, %v5497
    %v5606 = vpack.c.b16 %v5500, %v5499
    %v5607 = vpack.c.b16 %v5502, %v5501
    %v5608 = vpack.c.b16 %v5504, %v5503
    %v5609 = vpack.c.b16 %v5506, %v5505
    %v5610 = vpack.c.b16 %v5508, %v5507
    %v5611 = vpack.c.b16 %v5510, %v5509
    %v5612 = vpack.c.b16 %v5512, %v5511
    %v5613 = vpack.c.b16 %v5514, %v5513
    %v5614 = vpack.c.b16 %v5516, %v5515
    %v5615 = vpack.c.b16 %v5518, %v5517
    %v5616 = vpack.c.b16 %v5520, %v5519
    %v5617 = vpack.c.b16 %v5522, %v5521
    %v5618 = vpack.c.b16 %v5524, %v5523
    %v5619 = vpack.c.b16 %v5526, %v5525
    %v5620 = vpack.c.b16 %v5528, %v5527
    %v5621 = vpack.c.b16 %v5530, %v5529
    %v5622 = vpack.c.b16 %v5532, %v5531
    %v5623 = vpack.c.b16 %v5534, %v5533
    %v5624 = vpack.c.b16 %v5536, %v5535
    %v5625 = vpack.c.b16 %v5538, %v5537
    %v5626 = vpack.c.b16 %v5540, %v5539
    %v5627 = vpack.c.b16 %v5542, %v5541
    %v5628 = vpack.c.b16 %v5544, %v5543
    %v5629 = vpack.c.b16 %v5546, %v5545
    %v5630 = vpack.c.b16 %v5548, %v5547
    %v5631 = vpack.c.b16 %v5550, %v5549
    %v5632 = vpack.c.b16 %v5552, %v5551
    %v5633 = vpack.c.b16 %v5554, %v5553
    %v5634 = vpack.c.b16 %v5556, %v5555
    %v5635 = vpack.c.b16 %v5558, %v5557
    %v5636 = vpack.c.b16 %v5560, %v5559
    %v5637 = vpack.c.b16 %v5562, %v5561
    %v5638 = vpack.c.b16 %v5564, %v5563
    %v5639 = vpack.c.b16 %v5566, %v5565
    %v5640 = vpack.c.b16 %v5568, %v5567
    %5713 = vmatprep.subr.bf16.mxu0 0
    %5714 = vmatpush1.bf16.msra.mxu0 %v5569
    %5715 = vmatprep.subr.bf16.mxu0 0
    %5716 = vmatpush1.bf16.msra.mxu0 %v5570
    %5717 = vmatprep.subr.bf16.mxu0 0
    %5718 = vmatpush1.bf16.msra.mxu0 %v5571
    %5719 = vmatprep.subr.bf16.mxu0 0
    %5720 = vmatpush1.bf16.msra.mxu0 %v5572
    %5721 = vmatprep.subr.bf16.mxu0 0
    %5722 = vmatpush1.bf16.msra.mxu0 %v5573
    %5723 = vmatprep.subr.bf16.mxu0 0
    %5724 = vmatpush1.bf16.msra.mxu0 %v5574
    %5725 = vmatprep.subr.bf16.mxu0 0
    %5726 = vmatpush1.bf16.msra.mxu0 %v5575
    %5727 = vmatprep.subr.bf16.mxu0 0
    %5728 = vmatpush1.bf16.msra.mxu0 %v5576
    %5729 = vmatprep.subr.bf16.mxu0 0
    %5730 = vmatpush1.bf16.msra.mxu0 %v5577
    %5731 = vmatprep.subr.bf16.mxu0 0
    %5732 = vmatpush1.bf16.msra.mxu0 %v5578
    %5733 = vmatprep.subr.bf16.mxu0 0
    %5734 = vmatpush1.bf16.msra.mxu0 %v5579
    %5735 = vmatprep.subr.bf16.mxu0 0
    %5736 = vmatpush1.bf16.msra.mxu0 %v5580
    %5737 = vmatprep.subr.bf16.mxu0 0
    %5738 = vmatpush1.bf16.msra.mxu0 %v5581
    %5739 = vmatprep.subr.bf16.mxu0 0
    %5740 = vmatpush1.bf16.msra.mxu0 %v5582
    %5741 = vmatprep.subr.bf16.mxu0 0
    %5742 = vmatpush1.bf16.msra.mxu0 %v5583
    %5743 = vmatprep.subr.bf16.mxu0 0
    %5744 = vmatpush1.bf16.msra.mxu0 %v5584
    %5745 = vmatprep.mubr.bf16.mxu0 %v5066
    %5746 = vmatmul.mubr.bf16.gmra.mrb[0].mxu0 %v5065
    %v5747 = vpop.f32.mrb[0].mxu0
    %v5748 = vadd.f32 0.0, %v5747
    %v5749 = vpop.f32.mrb[0].mxu0
    %v5750 = vpop.f32.mrb[0].mxu0
    %v5751 = vadd.f32 0.0, %v5750
    %v5752 = vpop.f32.mrb[0].mxu0
    %5753 = vmatprep.mubr.bf16.mxu0 %v5075
    %5754 = vmatmul.mubr.bf16.gmra.mrb[0].mxu0 %v5074
    %v5755 = vpop.f32.mrb[0].mxu0
    %v5756 = vadd.f32 0.0, %v5755
    %v5757 = vpop.f32.mrb[0].mxu0
    %v5758 = vpop.f32.mrb[0].mxu0
    %v5759 = vadd.f32 0.0, %v5758
    %v5760 = vpop.f32.mrb[0].mxu0
    %5761 = vmatprep.mubr.bf16.mxu0 %v5084
    %5762 = vmatmul.mubr.bf16.gmra.mrb[0].mxu0 %v5083
    %v5763 = vpop.f32.mrb[0].mxu0
    %v5764 = vadd.f32 0.0, %v5763
    %v5765 = vpop.f32.mrb[0].mxu0
    %v5766 = vpop.f32.mrb[0].mxu0
    %v5767 = vadd.f32 0.0, %v5766
    %v5768 = vpop.f32.mrb[0].mxu0
    %5769 = vmatprep.mubr.bf16.mxu0 %v5093
    %5770 = vmatmul.mubr.bf16.gmra.mrb[0].mxu0 %v5092
    %v5771 = vpop.f32.mrb[0].mxu0
    %v5772 = vadd.f32 0.0, %v5771
    %v5773 = vpop.f32.mrb[0].mxu0
    %v5774 = vpop.f32.mrb[0].mxu0
    %v5775 = vadd.f32 0.0, %v5774
    %v5776 = vpop.f32.mrb[0].mxu0
    %5777 = vmatprep.mubr.bf16.mxu0 %v5102
    %5778 = vmatmul.mubr.bf16.gmra.mrb[0].mxu0 %v5101
    %v5779 = vpop.f32.mrb[0].mxu0
    %v5780 = vadd.f32 0.0, %v5779
    %v5781 = vpop.f32.mrb[0].mxu0
    %v5782 = vpop.f32.mrb[0].mxu0
    %v5783 = vadd.f32 0.0, %v5782
    %v5784 = vpop.f32.mrb[0].mxu0
    %5785 = vmatprep.mubr.bf16.mxu0 %v5111
    %5786 = vmatmul.mubr.bf16.gmra.mrb[0].mxu0 %v5110
    %v5787 = vpop.f32.mrb[0].mxu0
    %v5788 = vadd.f32 0.0, %v5787
    %v5789 = vpop.f32.mrb[0].mxu0
    %v5790 = vpop.f32.mrb[0].mxu0
    %v5791 = vadd.f32 0.0, %v5790
    %v5792 = vpop.f32.mrb[0].mxu0
    %5793 = vmatprep.mubr.bf16.mxu0 %v5120
    %5794 = vmatmul.mubr.bf16.gmra.mrb[0].mxu0 %v5119
    %v5795 = vpop.f32.mrb[0].mxu0
    %v5796 = vadd.f32 0.0, %v5795
    %v5797 = vpop.f32.mrb[0].mxu0
    %v5798 = vpop.f32.mrb[0].mxu0
    %v5799 = vadd.f32 0.0, %v5798
    %v5800 = vpop.f32.mrb[0].mxu0
    %5801 = vmatprep.mubr.bf16.mxu0 %v5129
    %5802 = vmatmul.mubr.bf16.gmra.mrb[0].mxu0 %v5128
    %v5803 = vpop.f32.mrb[0].mxu0
    %v5804 = vadd.f32 0.0, %v5803
    %v5805 = vpop.f32.mrb[0].mxu0
    %v5806 = vpop.f32.mrb[0].mxu0
    %v5807 = vadd.f32 0.0, %v5806
    %v5808 = vpop.f32.mrb[0].mxu0
    %5809 = vdwg.mxu0
    %5810 = vmatprep.subr.bf16.mxu0 0
    %5811 = vmatpush1.bf16.msra.mxu0 %v5585
    %5812 = vmatprep.subr.bf16.mxu0 0
    %5813 = vmatpush1.bf16.msra.mxu0 %v5586
    %5814 = vmatprep.subr.bf16.mxu0 0
    %5815 = vmatpush1.bf16.msra.mxu0 %v5587
    %5816 = vmatprep.subr.bf16.mxu0 0
    %5817 = vmatpush1.bf16.msra.mxu0 %v5588
    %5818 = vmatprep.subr.bf16.mxu0 0
    %5819 = vmatpush1.bf16.msra.mxu0 %v5589
    %5820 = vmatprep.subr.bf16.mxu0 0
    %5821 = vmatpush1.bf16.msra.mxu0 %v5590
    %5822 = vmatprep.subr.bf16.mxu0 0
    %5823 = vmatpush1.bf16.msra.mxu0 %v5591
    %5824 = vmatprep.subr.bf16.mxu0 0
    %5825 = vmatpush1.bf16.msra.mxu0 %v5592
    %5826 = vmatprep.subr.bf16.mxu0 0
    %5827 = vmatpush1.bf16.msra.mxu0 %v5593
    %5828 = vmatprep.subr.bf16.mxu0 0
    %5829 = vmatpush1.bf16.msra.mxu0 %v5594
    %5830 = vmatprep.subr.bf16.mxu0 0
    %5831 = vmatpush1.bf16.msra.mxu0 %v5595
    %5832 = vmatprep.subr.bf16.mxu0 0
    %5833 = vmatpush1.bf16.msra.mxu0 %v5596
    %5834 = vmatprep.subr.bf16.mxu0 0
    %5835 = vmatpush1.bf16.msra.mxu0 %v5597
    %5836 = vmatprep.subr.bf16.mxu0 0
    %5837 = vmatpush1.bf16.msra.mxu0 %v5598
    %5838 = vmatprep.subr.bf16.mxu0 0
    %5839 = vmatpush1.bf16.msra.mxu0 %v5599
    %5840 = vmatprep.subr.bf16.mxu0 0
    %5841 = vmatpush1.bf16.msra.mxu0 %v5600
    %5842 = vmatprep.mubr.bf16.mxu0 %v5068
    %5843 = vmatmul.mubr.bf16.gmra.mrb[0].mxu0 %v5067
    %v5844 = vpop.f32.mrb[0].mxu0
    %v5845 = vadd.f32 %v5748, %v5844
    %v5846 = vpop.f32.mrb[0].mxu0
    %v5847 = vpop.f32.mrb[0].mxu0
    %v5848 = vadd.f32 %v5751, %v5847
    %v5849 = vpop.f32.mrb[0].mxu0
    %5850 = vmatprep.mubr.bf16.mxu0 %v5077
    %5851 = vmatmul.mubr.bf16.gmra.mrb[0].mxu0 %v5076
    %v5852 = vpop.f32.mrb[0].mxu0
    %v5853 = vadd.f32 %v5756, %v5852
    %v5854 = vpop.f32.mrb[0].mxu0
    %v5855 = vpop.f32.mrb[0].mxu0
    %v5856 = vadd.f32 %v5759, %v5855
    %v5857 = vpop.f32.mrb[0].mxu0
    %5858 = vmatprep.mubr.bf16.mxu0 %v5086
    %5859 = vmatmul.mubr.bf16.gmra.mrb[0].mxu0 %v5085
    %v5860 = vpop.f32.mrb[0].mxu0
    %v5861 = vadd.f32 %v5764, %v5860
    %v5862 = vpop.f32.mrb[0].mxu0
    %v5863 = vpop.f32.mrb[0].mxu0
    %v5864 = vadd.f32 %v5767, %v5863
    %v5865 = vpop.f32.mrb[0].mxu0
    %5866 = vmatprep.mubr.bf16.mxu0 %v5095
    %5867 = vmatmul.mubr.bf16.gmra.mrb[0].mxu0 %v5094
    %v5868 = vpop.f32.mrb[0].mxu0
    %v5869 = vadd.f32 %v5772, %v5868
    %v5870 = vpop.f32.mrb[0].mxu0
    %v5871 = vpop.f32.mrb[0].mxu0
    %v5872 = vadd.f32 %v5775, %v5871
    %v5873 = vpop.f32.mrb[0].mxu0
    %5874 = vmatprep.mubr.bf16.mxu0 %v5104
    %5875 = vmatmul.mubr.bf16.gmra.mrb[0].mxu0 %v5103
    %v5876 = vpop.f32.mrb[0].mxu0
    %v5877 = vadd.f32 %v5780, %v5876
    %v5878 = vpop.f32.mrb[0].mxu0
    %v5879 = vpop.f32.mrb[0].mxu0
    %v5880 = vadd.f32 %v5783, %v5879
    %v5881 = vpop.f32.mrb[0].mxu0
    %5882 = vmatprep.mubr.bf16.mxu0 %v5113
    %5883 = vmatmul.mubr.bf16.gmra.mrb[0].mxu0 %v5112
    %v5884 = vpop.f32.mrb[0].mxu0
    %v5885 = vadd.f32 %v5788, %v5884
    %v5886 = vpop.f32.mrb[0].mxu0
    %v5887 = vpop.f32.mrb[0].mxu0
    %v5888 = vadd.f32 %v5791, %v5887
    %v5889 = vpop.f32.mrb[0].mxu0
    %5890 = vmatprep.mubr.bf16.mxu0 %v5122
    %5891 = vmatmul.mubr.bf16.gmra.mrb[0].mxu0 %v5121
    %v5892 = vpop.f32.mrb[0].mxu0
    %v5893 = vadd.f32 %v5796, %v5892
    %v5894 = vpop.f32.mrb[0].mxu0
    %v5895 = vpop.f32.mrb[0].mxu0
    %v5896 = vadd.f32 %v5799, %v5895
    %v5897 = vpop.f32.mrb[0].mxu0
    %5898 = vmatprep.mubr.bf16.mxu0 %v5131
    %5899 = vmatmul.mubr.bf16.gmra.mrb[0].mxu0 %v5130
    %v5900 = vpop.f32.mrb[0].mxu0
    %v5901 = vadd.f32 %v5804, %v5900
    %v5902 = vpop.f32.mrb[0].mxu0
    %v5903 = vpop.f32.mrb[0].mxu0
    %v5904 = vadd.f32 %v5807, %v5903
    %v5905 = vpop.f32.mrb[0].mxu0
    %5906 = vdwg.mxu0
    %5907 = vmatprep.subr.bf16.mxu0 0
    %5908 = vmatpush1.bf16.msra.mxu0 %v5601
    %5909 = vmatprep.subr.bf16.mxu0 0
    %5910 = vmatpush1.bf16.msra.mxu0 %v5602
    %5911 = vmatprep.subr.bf16.mxu0 0
    %5912 = vmatpush1.bf16.msra.mxu0 %v5603
    %5913 = vmatprep.subr.bf16.mxu0 0
    %5914 = vmatpush1.bf16.msra.mxu0 %v5604
    %5915 = vmatprep.subr.bf16.mxu0 0
    %5916 = vmatpush1.bf16.msra.mxu0 %v5605
    %5917 = vmatprep.subr.bf16.mxu0 0
    %5918 = vmatpush1.bf16.msra.mxu0 %v5606
    %5919 = vmatprep.subr.bf16.mxu0 0
    %5920 = vmatpush1.bf16.msra.mxu0 %v5607
    %5921 = vmatprep.subr.bf16.mxu0 0
    %5922 = vmatpush1.bf16.msra.mxu0 %v5608
    %5923 = vmatprep.subr.bf16.mxu0 0
    %5924 = vmatpush1.bf16.msra.mxu0 %v5609
    %5925 = vmatprep.subr.bf16.mxu0 0
    %5926 = vmatpush1.bf16.msra.mxu0 %v5610
    %5927 = vmatprep.subr.bf16.mxu0 0
    %5928 = vmatpush1.bf16.msra.mxu0 %v5611
    %5929 = vmatprep.subr.bf16.mxu0 0
    %5930 = vmatpush1.bf16.msra.mxu0 %v5612
    %5931 = vmatprep.subr.bf16.mxu0 0
    %5932 = vmatpush1.bf16.msra.mxu0 %v5613
    %5933 = vmatprep.subr.bf16.mxu0 0
    %5934 = vmatpush1.bf16.msra.mxu0 %v5614
    %5935 = vmatprep.subr.bf16.mxu0 0
    %5936 = vmatpush1.bf16.msra.mxu0 %v5615
    %5937 = vmatprep.subr.bf16.mxu0 0
    %5938 = vmatpush1.bf16.msra.mxu0 %v5616
    %5939 = vmatprep.mubr.bf16.mxu0 %v5070
    %5940 = vmatmul.mubr.bf16.gmra.mrb[0].mxu0 %v5069
    %v5941 = vpop.f32.mrb[0].mxu0
    %v5942 = vadd.f32 %v5845, %v5941
    %v5943 = vpop.f32.mrb[0].mxu0
    %v5944 = vpop.f32.mrb[0].mxu0
    %v5945 = vadd.f32 %v5848, %v5944
    %v5946 = vpop.f32.mrb[0].mxu0
    %5947 = vmatprep.mubr.bf16.mxu0 %v5079
    %5948 = vmatmul.mubr.bf16.gmra.mrb[0].mxu0 %v5078
    %v5949 = vpop.f32.mrb[0].mxu0
    %v5950 = vadd.f32 %v5853, %v5949
    %v5951 = vpop.f32.mrb[0].mxu0
    %v5952 = vpop.f32.mrb[0].mxu0
    %v5953 = vadd.f32 %v5856, %v5952
    %v5954 = vpop.f32.mrb[0].mxu0
    %5955 = vmatprep.mubr.bf16.mxu0 %v5088
    %5956 = vmatmul.mubr.bf16.gmra.mrb[0].mxu0 %v5087
    %v5957 = vpop.f32.mrb[0].mxu0
    %v5958 = vadd.f32 %v5861, %v5957
    %v5959 = vpop.f32.mrb[0].mxu0
    %v5960 = vpop.f32.mrb[0].mxu0
    %v5961 = vadd.f32 %v5864, %v5960
    %v5962 = vpop.f32.mrb[0].mxu0
    %5963 = vmatprep.mubr.bf16.mxu0 %v5097
    %5964 = vmatmul.mubr.bf16.gmra.mrb[0].mxu0 %v5096
    %v5965 = vpop.f32.mrb[0].mxu0
    %v5966 = vadd.f32 %v5869, %v5965
    %v5967 = vpop.f32.mrb[0].mxu0
    %v5968 = vpop.f32.mrb[0].mxu0
    %v5969 = vadd.f32 %v5872, %v5968
    %v5970 = vpop.f32.mrb[0].mxu0
    %5971 = vmatprep.mubr.bf16.mxu0 %v5106
    %5972 = vmatmul.mubr.bf16.gmra.mrb[0].mxu0 %v5105
    %v5973 = vpop.f32.mrb[0].mxu0
    %v5974 = vadd.f32 %v5877, %v5973
    %v5975 = vpop.f32.mrb[0].mxu0
    %v5976 = vpop.f32.mrb[0].mxu0
    %v5977 = vadd.f32 %v5880, %v5976
    %v5978 = vpop.f32.mrb[0].mxu0
    %5979 = vmatprep.mubr.bf16.mxu0 %v5115
    %5980 = vmatmul.mubr.bf16.gmra.mrb[0].mxu0 %v5114
    %v5981 = vpop.f32.mrb[0].mxu0
    %v5982 = vadd.f32 %v5885, %v5981
    %v5983 = vpop.f32.mrb[0].mxu0
    %v5984 = vpop.f32.mrb[0].mxu0
    %v5985 = vadd.f32 %v5888, %v5984
    %v5986 = vpop.f32.mrb[0].mxu0
    %5987 = vmatprep.mubr.bf16.mxu0 %v5124
    %5988 = vmatmul.mubr.bf16.gmra.mrb[0].mxu0 %v5123
    %v5989 = vpop.f32.mrb[0].mxu0
    %v5990 = vadd.f32 %v5893, %v5989
    %v5991 = vpop.f32.mrb[0].mxu0
    %v5992 = vpop.f32.mrb[0].mxu0
    %v5993 = vadd.f32 %v5896, %v5992
    %v5994 = vpop.f32.mrb[0].mxu0
    %5995 = vmatprep.mubr.bf16.mxu0 %v5133
    %5996 = vmatmul.mubr.bf16.gmra.mrb[0].mxu0 %v5132
    %v5997 = vpop.f32.mrb[0].mxu0
    %v5998 = vadd.f32 %v5901, %v5997
    %v5999 = vpop.f32.mrb[0].mxu0
    %v6000 = vpop.f32.mrb[0].mxu0
    %v6001 = vadd.f32 %v5904, %v6000
    %v6002 = vpop.f32.mrb[0].mxu0
    %6003 = vdwg.mxu0
    %6004 = vmatprep.subr.bf16.mxu0 0
    %6005 = vmatpush1.bf16.msra.mxu0 %v5617
    %6006 = vmatprep.subr.bf16.mxu0 0
    %6007 = vmatpush1.bf16.msra.mxu0 %v5618
    %6008 = vmatprep.subr.bf16.mxu0 0
    %6009 = vmatpush1.bf16.msra.mxu0 %v5619
    %6010 = vmatprep.subr.bf16.mxu0 0
    %6011 = vmatpush1.bf16.msra.mxu0 %v5620
    %6012 = vmatprep.subr.bf16.mxu0 0
    %6013 = vmatpush1.bf16.msra.mxu0 %v5621
    %6014 = vmatprep.subr.bf16.mxu0 0
    %6015 = vmatpush1.bf16.msra.mxu0 %v5622
    %6016 = vmatprep.subr.bf16.mxu0 0
    %6017 = vmatpush1.bf16.msra.mxu0 %v5623
    %6018 = vmatprep.subr.bf16.mxu0 0
    %6019 = vmatpush1.bf16.msra.mxu0 %v5624
    %6020 = vmatprep.subr.bf16.mxu0 0
    %6021 = vmatpush1.bf16.msra.mxu0 %v5625
    %6022 = vmatprep.subr.bf16.mxu0 0
    %6023 = vmatpush1.bf16.msra.mxu0 %v5626
    %6024 = vmatprep.subr.bf16.mxu0 0
    %6025 = vmatpush1.bf16.msra.mxu0 %v5627
    %6026 = vmatprep.subr.bf16.mxu0 0
    %6027 = vmatpush1.bf16.msra.mxu0 %v5628
    %6028 = vmatprep.subr.bf16.mxu0 0
    %6029 = vmatpush1.bf16.msra.mxu0 %v5629
    %6030 = vmatprep.subr.bf16.mxu0 0
    %6031 = vmatpush1.bf16.msra.mxu0 %v5630
    %6032 = vmatprep.subr.bf16.mxu0 0
    %6033 = vmatpush1.bf16.msra.mxu0 %v5631
    %6034 = vmatprep.subr.bf16.mxu0 0
    %6035 = vmatpush1.bf16.msra.mxu0 %v5632
    %6036 = vmatprep.mubr.bf16.mxu0 %v5072
    %6037 = vmatmul.mubr.bf16.gmra.mrb[0].mxu0 %v5071
    %v6038 = vpop.f32.mrb[0].mxu0
    %v6039 = vadd.f32 %v5942, %v6038
    %v6040 = vpop.f32.mrb[0].mxu0
    %v6041 = vpop.f32.mrb[0].mxu0
    %v6042 = vadd.f32 %v5945, %v6041
    %v6043 = vpop.f32.mrb[0].mxu0
    %6044 = vmatprep.mubr.bf16.mxu0 %v5081
    %6045 = vmatmul.mubr.bf16.gmra.mrb[0].mxu0 %v5080
    %v6046 = vpop.f32.mrb[0].mxu0
    %v6047 = vadd.f32 %v5950, %v6046
    %v6048 = vpop.f32.mrb[0].mxu0
    %v6049 = vpop.f32.mrb[0].mxu0
    %v6050 = vadd.f32 %v5953, %v6049
    %v6051 = vpop.f32.mrb[0].mxu0
    %6052 = vmatprep.mubr.bf16.mxu0 %v5090
    %6053 = vmatmul.mubr.bf16.gmra.mrb[0].mxu0 %v5089
    %v6054 = vpop.f32.mrb[0].mxu0
    %v6055 = vadd.f32 %v5958, %v6054
    %v6056 = vpop.f32.mrb[0].mxu0
    %v6057 = vpop.f32.mrb[0].mxu0
    %v6058 = vadd.f32 %v5961, %v6057
    %v6059 = vpop.f32.mrb[0].mxu0
    %6060 = vmatprep.mubr.bf16.mxu0 %v5099
    %6061 = vmatmul.mubr.bf16.gmra.mrb[0].mxu0 %v5098
    %v6062 = vpop.f32.mrb[0].mxu0
    %v6063 = vadd.f32 %v5966, %v6062
    %v6064 = vpop.f32.mrb[0].mxu0
    %v6065 = vpop.f32.mrb[0].mxu0
    %v6066 = vadd.f32 %v5969, %v6065
    %v6067 = vpop.f32.mrb[0].mxu0
    %6068 = vmatprep.mubr.bf16.mxu0 %v5108
    %6069 = vmatmul.mubr.bf16.gmra.mrb[0].mxu0 %v5107
    %v6070 = vpop.f32.mrb[0].mxu0
    %v6071 = vadd.f32 %v5974, %v6070
    %v6072 = vpop.f32.mrb[0].mxu0
    %v6073 = vpop.f32.mrb[0].mxu0
    %v6074 = vadd.f32 %v5977, %v6073
    %v6075 = vpop.f32.mrb[0].mxu0
    %6076 = vmatprep.mubr.bf16.mxu0 %v5117
    %6077 = vmatmul.mubr.bf16.gmra.mrb[0].mxu0 %v5116
    %v6078 = vpop.f32.mrb[0].mxu0
    %v6079 = vadd.f32 %v5982, %v6078
    %v6080 = vpop.f32.mrb[0].mxu0
    %v6081 = vpop.f32.mrb[0].mxu0
    %v6082 = vadd.f32 %v5985, %v6081
    %v6083 = vpop.f32.mrb[0].mxu0
    %6084 = vmatprep.mubr.bf16.mxu0 %v5126
    %6085 = vmatmul.mubr.bf16.gmra.mrb[0].mxu0 %v5125
    %v6086 = vpop.f32.mrb[0].mxu0
    %v6087 = vadd.f32 %v5990, %v6086
    %v6088 = vpop.f32.mrb[0].mxu0
    %v6089 = vpop.f32.mrb[0].mxu0
    %v6090 = vadd.f32 %v5993, %v6089
    %v6091 = vpop.f32.mrb[0].mxu0
    %6092 = vmatprep.mubr.bf16.mxu0 %v5135
    %6093 = vmatmul.mubr.bf16.gmra.mrb[0].mxu0 %v5134
    %v6094 = vpop.f32.mrb[0].mxu0
    %v6095 = vadd.f32 %v5998, %v6094
    %v6096 = vpop.f32.mrb[0].mxu0
    %v6097 = vpop.f32.mrb[0].mxu0
    %v6098 = vadd.f32 %v6001, %v6097
    %v6099 = vpop.f32.mrb[0].mxu0
    %6100 = vdwg.mxu0
    %6101 = vmatprep.subr.bf16.mxu0 0
    %6102 = vmatpush1.bf16.msra.mxu0 %v5633
    %6103 = vmatprep.subr.bf16.mxu0 0
    %6104 = vmatpush1.bf16.msra.mxu0 %v5634
    %6105 = vmatprep.subr.bf16.mxu0 0
    %6106 = vmatpush1.bf16.msra.mxu0 %v5635
    %6107 = vmatprep.subr.bf16.mxu0 0
    %6108 = vmatpush1.bf16.msra.mxu0 %v5636
    %6109 = vmatprep.subr.bf16.mxu0 0
    %6110 = vmatpush1.bf16.msra.mxu0 %v5637
    %6111 = vmatprep.subr.bf16.mxu0 0
    %6112 = vmatpush1.bf16.msra.mxu0 %v5638
    %6113 = vmatprep.subr.bf16.mxu0 0
    %6114 = vmatpush1.bf16.msra.mxu0 %v5639
    %6115 = vmatprep.subr.bf16.mxu0 0
    %6116 = vmatpush1.bf16.msra.mxu0 %v5640
    %6117 = vmatprep.subr.bf16.mxu0 0
    %6118 = vmatpush1.bf16.msra.mxu0 0
    %6119 = vmatprep.subr.bf16.mxu0 0
    %6120 = vmatpush1.bf16.msra.mxu0 0
    %6121 = vmatprep.subr.bf16.mxu0 0
    %6122 = vmatpush1.bf16.msra.mxu0 0
    %6123 = vmatprep.subr.bf16.mxu0 0
    %6124 = vmatpush1.bf16.msra.mxu0 0
    %6125 = vmatprep.subr.bf16.mxu0 0
    %6126 = vmatpush1.bf16.msra.mxu0 0
    %6127 = vmatprep.subr.bf16.mxu0 0
    %6128 = vmatpush1.bf16.msra.mxu0 0
    %6129 = vmatprep.subr.bf16.mxu0 0
    %6130 = vmatpush1.bf16.msra.mxu0 0
    %6131 = vmatprep.subr.bf16.mxu0 0
    %6132 = vmatpush1.bf16.msra.mxu0 0
    %6133 = vmatprep.mubr.bf16.mxu0 0
    %6134 = vmatmul.mubr.bf16.gmra.mrb[0].mxu0 %v5073
    %v6135 = vpop.f32.mrb[0].mxu0
    %v6136 = vadd.f32 %v6039, %v6135
    %v6137 = vpop.f32.mrb[0].mxu0
    %v6138 = vpop.f32.mrb[0].mxu0
    %v6139 = vadd.f32 %v6042, %v6138
    %v6140 = vpop.f32.mrb[0].mxu0
    %6141 = vmatprep.mubr.bf16.mxu0 0
    %6142 = vmatmul.mubr.bf16.gmra.mrb[0].mxu0 %v5082
    %v6143 = vpop.f32.mrb[0].mxu0
    %v6144 = vadd.f32 %v6047, %v6143
    %v6145 = vpop.f32.mrb[0].mxu0
    %v6146 = vpop.f32.mrb[0].mxu0
    %v6147 = vadd.f32 %v6050, %v6146
    %v6148 = vpop.f32.mrb[0].mxu0
    %6149 = vmatprep.mubr.bf16.mxu0 0
    %6150 = vmatmul.mubr.bf16.gmra.mrb[0].mxu0 %v5091
    %v6151 = vpop.f32.mrb[0].mxu0
    %v6152 = vadd.f32 %v6055, %v6151
    %v6153 = vpop.f32.mrb[0].mxu0
    %v6154 = vpop.f32.mrb[0].mxu0
    %v6155 = vadd.f32 %v6058, %v6154
    %v6156 = vpop.f32.mrb[0].mxu0
    %6157 = vmatprep.mubr.bf16.mxu0 0
    %6158 = vmatmul.mubr.bf16.gmra.mrb[0].mxu0 %v5100
    %v6159 = vpop.f32.mrb[0].mxu0
    %v6160 = vadd.f32 %v6063, %v6159
    %v6161 = vpop.f32.mrb[0].mxu0
    %v6162 = vpop.f32.mrb[0].mxu0
    %v6163 = vadd.f32 %v6066, %v6162
    %v6164 = vpop.f32.mrb[0].mxu0
    %6165 = vmatprep.mubr.bf16.mxu0 0
    %6166 = vmatmul.mubr.bf16.gmra.mrb[0].mxu0 %v5109
    %v6167 = vpop.f32.mrb[0].mxu0
    %v6168 = vadd.f32 %v6071, %v6167
    %v6169 = vpop.f32.mrb[0].mxu0
    %v6170 = vpop.f32.mrb[0].mxu0
    %v6171 = vadd.f32 %v6074, %v6170
    %v6172 = vpop.f32.mrb[0].mxu0
    %6173 = vmatprep.mubr.bf16.mxu0 0
    %6174 = vmatmul.mubr.bf16.gmra.mrb[0].mxu0 %v5118
    %v6175 = vpop.f32.mrb[0].mxu0
    %v6176 = vadd.f32 %v6079, %v6175
    %v6177 = vpop.f32.mrb[0].mxu0
    %v6178 = vpop.f32.mrb[0].mxu0
    %v6179 = vadd.f32 %v6082, %v6178
    %v6180 = vpop.f32.mrb[0].mxu0
    %6181 = vmatprep.mubr.bf16.mxu0 0
    %6182 = vmatmul.mubr.bf16.gmra.mrb[0].mxu0 %v5127
    %v6183 = vpop.f32.mrb[0].mxu0
    %v6184 = vadd.f32 %v6087, %v6183
    %v6185 = vpop.f32.mrb[0].mxu0
    %v6186 = vpop.f32.mrb[0].mxu0
    %v6187 = vadd.f32 %v6090, %v6186
    %v6188 = vpop.f32.mrb[0].mxu0
    %6189 = vmatprep.mubr.bf16.mxu0 0
    %6190 = vmatmul.mubr.bf16.gmra.mrb[0].mxu0 %v5136
    %v6191 = vpop.f32.mrb[0].mxu0
    %v6192 = vadd.f32 %v6095, %v6191
    %v6193 = vpop.f32.mrb[0].mxu0
    %v6194 = vpop.f32.mrb[0].mxu0
    %v6195 = vadd.f32 %v6098, %v6194
    %v6196 = vpop.f32.mrb[0].mxu0
    %6197 = vdwg.mxu0
    %v6198 = vld [vmem:[%s5] sm:$0x1]
    %v6200 = vlaneseq
    %v6201 = vshrl.u32 %v6200, 7
    %v6202 = vsub.s32 0, %v6201
    %v6203 = vrot.slane %v6198, %v6202
    %v6205 = vmul.f32 %v6136, %v6203
    %v6206 = vmul.f32 %v6139, %v6203
    %v6207 = vmul.f32 %v6144, %v6203
    %v6208 = vmul.f32 %v6147, %v6203
    %v6209 = vmul.f32 %v6152, %v6203
    %v6210 = vmul.f32 %v6155, %v6203
    %v6211 = vmul.f32 %v6160, %v6203
    %v6212 = vmul.f32 %v6163, %v6203
    %v6213 = vmul.f32 %v6168, %v6203
    %v6214 = vmul.f32 %v6171, %v6203
    %v6215 = vmul.f32 %v6176, %v6203
    %v6216 = vmul.f32 %v6179, %v6203
    %v6217 = vmul.f32 %v6184, %v6203
    %v6218 = vmul.f32 %v6187, %v6203
    %v6219 = vmul.f32 %v6192, %v6203
    %v6220 = vmul.f32 %v6195, %v6203
    %v6221 = vld [vmem:[%s6] sm:$0x1]
    %v6223 = vlaneseq
    %v6224 = vshrl.u32 %v6223, 7
    %v6225 = vsub.s32 0, %v6224
    %v6226 = vrot.slane %v6221, %v6225
    %v6228 = vadd.f32 %v6205, %v6226
    %v6229 = vadd.f32 %v6206, %v6226
    %v6230 = vadd.f32 %v6207, %v6226
    %v6231 = vadd.f32 %v6208, %v6226
    %v6232 = vadd.f32 %v6209, %v6226
    %v6233 = vadd.f32 %v6210, %v6226
    %v6234 = vadd.f32 %v6211, %v6226
    %v6235 = vadd.f32 %v6212, %v6226
    %v6236 = vadd.f32 %v6213, %v6226
    %v6237 = vadd.f32 %v6214, %v6226
    %v6238 = vadd.f32 %v6215, %v6226
    %v6239 = vadd.f32 %v6216, %v6226
    %v6240 = vadd.f32 %v6217, %v6226
    %v6241 = vadd.f32 %v6218, %v6226
    %v6242 = vadd.f32 %v6219, %v6226
    %v6243 = vadd.f32 %v6220, %v6226
    %v6244 = vmax.f32 %v6228, 0.0
    %v6245 = vmax.f32 %v6229, 0.0
    %v6246 = vmax.f32 %v6230, 0.0
    %v6247 = vmax.f32 %v6231, 0.0
    %v6248 = vmax.f32 %v6232, 0.0
    %v6249 = vmax.f32 %v6233, 0.0
    %v6250 = vmax.f32 %v6234, 0.0
    %v6251 = vmax.f32 %v6235, 0.0
    %v6252 = vmax.f32 %v6236, 0.0
    %v6253 = vmax.f32 %v6237, 0.0
    %v6254 = vmax.f32 %v6238, 0.0
    %v6255 = vmax.f32 %v6239, 0.0
    %v6256 = vmax.f32 %v6240, 0.0
    %v6257 = vmax.f32 %v6241, 0.0
    %v6258 = vmax.f32 %v6242, 0.0
    %v6259 = vmax.f32 %v6243, 0.0
    %6260 = vst [vmem:[#allocation6] sm:$0xff] %v6244
    %6261 = vst [vmem:[#allocation6 + $0x8] sm:$0xff] %v6245
    %6262 = vst [vmem:[#allocation6 + $0x10] sm:$0xff] %v6246
    %6263 = vst [vmem:[#allocation6 + $0x18] sm:$0xff] %v6247
    %6264 = vst [vmem:[#allocation6 + $0x20] sm:$0xff] %v6248
    %6265 = vst [vmem:[#allocation6 + $0x28] sm:$0xff] %v6249
    %6266 = vst [vmem:[#allocation6 + $0x30] sm:$0xff] %v6250
    %6267 = vst [vmem:[#allocation6 + $0x38] sm:$0xff] %v6251
    %6268 = vst [vmem:[#allocation6 + $0x40] sm:$0xff] %v6252
    %6269 = vst [vmem:[#allocation6 + $0x48] sm:$0xff] %v6253
    %6270 = vst [vmem:[#allocation6 + $0x50] sm:$0xff] %v6254
    %6271 = vst [vmem:[#allocation6 + $0x58] sm:$0xff] %v6255
    %6272 = vst [vmem:[#allocation6 + $0x60] sm:$0xff] %v6256
    %6273 = vst [vmem:[#allocation6 + $0x68] sm:$0xff] %v6257
    %6274 = vst [vmem:[#allocation6 + $0x70] sm:$0xff] %v6258
    %6275 = vst [vmem:[#allocation6 + $0x78] sm:$0xff] %v6259
    // Predicated region
    $region30: #{down_pallas.1} parent=1 // pred_check
      _
    $region31: #{down_pallas.1} parent=1 // pred_check_branch
      %6277 = sbr.rel (0) target = $region33
    $region32: #{down_pallas.1} parent=1 // pred_region
      %s6279 = ssub.s32 2048, 2048
      %6280 = vsyncadd [#allocation7], %s6279
      %s6281 = sshll.u32 [#allocation6], 4
      %s6282 = int_to_ptr.vmem [resolvable:$true] %s6281
      %6287 = dma.vmem_to_hbm [thread:$0]  %s6282, 2048, %s7, [#allocation7], 128, 128, 8
    $region33: #{down_pallas.1} parent=1 // pred_fallthru
      _
    // Predicated region
    $region34: #{down_pallas.1} parent=1 // pred_check
      _
    $region35: #{down_pallas.1} parent=1 // pred_check_branch
      %6289 = sbr.rel (0) target = $region37
    $region36: #{down_pallas.1} parent=1 // pred_region
      %6290 = dma.done [#allocation7], 2048
    $region37: #{down_pallas.1} parent=1 // pred_fallthru
      _
    %6291 = vsyncpa [#allocation7], 1

</llo_original>
